<compile_context>
chip_gen: v7x
topology: tpu7x:2x2x1
jax: 0.10.0
libtpu: 0.0.40
codegen_flags: <defaults>
</compile_context>

<pallas_src>
import functools

import jax
import jax.numpy as jnp
from jax.experimental import pallas as pl
from jax.experimental.pallas import tpu as pltpu

EPS = 1e-5          # nn.BatchNorm2d default eps
LANE = 128


def _round_up(x, m):
    return (x + m - 1) // m * m


def _vmem_limit_bytes():
    # v5e/v6e: 128 MiB VMEM per TensorCore, v7x: 64 MiB.  Budget ~half of
    # physical, capped at 48 MiB; fall back to the conservative v7x figure if
    # the query is unavailable.
    try:
        cap = pltpu.get_tpu_info().vmem_capacity_bytes
    except Exception:
        cap = 64 * 1024 * 1024
    return int(min(cap // 2, 48 * 1024 * 1024))


VMEM_LIMIT = _vmem_limit_bytes()
FUSE_BUDGET = (3 * VMEM_LIMIT) // 4   # bytes a fully-fused stage may occupy


# ----------------------------- Pallas kernels ------------------------------ #

def _fused_conv_bn_relu_kernel(w_ref, p_ref, gamma_ref, beta_ref, a_ref, *, inv_m):
    # (C_out, K) @ (K, M): lane dim is the big M (lane-dense stores, full MXU
    # columns).  BN stats + scale/shift + ReLU are applied in the same
    # invocation so the f32 conv output never round-trips through HBM.
    y = jnp.dot(w_ref[...], p_ref[...], preferred_element_type=jnp.float32)
    mean = jnp.sum(y, axis=1, keepdims=True) * inv_m               # (C_out, 1)
    var = jnp.sum(y * y, axis=1, keepdims=True) * inv_m - mean * mean
    var = jnp.maximum(var, 0.0)                                    # guard cancellation
    scale = gamma_ref[...] * jax.lax.rsqrt(var + EPS)
    shift = beta_ref[...] - mean * scale
    a_ref[...] = jnp.maximum(y * scale + shift, 0.0).astype(a_ref.dtype)


def _conv_matmul_stats_kernel(w_ref, p_ref, y_ref, sum_ref, sq_ref):
    # Fallback pass 1: matmul tile (bf16 store) + BN sums accumulated in the
    # resident (C_out, 1) outputs across the "arbitrary" M axis.
    @pl.when(pl.program_id(0) == 0)
    def _():
        sum_ref[...] = jnp.zeros_like(sum_ref)
        sq_ref[...] = jnp.zeros_like(sq_ref)

    y = jnp.dot(w_ref[...], p_ref[...], preferred_element_type=jnp.float32)
    y_ref[...] = y.astype(y_ref.dtype)                             # bf16 store
    sum_ref[...] += jnp.sum(y, axis=1, keepdims=True)
    sq_ref[...] += jnp.sum(y * y, axis=1, keepdims=True)


def _bn_relu_kernel(y_ref, scale_ref, shift_ref, a_ref):
    a = y_ref[...].astype(jnp.float32) * scale_ref[...] + shift_ref[...]
    a_ref[...] = jnp.maximum(a, 0.0).astype(a_ref.dtype)


def _mlp_kernel(x_ref, w1_ref, b1_ref, w2_ref, b2_ref, o_ref):
    h = jnp.dot(x_ref[...], w1_ref[...], preferred_element_type=jnp.float32)
    h = jnp.maximum(h + b1_ref[...], 0.0).astype(jnp.bfloat16)
    o = jnp.dot(h, w2_ref[...], preferred_element_type=jnp.float32)
    o_ref[...] = o + b2_ref[...]


# ---------------------------- kernel wrappers ------------------------------ #

def _fused_conv_stage_call(w_mat, p_pad, gamma_c1, beta_c1, m_true):
    c_out, k_pad = w_mat.shape
    _, m_pad = p_pad.shape
    flops = 2 * c_out * k_pad * m_pad + 6 * c_out * m_pad
    bytes_accessed = ((w_mat.size + p_pad.size + c_out * m_pad) * 2
                      + (gamma_c1.size + beta_c1.size) * 4)
    kernel = functools.partial(_fused_conv_bn_relu_kernel, inv_m=1.0 / float(m_true))
    return pl.pallas_call(
        kernel,
        out_shape=jax.ShapeDtypeStruct((c_out, m_pad), jnp.bfloat16),
        grid=(1,),
        in_specs=[
            pl.BlockSpec((c_out, k_pad), lambda i: (0, 0)),
            pl.BlockSpec((k_pad, m_pad), lambda i: (0, 0)),
            pl.BlockSpec((c_out, 1), lambda i: (0, 0)),
            pl.BlockSpec((c_out, 1), lambda i: (0, 0)),
        ],
        out_specs=pl.BlockSpec((c_out, m_pad), lambda i: (0, 0)),
        compiler_params=pltpu.CompilerParams(
            dimension_semantics=("arbitrary",),
            vmem_limit_bytes=VMEM_LIMIT),
        cost_estimate=pl.CostEstimate(
            flops=flops, transcendentals=c_out, bytes_accessed=bytes_accessed),
    )(w_mat, p_pad, gamma_c1, beta_c1)


def _conv_matmul_stats(w_mat, p_pad, tm, nt):
    c_out, k_pad = w_mat.shape
    _, m_pad = p_pad.shape
    flops = 2 * c_out * k_pad * m_pad
    bytes_accessed = (w_mat.size + p_pad.size + c_out * m_pad) * 2 + 2 * c_out * 4
    return pl.pallas_call(
        _conv_matmul_stats_kernel,
        out_shape=(
            jax.ShapeDtypeStruct((c_out, m_pad), jnp.bfloat16),   # bf16 y
            jax.ShapeDtypeStruct((c_out, 1), jnp.float32),
            jax.ShapeDtypeStruct((c_out, 1), jnp.float32),
        ),
        grid=(nt,),
        in_specs=[
            pl.BlockSpec((c_out, k_pad), lambda i: (0, 0)),       # full weights
            pl.BlockSpec((k_pad, tm), lambda i: (0, i),
                         pipeline_mode=pl.Buffered(3)),           # hide patch DMA
        ],
        out_specs=(
            pl.BlockSpec((c_out, tm), lambda i: (0, i)),
            pl.BlockSpec((c_out, 1), lambda i: (0, 0)),           # resident accumulators
            pl.BlockSpec((c_out, 1), lambda i: (0, 0)),
        ),
        compiler_params=pltpu.CompilerParams(
            dimension_semantics=("arbitrary",),                   # stats accumulate over M
            vmem_limit_bytes=VMEM_LIMIT),
        cost_estimate=pl.CostEstimate(
            flops=flops, transcendentals=0, bytes_accessed=bytes_accessed),
    )(w_mat, p_pad)


def _bn_relu_apply(y, scale, shift, tm, nt):
    c_out, m_pad = y.shape
    return pl.pallas_call(
        _bn_relu_kernel,
        out_shape=jax.ShapeDtypeStruct((c_out, m_pad), jnp.bfloat16),
        grid=(nt,),
        in_specs=[
            pl.BlockSpec((c_out, tm), lambda i: (0, i)),
            pl.BlockSpec((c_out, 1), lambda i: (0, 0)),
            pl.BlockSpec((c_out, 1), lambda i: (0, 0)),
        ],
        out_specs=pl.BlockSpec((c_out, tm), lambda i: (0, i)),
        compiler_params=pltpu.CompilerParams(
            dimension_semantics=("parallel",),                    # megacore on v7x, nt>=2
            vmem_limit_bytes=VMEM_LIMIT),
    )(y, scale, shift)


def _mlp_head(flat, w1, b1, w2, b2, tb_cap=512):
    n, k1 = flat.shape
    hdim = w1.shape[1]
    act = w2.shape[1]
    k1_pad = _round_up(k1, LANE)
    a_pad = _round_up(act, LANE)
    # Balanced batch tiling: bounded padding even when n is just above tb_cap.
    n8 = _round_up(n, 8)
    nt = pl.cdiv(n8, tb_cap)
    tb = _round_up(pl.cdiv(n8, nt), 8)
    n_pad = nt * tb
    x = jnp.pad(flat.astype(jnp.bfloat16), ((0, n_pad - n), (0, k1_pad - k1)))
    w1p = jnp.pad(w1, ((0, k1_pad - k1), (0, 0))).astype(jnp.bfloat16)
    w2p = jnp.pad(w2, ((0, 0), (0, a_pad - act))).astype(jnp.bfloat16)
    b1p = b1.reshape(1, hdim).astype(jnp.float32)
    b2p = jnp.pad(b2, (0, a_pad - act)).reshape(1, a_pad).astype(jnp.float32)
    flops = 2 * n_pad * (k1_pad * hdim + hdim * a_pad)
    bytes_accessed = ((x.size + w1p.size + w2p.size) * 2
                      + (b1p.size + b2p.size + n_pad * a_pad) * 4)
    out = pl.pallas_call(
        _mlp_kernel,
        out_shape=jax.ShapeDtypeStruct((n_pad, a_pad), jnp.float32),
        grid=(nt,),
        in_specs=[
            pl.BlockSpec((tb, k1_pad), lambda i: (i, 0)),         # batch-row tile
            pl.BlockSpec((k1_pad, hdim), lambda i: (0, 0)),       # full W1
            pl.BlockSpec((1, hdim), lambda i: (0, 0)),
            pl.BlockSpec((hdim, a_pad), lambda i: (0, 0)),        # full W2
            pl.BlockSpec((1, a_pad), lambda i: (0, 0)),
        ],
        out_specs=pl.BlockSpec((tb, a_pad), lambda i: (i, 0)),
        compiler_params=pltpu.CompilerParams(
            dimension_semantics=("parallel",),
            vmem_limit_bytes=VMEM_LIMIT),
        cost_estimate=pl.CostEstimate(
            flops=flops, transcendentals=0, bytes_accessed=bytes_accessed),
    )(x, w1p, b1p, w2p, b2p)
    return out[:n, :act]


# ------------------------------- JAX glue ---------------------------------- #

def _extract_patches_cm(a, kh, kw, stride):
    """a: (C, N, H, W) -> patches^T (C*KH*KW, N*OH*OW); feature order (C, KH, KW)
    matches PyTorch's weight.view(C_out, -1) column order."""
    c, n, h, w = a.shape
    oh = (h - kh) // stride + 1
    ow = (w - kw) // stride + 1
    cols = []
    for i in range(kh):
        for j in range(kw):
            cols.append(a[:, :, i:i + stride * oh:stride, j:j + stride * ow:stride])
    p = jnp.stack(cols, axis=1)                      # (C, KH*KW, N, OH, OW)
    return p.reshape(c * kh * kw, n * oh * ow), oh, ow


def _balanced_tiles(m, unit, cap):
    m_u = _round_up(m, unit)
    nt = pl.cdiv(m_u, cap)
    t = _round_up(pl.cdiv(m_u, nt), unit)
    return t, nt * t, nt


def _conv_bn_relu_stage(a_cm, w_oihw, gamma, beta, stride):
    # TODO(synk): im2col stays in plain JAX (HBM read amplification of the
    # previous activation); an in-kernel patch gather needs lane-dim strided
    # slicing Mosaic does not support cleanly.
    c_out, c_in, kh, kw = w_oihw.shape
    n = a_cm.shape[1]
    p_t, oh, ow = _extract_patches_cm(a_cm, kh, kw, stride)
    k, m = p_t.shape
    k_pad = _round_up(k, LANE)
    m128 = _round_up(m, LANE)
    w_mat = jnp.pad(w_oihw.reshape(c_out, k), ((0, 0), (0, k_pad - k)))
    w_mat = w_mat.astype(jnp.bfloat16)
    g = gamma.reshape(c_out, 1).astype(jnp.float32)
    b = beta.reshape(c_out, 1).astype(jnp.float32)

    # Fully-fused single-call path when the whole stage fits the VMEM budget
    # (always true at small batch): y never leaves VMEM, one launch per stage.
    fused_bytes = (c_out * k_pad * 2 + k_pad * m128 * 2      # bf16 inputs
                   + c_out * m128 * 2                        # bf16 output
                   + c_out * m128 * 4)                       # in-kernel f32 y
    if fused_bytes <= FUSE_BUDGET:
        p_pad = jnp.pad(p_t.astype(jnp.bfloat16), ((0, k_pad - k), (0, m128 - m)))
        a = _fused_conv_stage_call(w_mat, p_pad, g, b, m)
        return a[:, :m].reshape(c_out, n, oh, ow)            # channel-major, bf16

    # Fallback: two tiled passes with bf16 y intermediate.  Tiles balanced to
    # bound padding and respect the per-generation VMEM budget; the apply pass
    # is "parallel" so v7x's second TensorCore gets work when nt >= 2.
    per_col = 3 * k_pad * 2 + 2 * c_out * 2                  # Buffered(3) patch + dbl y
    tm_cap = max(LANE, min(4096,
                           ((FUSE_BUDGET - c_out * k_pad * 2) // per_col)
                           // LANE * LANE))
    tm, m_pad, nt = _balanced_tiles(m, LANE, tm_cap)
    p_pad = jnp.pad(p_t.astype(jnp.bfloat16), ((0, k_pad - k), (0, m_pad - m)))
    y, s1, s2 = _conv_matmul_stats(w_mat, p_pad, tm, nt)
    count = jnp.float32(m)
    mean = s1[:, 0] / count
    # TODO(synk): E[y^2]-E[y]^2 in f32 can lose precision for large means; a
    # centered two-pass variance would track BatchNorm more tightly.
    var = jnp.maximum(s2[:, 0] / count - mean * mean, 0.0)
    scale = gamma * jax.lax.rsqrt(var + EPS)
    shift = beta - mean * scale
    a = _bn_relu_apply(y, scale.reshape(c_out, 1).astype(jnp.float32),
                       shift.reshape(c_out, 1).astype(jnp.float32), tm, nt)
    return a[:, :m].reshape(c_out, n, oh, ow)                # channel-major, bf16


def convnet_forward(params, x_nchw):
    # Channel-major activations (C, N, H, W): avoids NCHW<->NHWC transposes
    # between stages; conv bias is omitted (cancelled by train-mode BatchNorm).
    a = x_nchw.transpose(1, 0, 2, 3)
    a = _conv_bn_relu_stage(a, params["w1"], params["g1"], params["be1"], 4)
    a = _conv_bn_relu_stage(a, params["w2"], params["g2"], params["be2"], 2)
    a = _conv_bn_relu_stage(a, params["w3"], params["g3"], params["be3"], 1)
    n = a.shape[1]
    # PyTorch x.view(N, -1) flatten order == (C, H, W) per sample.
    flat = a.transpose(1, 0, 2, 3).reshape(n, -1)
    return _mlp_head(flat, params["fcw1"], params["fcb1"],
                     params["fcw2"], params["fcb2"])


# --------------------------- parameter creation ----------------------------- #

def init_params(key, c, h, w, action_dims):
    def out_sz(s, k, st):
        return (s - (k - 1) - 1) // st + 1

    convw = out_sz(out_sz(out_sz(w, 8, 4), 4, 2), 3, 1)
    convh = out_sz(out_sz(out_sz(h, 8, 4), 4, 2), 3, 1)
    lin_in = convw * convh * 64

    ks = jax.random.split(key, 12)
    p = {
        "w1": jax.random.normal(ks[0], (32, c, 8, 8), jnp.float32) * 0.05,
        # conv biases kept only for state-dict parity; they cancel under
        # train-mode BatchNorm and are not used in the forward pass.
        "b1": jax.random.normal(ks[1], (32,), jnp.float32) * 0.01,
        "g1": 1.0 + 0.1 * jax.random.normal(ks[2], (32,), jnp.float32),
        "be1": 0.1 * jax.random.normal(ks[3], (32,), jnp.float32),
        "w2": jax.random.normal(ks[4], (64, 32, 4, 4), jnp.float32) * 0.05,
        "b2": jax.random.normal(ks[5], (64,), jnp.float32) * 0.01,
        "g2": 1.0 + 0.1 * jax.random.normal(ks[6], (64,), jnp.float32),
        "be2": 0.1 * jax.random.normal(ks[7], (64,), jnp.float32),
        "w3": jax.random.normal(ks[8], (64, 64, 3, 3), jnp.float32) * 0.05,
        "b3": jax.random.normal(ks[9], (64,), jnp.float32) * 0.01,
        "g3": 1.0 + 0.1 * jax.random.normal(ks[10], (64,), jnp.float32),
        "be3": 0.1 * jax.random.normal(ks[11], (64,), jnp.float32),
    }
    kf = jax.random.split(jax.random.fold_in(key, 123), 4)
    # stored as (in, out) == PyTorch weight.T
    p["fcw1"] = jax.random.normal(kf[0], (lin_in, 512), jnp.float32) * 0.05
    p["fcb1"] = jax.random.normal(kf[1], (512,), jnp.float32) * 0.01
    p["fcw2"] = jax.random.normal(kf[2], (512, action_dims), jnp.float32) * 0.05
    p["fcb2"] = jax.random.normal(kf[3], (action_dims,), jnp.float32) * 0.01
    return p


if __name__ == "__main__":
    # smallest spatial size that keeps the conv stack comfortably valid; 52 -> 3x3x64
    B, C, H, W, A = 2, 4, 52, 52, 6
    key = jax.random.PRNGKey(0)
    kx, kp = jax.random.split(key)
    x = jax.random.normal(kx, (B, C, H, W), jnp.float32)
    params = init_params(kp, C, H, W, A)

    out = jax.jit(convnet_forward)(params, x)
    jax.block_until_ready(out)
    assert out.shape == (B, A), out.shape
    # TODO(synk): BatchNorm running-stat updates (training side effect) are not
    # reproduced; forward values match a freshly-initialized module in .train()
    # (modulo bf16 rounding of the MXU inputs).
    print("KERNEL_OK")
</pallas_src>

<mosaic_0001>
module attributes {stable_mosaic.version = 11 : i64} {
  func.func @_fused_conv_bn_relu_kernel(%arg0: i32, %arg1: memref<32x256xbf16, #tpu.memory_space<vmem>>, %arg2: memref<256x384xbf16, #tpu.memory_space<vmem>>, %arg3: memref<32x1xf32, #tpu.memory_space<vmem>>, %arg4: memref<32x1xf32, #tpu.memory_space<vmem>>, %arg5: memref<32x384xbf16, #tpu.memory_space<vmem>>) attributes {dimension_semantics = [#tpu.dimension_semantics<arbitrary>], iteration_bounds = array<i64: 1>, scalar_prefetch = 0 : i64, scratch_operands = 0 : i64, tpu.core_type = #tpu.core_type<tc>, window_params = [{pipeline_mode = #tpu.pipeline_mode<synchronous>, transform_indices = @transform_0, window_bounds = array<i64: 32, 256>}, {pipeline_mode = #tpu.pipeline_mode<synchronous>, transform_indices = @transform_1, window_bounds = array<i64: 256, 384>}, {pipeline_mode = #tpu.pipeline_mode<synchronous>, transform_indices = @transform_2, window_bounds = array<i64: 32, 1>}, {pipeline_mode = #tpu.pipeline_mode<synchronous>, transform_indices = @transform_3, window_bounds = array<i64: 32, 1>}, {pipeline_mode = #tpu.pipeline_mode<synchronous>, transform_indices = @transform_4, window_bounds = array<i64: 32, 384>}]} {
    %c0 = arith.constant 0 : index
    %c0_0 = arith.constant 0 : index
    %0 = vector.load %arg1[%c0, %c0_0] : memref<32x256xbf16, #tpu.memory_space<vmem>>, vector<32x256xbf16>
    %c0_1 = arith.constant 0 : index
    %c0_2 = arith.constant 0 : index
    %1 = vector.load %arg2[%c0_1, %c0_2] : memref<256x384xbf16, #tpu.memory_space<vmem>>, vector<256x384xbf16>
    %cst = arith.constant dense<0.000000e+00> : vector<32x384xf32>
    %2 = tpu.matmul %0, %1, %cst {dimension_numbers = #tpu.dot_dimension_numbers<[1], [0], [0], [1], [0, 0, 1, 1], [], []>} : vector<32x256xbf16>, vector<256x384xbf16>, vector<32x384xf32> -> vector<32x384xf32>
    %cst_3 = arith.constant dense<0.000000e+00> : vector<32xf32>
    %3 = vector.multi_reduction <add>, %2, %cst_3 [1] : vector<32x384xf32> to vector<32xf32>
    %4 = vector.shape_cast %3 : vector<32xf32> to vector<32x1xf32>
    %cst_4 = arith.constant 0.00347222225 : f32
    %5 = vector.broadcast %cst_4 : f32 to vector<32x1xf32>
    %6 = arith.mulf %4, %5 : vector<32x1xf32>
    %7 = arith.mulf %2, %2 : vector<32x384xf32>
    %cst_5 = arith.constant dense<0.000000e+00> : vector<32xf32>
    %8 = vector.multi_reduction <add>, %7, %cst_5 [1] : vector<32x384xf32> to vector<32xf32>
    %9 = vector.shape_cast %8 : vector<32xf32> to vector<32x1xf32>
    %cst_6 = arith.constant 0.00347222225 : f32
    %10 = vector.broadcast %cst_6 : f32 to vector<32x1xf32>
    %11 = arith.mulf %9, %10 : vector<32x1xf32>
    %12 = arith.mulf %6, %6 : vector<32x1xf32>
    %13 = arith.subf %11, %12 : vector<32x1xf32>
    %cst_7 = arith.constant 0.000000e+00 : f32
    %14 = vector.broadcast %cst_7 : f32 to vector<32x1xf32>
    %15 = arith.maximumf %13, %14 : vector<32x1xf32>
    %c0_8 = arith.constant 0 : index
    %c0_9 = arith.constant 0 : index
    %16 = vector.load %arg3[%c0_8, %c0_9] : memref<32x1xf32, #tpu.memory_space<vmem>>, vector<32x1xf32>
    %cst_10 = arith.constant 9.99999974E-6 : f32
    %17 = vector.broadcast %cst_10 : f32 to vector<32x1xf32>
    %18 = arith.addf %15, %17 : vector<32x1xf32>
    %19 = math.rsqrt %18 : vector<32x1xf32>
    %20 = arith.mulf %16, %19 : vector<32x1xf32>
    %c0_11 = arith.constant 0 : index
    %c0_12 = arith.constant 0 : index
    %21 = vector.load %arg4[%c0_11, %c0_12] : memref<32x1xf32, #tpu.memory_space<vmem>>, vector<32x1xf32>
    %22 = arith.mulf %6, %20 : vector<32x1xf32>
    %23 = arith.subf %21, %22 : vector<32x1xf32>
    %24 = vector.broadcast %20 : vector<32x1xf32> to vector<32x384xf32>
    %25 = arith.mulf %2, %24 : vector<32x384xf32>
    %26 = vector.broadcast %23 : vector<32x1xf32> to vector<32x384xf32>
    %27 = arith.addf %25, %26 : vector<32x384xf32>
    %cst_13 = arith.constant 0.000000e+00 : f32
    %28 = vector.broadcast %cst_13 : f32 to vector<32x384xf32>
    %29 = arith.maximumf %27, %28 : vector<32x384xf32>
    %30 = arith.truncf %29 : vector<32x384xf32> to vector<32x384xbf16>
    %c0_14 = arith.constant 0 : index
    %c0_15 = arith.constant 0 : index
    %31 = vector.load %arg5[%c0_14, %c0_15] : memref<32x384xbf16, #tpu.memory_space<vmem>>, vector<32x384xbf16>
    tpu.vector_store %arg5[%c0_14, %c0_15], %30 {strides = array<i32>} : memref<32x384xbf16, #tpu.memory_space<vmem>>, vector<32x384xbf16>,
    return
  }
  func.func @transform_0(%arg0: i32) -> (i32, i32) {
    %c0_i32 = arith.constant 0 : i32
    %c0_i32_0 = arith.constant 0 : i32
    %c0_i32_1 = arith.constant 0 : i32
    return %c0_i32, %c0_i32_0 : i32, i32
  }
  func.func @transform_1(%arg0: i32) -> (i32, i32) {
    %c0_i32 = arith.constant 0 : i32
    %c0_i32_0 = arith.constant 0 : i32
    %c0_i32_1 = arith.constant 0 : i32
    return %c0_i32, %c0_i32_0 : i32, i32
  }
  func.func @transform_2(%arg0: i32) -> (i32, i32) {
    %c0_i32 = arith.constant 0 : i32
    %c0_i32_0 = arith.constant 0 : i32
    %c0_i32_1 = arith.constant 0 : i32
    return %c0_i32, %c0_i32_0 : i32, i32
  }
  func.func @transform_3(%arg0: i32) -> (i32, i32) {
    %c0_i32 = arith.constant 0 : i32
    %c0_i32_0 = arith.constant 0 : i32
    %c0_i32_1 = arith.constant 0 : i32
    return %c0_i32, %c0_i32_0 : i32, i32
  }
  func.func @transform_4(%arg0: i32) -> (i32, i32) {
    %c0_i32 = arith.constant 0 : i32
    %c0_i32_0 = arith.constant 0 : i32
    %c0_i32_1 = arith.constant 0 : i32
    return %c0_i32, %c0_i32_0 : i32, i32
  }
}

module attributes {stable_mosaic.version = 11 : i64} {
  func.func @_fused_conv_bn_relu_kernel(%arg0: i32, %arg1: memref<64x512xbf16, #tpu.memory_space<vmem>>, %arg2: memref<512x128xbf16, #tpu.memory_space<vmem>>, %arg3: memref<64x1xf32, #tpu.memory_space<vmem>>, %arg4: memref<64x1xf32, #tpu.memory_space<vmem>>, %arg5: memref<64x128xbf16, #tpu.memory_space<vmem>>) attributes {dimension_semantics = [#tpu.dimension_semantics<arbitrary>], iteration_bounds = array<i64: 1>, scalar_prefetch = 0 : i64, scratch_operands = 0 : i64, tpu.core_type = #tpu.core_type<tc>, window_params = [{pipeline_mode = #tpu.pipeline_mode<synchronous>, transform_indices = @transform_0, window_bounds = array<i64: 64, 512>}, {pipeline_mode = #tpu.pipeline_mode<synchronous>, transform_indices = @transform_1, window_bounds = array<i64: 512, 128>}, {pipeline_mode = #tpu.pipeline_mode<synchronous>, transform_indices = @transform_2, window_bounds = array<i64: 64, 1>}, {pipeline_mode = #tpu.pipeline_mode<synchronous>, transform_indices = @transform_3, window_bounds = array<i64: 64, 1>}, {pipeline_mode = #tpu.pipeline_mode<synchronous>, transform_indices = @transform_4, window_bounds = array<i64: 64, 128>}]} {
    %c0 = arith.constant 0 : index
    %c0_0 = arith.constant 0 : index
    %0 = vector.load %arg1[%c0, %c0_0] : memref<64x512xbf16, #tpu.memory_space<vmem>>, vector<64x512xbf16>
    %c0_1 = arith.constant 0 : index
    %c0_2 = arith.constant 0 : index
    %1 = vector.load %arg2[%c0_1, %c0_2] : memref<512x128xbf16, #tpu.memory_space<vmem>>, vector<512x128xbf16>
    %cst = arith.constant dense<0.000000e+00> : vector<64x128xf32>
    %2 = tpu.matmul %0, %1, %cst {dimension_numbers = #tpu.dot_dimension_numbers<[1], [0], [0], [1], [0, 0, 1, 1], [], []>} : vector<64x512xbf16>, vector<512x128xbf16>, vector<64x128xf32> -> vector<64x128xf32>
    %cst_3 = arith.constant dense<0.000000e+00> : vector<64xf32>
    %3 = vector.multi_reduction <add>, %2, %cst_3 [1] : vector<64x128xf32> to vector<64xf32>
    %4 = vector.shape_cast %3 : vector<64xf32> to vector<64x1xf32>
    %cst_4 = arith.constant 2.000000e-02 : f32
    %5 = vector.broadcast %cst_4 : f32 to vector<64x1xf32>
    %6 = arith.mulf %4, %5 : vector<64x1xf32>
    %7 = arith.mulf %2, %2 : vector<64x128xf32>
    %cst_5 = arith.constant dense<0.000000e+00> : vector<64xf32>
    %8 = vector.multi_reduction <add>, %7, %cst_5 [1] : vector<64x128xf32> to vector<64xf32>
    %9 = vector.shape_cast %8 : vector<64xf32> to vector<64x1xf32>
    %cst_6 = arith.constant 2.000000e-02 : f32
    %10 = vector.broadcast %cst_6 : f32 to vector<64x1xf32>
    %11 = arith.mulf %9, %10 : vector<64x1xf32>
    %12 = arith.mulf %6, %6 : vector<64x1xf32>
    %13 = arith.subf %11, %12 : vector<64x1xf32>
    %cst_7 = arith.constant 0.000000e+00 : f32
    %14 = vector.broadcast %cst_7 : f32 to vector<64x1xf32>
    %15 = arith.maximumf %13, %14 : vector<64x1xf32>
    %c0_8 = arith.constant 0 : index
    %c0_9 = arith.constant 0 : index
    %16 = vector.load %arg3[%c0_8, %c0_9] : memref<64x1xf32, #tpu.memory_space<vmem>>, vector<64x1xf32>
    %cst_10 = arith.constant 9.99999974E-6 : f32
    %17 = vector.broadcast %cst_10 : f32 to vector<64x1xf32>
    %18 = arith.addf %15, %17 : vector<64x1xf32>
    %19 = math.rsqrt %18 : vector<64x1xf32>
    %20 = arith.mulf %16, %19 : vector<64x1xf32>
    %c0_11 = arith.constant 0 : index
    %c0_12 = arith.constant 0 : index
    %21 = vector.load %arg4[%c0_11, %c0_12] : memref<64x1xf32, #tpu.memory_space<vmem>>, vector<64x1xf32>
    %22 = arith.mulf %6, %20 : vector<64x1xf32>
    %23 = arith.subf %21, %22 : vector<64x1xf32>
    %24 = vector.broadcast %20 : vector<64x1xf32> to vector<64x128xf32>
    %25 = arith.mulf %2, %24 : vector<64x128xf32>
    %26 = vector.broadcast %23 : vector<64x1xf32> to vector<64x128xf32>
    %27 = arith.addf %25, %26 : vector<64x128xf32>
    %cst_13 = arith.constant 0.000000e+00 : f32
    %28 = vector.broadcast %cst_13 : f32 to vector<64x128xf32>
    %29 = arith.maximumf %27, %28 : vector<64x128xf32>
    %30 = arith.truncf %29 : vector<64x128xf32> to vector<64x128xbf16>
    %c0_14 = arith.constant 0 : index
    %c0_15 = arith.constant 0 : index
    %31 = vector.load %arg5[%c0_14, %c0_15] : memref<64x128xbf16, #tpu.memory_space<vmem>>, vector<64x128xbf16>
    tpu.vector_store %arg5[%c0_14, %c0_15], %30 {strides = array<i32>} : memref<64x128xbf16, #tpu.memory_space<vmem>>, vector<64x128xbf16>,
    return
  }
  func.func @transform_0(%arg0: i32) -> (i32, i32) {
    %c0_i32 = arith.constant 0 : i32
    %c0_i32_0 = arith.constant 0 : i32
    %c0_i32_1 = arith.constant 0 : i32
    return %c0_i32, %c0_i32_0 : i32, i32
  }
  func.func @transform_1(%arg0: i32) -> (i32, i32) {
    %c0_i32 = arith.constant 0 : i32
    %c0_i32_0 = arith.constant 0 : i32
    %c0_i32_1 = arith.constant 0 : i32
    return %c0_i32, %c0_i32_0 : i32, i32
  }
  func.func @transform_2(%arg0: i32) -> (i32, i32) {
    %c0_i32 = arith.constant 0 : i32
    %c0_i32_0 = arith.constant 0 : i32
    %c0_i32_1 = arith.constant 0 : i32
    return %c0_i32, %c0_i32_0 : i32, i32
  }
  func.func @transform_3(%arg0: i32) -> (i32, i32) {
    %c0_i32 = arith.constant 0 : i32
    %c0_i32_0 = arith.constant 0 : i32
    %c0_i32_1 = arith.constant 0 : i32
    return %c0_i32, %c0_i32_0 : i32, i32
  }
  func.func @transform_4(%arg0: i32) -> (i32, i32) {
    %c0_i32 = arith.constant 0 : i32
    %c0_i32_0 = arith.constant 0 : i32
    %c0_i32_1 = arith.constant 0 : i32
    return %c0_i32, %c0_i32_0 : i32, i32
  }
}

module attributes {stable_mosaic.version = 11 : i64} {
  func.func @_fused_conv_bn_relu_kernel(%arg0: i32, %arg1: memref<64x640xbf16, #tpu.memory_space<vmem>>, %arg2: memref<640x128xbf16, #tpu.memory_space<vmem>>, %arg3: memref<64x1xf32, #tpu.memory_space<vmem>>, %arg4: memref<64x1xf32, #tpu.memory_space<vmem>>, %arg5: memref<64x128xbf16, #tpu.memory_space<vmem>>) attributes {dimension_semantics = [#tpu.dimension_semantics<arbitrary>], iteration_bounds = array<i64: 1>, scalar_prefetch = 0 : i64, scratch_operands = 0 : i64, tpu.core_type = #tpu.core_type<tc>, window_params = [{pipeline_mode = #tpu.pipeline_mode<synchronous>, transform_indices = @transform_0, window_bounds = array<i64: 64, 640>}, {pipeline_mode = #tpu.pipeline_mode<synchronous>, transform_indices = @transform_1, window_bounds = array<i64: 640, 128>}, {pipeline_mode = #tpu.pipeline_mode<synchronous>, transform_indices = @transform_2, window_bounds = array<i64: 64, 1>}, {pipeline_mode = #tpu.pipeline_mode<synchronous>, transform_indices = @transform_3, window_bounds = array<i64: 64, 1>}, {pipeline_mode = #tpu.pipeline_mode<synchronous>, transform_indices = @transform_4, window_bounds = array<i64: 64, 128>}]} {
    %c0 = arith.constant 0 : index
    %c0_0 = arith.constant 0 : index
    %0 = vector.load %arg1[%c0, %c0_0] : memref<64x640xbf16, #tpu.memory_space<vmem>>, vector<64x640xbf16>
    %c0_1 = arith.constant 0 : index
    %c0_2 = arith.constant 0 : index
    %1 = vector.load %arg2[%c0_1, %c0_2] : memref<640x128xbf16, #tpu.memory_space<vmem>>, vector<640x128xbf16>
    %cst = arith.constant dense<0.000000e+00> : vector<64x128xf32>
    %2 = tpu.matmul %0, %1, %cst {dimension_numbers = #tpu.dot_dimension_numbers<[1], [0], [0], [1], [0, 0, 1, 1], [], []>} : vector<64x640xbf16>, vector<640x128xbf16>, vector<64x128xf32> -> vector<64x128xf32>
    %cst_3 = arith.constant dense<0.000000e+00> : vector<64xf32>
    %3 = vector.multi_reduction <add>, %2, %cst_3 [1] : vector<64x128xf32> to vector<64xf32>
    %4 = vector.shape_cast %3 : vector<64xf32> to vector<64x1xf32>
    %cst_4 = arith.constant 0.055555556 : f32
    %5 = vector.broadcast %cst_4 : f32 to vector<64x1xf32>
    %6 = arith.mulf %4, %5 : vector<64x1xf32>
    %7 = arith.mulf %2, %2 : vector<64x128xf32>
    %cst_5 = arith.constant dense<0.000000e+00> : vector<64xf32>
    %8 = vector.multi_reduction <add>, %7, %cst_5 [1] : vector<64x128xf32> to vector<64xf32>
    %9 = vector.shape_cast %8 : vector<64xf32> to vector<64x1xf32>
    %cst_6 = arith.constant 0.055555556 : f32
    %10 = vector.broadcast %cst_6 : f32 to vector<64x1xf32>
    %11 = arith.mulf %9, %10 : vector<64x1xf32>
    %12 = arith.mulf %6, %6 : vector<64x1xf32>
    %13 = arith.subf %11, %12 : vector<64x1xf32>
    %cst_7 = arith.constant 0.000000e+00 : f32
    %14 = vector.broadcast %cst_7 : f32 to vector<64x1xf32>
    %15 = arith.maximumf %13, %14 : vector<64x1xf32>
    %c0_8 = arith.constant 0 : index
    %c0_9 = arith.constant 0 : index
    %16 = vector.load %arg3[%c0_8, %c0_9] : memref<64x1xf32, #tpu.memory_space<vmem>>, vector<64x1xf32>
    %cst_10 = arith.constant 9.99999974E-6 : f32
    %17 = vector.broadcast %cst_10 : f32 to vector<64x1xf32>
    %18 = arith.addf %15, %17 : vector<64x1xf32>
    %19 = math.rsqrt %18 : vector<64x1xf32>
    %20 = arith.mulf %16, %19 : vector<64x1xf32>
    %c0_11 = arith.constant 0 : index
    %c0_12 = arith.constant 0 : index
    %21 = vector.load %arg4[%c0_11, %c0_12] : memref<64x1xf32, #tpu.memory_space<vmem>>, vector<64x1xf32>
    %22 = arith.mulf %6, %20 : vector<64x1xf32>
    %23 = arith.subf %21, %22 : vector<64x1xf32>
    %24 = vector.broadcast %20 : vector<64x1xf32> to vector<64x128xf32>
    %25 = arith.mulf %2, %24 : vector<64x128xf32>
    %26 = vector.broadcast %23 : vector<64x1xf32> to vector<64x128xf32>
    %27 = arith.addf %25, %26 : vector<64x128xf32>
    %cst_13 = arith.constant 0.000000e+00 : f32
    %28 = vector.broadcast %cst_13 : f32 to vector<64x128xf32>
    %29 = arith.maximumf %27, %28 : vector<64x128xf32>
    %30 = arith.truncf %29 : vector<64x128xf32> to vector<64x128xbf16>
    %c0_14 = arith.constant 0 : index
    %c0_15 = arith.constant 0 : index
    %31 = vector.load %arg5[%c0_14, %c0_15] : memref<64x128xbf16, #tpu.memory_space<vmem>>, vector<64x128xbf16>
    tpu.vector_store %arg5[%c0_14, %c0_15], %30 {strides = array<i32>} : memref<64x128xbf16, #tpu.memory_space<vmem>>, vector<64x128xbf16>,
    return
  }
  func.func @transform_0(%arg0: i32) -> (i32, i32) {
    %c0_i32 = arith.constant 0 : i32
    %c0_i32_0 = arith.constant 0 : i32
    %c0_i32_1 = arith.constant 0 : i32
    return %c0_i32, %c0_i32_0 : i32, i32
  }
  func.func @transform_1(%arg0: i32) -> (i32, i32) {
    %c0_i32 = arith.constant 0 : i32
    %c0_i32_0 = arith.constant 0 : i32
    %c0_i32_1 = arith.constant 0 : i32
    return %c0_i32, %c0_i32_0 : i32, i32
  }
  func.func @transform_2(%arg0: i32) -> (i32, i32) {
    %c0_i32 = arith.constant 0 : i32
    %c0_i32_0 = arith.constant 0 : i32
    %c0_i32_1 = arith.constant 0 : i32
    return %c0_i32, %c0_i32_0 : i32, i32
  }
  func.func @transform_3(%arg0: i32) -> (i32, i32) {
    %c0_i32 = arith.constant 0 : i32
    %c0_i32_0 = arith.constant 0 : i32
    %c0_i32_1 = arith.constant 0 : i32
    return %c0_i32, %c0_i32_0 : i32, i32
  }
  func.func @transform_4(%arg0: i32) -> (i32, i32) {
    %c0_i32 = arith.constant 0 : i32
    %c0_i32_0 = arith.constant 0 : i32
    %c0_i32_1 = arith.constant 0 : i32
    return %c0_i32, %c0_i32_0 : i32, i32
  }
}

module attributes {stable_mosaic.version = 11 : i64} {
  func.func @_mlp_kernel(%arg0: i32, %arg1: memref<8x640xbf16, #tpu.memory_space<vmem>>, %arg2: memref<640x512xbf16, #tpu.memory_space<vmem>>, %arg3: memref<1x512xf32, #tpu.memory_space<vmem>>, %arg4: memref<512x128xbf16, #tpu.memory_space<vmem>>, %arg5: memref<1x128xf32, #tpu.memory_space<vmem>>, %arg6: memref<8x128xf32, #tpu.memory_space<vmem>>) attributes {dimension_semantics = [#tpu.dimension_semantics<parallel>], iteration_bounds = array<i64: 1>, scalar_prefetch = 0 : i64, scratch_operands = 0 : i64, tpu.core_type = #tpu.core_type<tc>, window_params = [{transform_indices = @transform_0, window_bounds = array<i64: 8, 640>}, {pipeline_mode = #tpu.pipeline_mode<synchronous>, transform_indices = @transform_1, window_bounds = array<i64: 640, 512>}, {pipeline_mode = #tpu.pipeline_mode<synchronous>, transform_indices = @transform_2, window_bounds = array<i64: 1, 512>}, {pipeline_mode = #tpu.pipeline_mode<synchronous>, transform_indices = @transform_3, window_bounds = array<i64: 512, 128>}, {pipeline_mode = #tpu.pipeline_mode<synchronous>, transform_indices = @transform_4, window_bounds = array<i64: 1, 128>}, {transform_indices = @transform_5, window_bounds = array<i64: 8, 128>}]} {
    %c0 = arith.constant 0 : index
    %c0_0 = arith.constant 0 : index
    %0 = vector.load %arg1[%c0, %c0_0] : memref<8x640xbf16, #tpu.memory_space<vmem>>, vector<8x640xbf16>
    %c0_1 = arith.constant 0 : index
    %c0_2 = arith.constant 0 : index
    %1 = vector.load %arg2[%c0_1, %c0_2] : memref<640x512xbf16, #tpu.memory_space<vmem>>, vector<640x512xbf16>
    %cst = arith.constant dense<0.000000e+00> : vector<8x512xf32>
    %2 = tpu.matmul %0, %1, %cst {dimension_numbers = #tpu.dot_dimension_numbers<[1], [0], [0], [1], [0, 0, 1, 1], [], []>} : vector<8x640xbf16>, vector<640x512xbf16>, vector<8x512xf32> -> vector<8x512xf32>
    %c0_3 = arith.constant 0 : index
    %c0_4 = arith.constant 0 : index
    %3 = vector.load %arg3[%c0_3, %c0_4] : memref<1x512xf32, #tpu.memory_space<vmem>>, vector<1x512xf32>
    %4 = vector.broadcast %3 : vector<1x512xf32> to vector<8x512xf32>
    %5 = arith.addf %2, %4 : vector<8x512xf32>
    %cst_5 = arith.constant 0.000000e+00 : f32
    %6 = vector.broadcast %cst_5 : f32 to vector<8x512xf32>
    %7 = arith.maximumf %5, %6 : vector<8x512xf32>
    %8 = arith.truncf %7 : vector<8x512xf32> to vector<8x512xbf16>
    %c0_6 = arith.constant 0 : index
    %c0_7 = arith.constant 0 : index
    %9 = vector.load %arg4[%c0_6, %c0_7] : memref<512x128xbf16, #tpu.memory_space<vmem>>, vector<512x128xbf16>
    %cst_8 = arith.constant dense<0.000000e+00> : vector<8x128xf32>
    %10 = tpu.matmul %8, %9, %cst_8 {dimension_numbers = #tpu.dot_dimension_numbers<[1], [0], [0], [1], [0, 0, 1, 1], [], []>} : vector<8x512xbf16>, vector<512x128xbf16>, vector<8x128xf32> -> vector<8x128xf32>
    %c0_9 = arith.constant 0 : index
    %c0_10 = arith.constant 0 : index
    %11 = vector.load %arg5[%c0_9, %c0_10] : memref<1x128xf32, #tpu.memory_space<vmem>>, vector<1x128xf32>
    %12 = vector.broadcast %11 : vector<1x128xf32> to vector<8x128xf32>
    %13 = arith.addf %10, %12 : vector<8x128xf32>
    %c0_11 = arith.constant 0 : index
    %c0_12 = arith.constant 0 : index
    %14 = vector.load %arg6[%c0_11, %c0_12] : memref<8x128xf32, #tpu.memory_space<vmem>>, vector<8x128xf32>
    tpu.vector_store %arg6[%c0_11, %c0_12], %13 {strides = array<i32>} : memref<8x128xf32, #tpu.memory_space<vmem>>, vector<8x128xf32>,
    return
  }
  func.func @transform_0(%arg0: i32) -> (i32, i32) {
    %c0_i32 = arith.constant 0 : i32
    %c0_i32_0 = arith.constant 0 : i32
    return %arg0, %c0_i32 : i32, i32
  }
  func.func @transform_1(%arg0: i32) -> (i32, i32) {
    %c0_i32 = arith.constant 0 : i32
    %c0_i32_0 = arith.constant 0 : i32
    %c0_i32_1 = arith.constant 0 : i32
    return %c0_i32, %c0_i32_0 : i32, i32
  }
  func.func @transform_2(%arg0: i32) -> (i32, i32) {
    %c0_i32 = arith.constant 0 : i32
    %c0_i32_0 = arith.constant 0 : i32
    %c0_i32_1 = arith.constant 0 : i32
    return %c0_i32, %c0_i32_0 : i32, i32
  }
  func.func @transform_3(%arg0: i32) -> (i32, i32) {
    %c0_i32 = arith.constant 0 : i32
    %c0_i32_0 = arith.constant 0 : i32
    %c0_i32_1 = arith.constant 0 : i32
    return %c0_i32, %c0_i32_0 : i32, i32
  }
  func.func @transform_4(%arg0: i32) -> (i32, i32) {
    %c0_i32 = arith.constant 0 : i32
    %c0_i32_0 = arith.constant 0 : i32
    %c0_i32_1 = arith.constant 0 : i32
    return %c0_i32, %c0_i32_0 : i32, i32
  }
  func.func @transform_5(%arg0: i32) -> (i32, i32) {
    %c0_i32 = arith.constant 0 : i32
    %c0_i32_0 = arith.constant 0 : i32
    return %arg0, %c0_i32 : i32, i32
  }
}

</mosaic_0001>

<llo_original>
// kernel: convnet_forward.4
$region0: #{convnet_forward.4}
  #allocation0 [shape = 'u32[]', space=smem, size = 0x4, offset = 0x4, fixed_abs, tag = 'smem constant byte address 0x4 - core index']
  #allocation1 [shape = 'u32[144,128]{1,0:T(1,128)}', space=vmem, size = 0x12000, scoped, tag = 'internal scratch']
  %s0 = inlined_call_operand.vmem [shape: bf16[32,256], index: 0, kind: input, shape index: {}]
  %s1 = inlined_call_operand.vmem [shape: bf16[256,384], index: 1, kind: input, shape index: {}]
  %s2 = inlined_call_operand.vmem [shape: f32[32,1], index: 2, kind: input, shape index: {}]
  %s3 = inlined_call_operand.vmem [shape: f32[32,1], index: 3, kind: input, shape index: {}]
  %s4 = inlined_call_operand.vmem [shape: bf16[32,384], index: 4, kind: output, shape index: {}]
  %s5 = sld [smem:[#allocation0]]
  $region26: #{convnet_forward.4} parent=0
    _
  %s7 = ssub.s32 1, %s5
  %s8 = scalar_select 0, %s7, %s5
  // Predicated region
  $region2: #{convnet_forward.4} parent=0 // pred_check
    _
  $region3: #{convnet_forward.4} parent=0 // pred_check_branch
    %10 = sbr.rel (0) target = $region5
  $region4: #{convnet_forward.4} parent=0 // pred_region
    _
  $region5: #{convnet_forward.4} parent=0 // pred_fallthru
    _
  // Predicated region
  $region6: #{convnet_forward.4} parent=0 // pred_check
    _
  $region7: #{convnet_forward.4} parent=0 // pred_check_branch
    %12 = sbr.rel (0) target = $region9
  $region8: #{convnet_forward.4} parent=0 // pred_region
    _
  $region9: #{convnet_forward.4} parent=0 // pred_fallthru
    _
  // Predicated region
  $region10: #{convnet_forward.4} parent=0 // pred_check
    _
  $region11: #{convnet_forward.4} parent=0 // pred_check_branch
    %14 = sbr.rel (0) target = $region13
  $region12: #{convnet_forward.4} parent=0 // pred_region
    _
  $region13: #{convnet_forward.4} parent=0 // pred_fallthru
    _
  // Predicated region
  $region14: #{convnet_forward.4} parent=0 // pred_check
    _
  $region15: #{convnet_forward.4} parent=0 // pred_check_branch
    %16 = sbr.rel (0) target = $region17
  $region16: #{convnet_forward.4} parent=0 // pred_region
    _
  $region17: #{convnet_forward.4} parent=0 // pred_fallthru
    _
  %v18 = vld [vmem:[%s0] sm:$0xff]
  %v19 = vld [vmem:[%s0 + $0x8] sm:$0xff]
  %v20 = vld [vmem:[%s0 + $0x10] sm:$0xff]
  %v21 = vld [vmem:[%s0 + $0x18] sm:$0xff]
  %v22 = vld [vmem:[%s1] sm:$0xff]
  %v23 = vld [vmem:[%s1 + $0x8] sm:$0xf]
  %v24 = vld [vmem:[%s1 + $0xc] sm:$0xff]
  %v25 = vld [vmem:[%s1 + $0x14] sm:$0xf]
  %v26 = vld [vmem:[%s1 + $0x18] sm:$0xff]
  %v27 = vld [vmem:[%s1 + $0x20] sm:$0xf]
  %v28 = vld [vmem:[%s1 + $0x24] sm:$0xff]
  %v29 = vld [vmem:[%s1 + $0x2c] sm:$0xf]
  %v30 = vld [vmem:[%s1 + $0x30] sm:$0xff]
  %v31 = vld [vmem:[%s1 + $0x38] sm:$0xf]
  %v32 = vld [vmem:[%s1 + $0x3c] sm:$0xff]
  %v33 = vld [vmem:[%s1 + $0x44] sm:$0xf]
  %v34 = vld [vmem:[%s1 + $0x48] sm:$0xff]
  %v35 = vld [vmem:[%s1 + $0x50] sm:$0xf]
  %v36 = vld [vmem:[%s1 + $0x54] sm:$0xff]
  %v37 = vld [vmem:[%s1 + $0x5c] sm:$0xf]
  %v38 = vld [vmem:[%s1 + $0x60] sm:$0xff]
  %v39 = vld [vmem:[%s1 + $0x68] sm:$0xf]
  %v40 = vld [vmem:[%s1 + $0x6c] sm:$0xff]
  %v41 = vld [vmem:[%s1 + $0x74] sm:$0xf]
  %v42 = vld [vmem:[%s1 + $0x78] sm:$0xff]
  %v43 = vld [vmem:[%s1 + $0x80] sm:$0xf]
  %v44 = vld [vmem:[%s1 + $0x84] sm:$0xff]
  %v45 = vld [vmem:[%s1 + $0x8c] sm:$0xf]
  %v46 = vld [vmem:[%s1 + $0x90] sm:$0xff]
  %v47 = vld [vmem:[%s1 + $0x98] sm:$0xf]
  %v48 = vld [vmem:[%s1 + $0x9c] sm:$0xff]
  %v49 = vld [vmem:[%s1 + $0xa4] sm:$0xf]
  %v50 = vld [vmem:[%s1 + $0xa8] sm:$0xff]
  %v51 = vld [vmem:[%s1 + $0xb0] sm:$0xf]
  %v52 = vld [vmem:[%s1 + $0xb4] sm:$0xff]
  %v53 = vld [vmem:[%s1 + $0xbc] sm:$0xf]
  %v54 = vld [vmem:[%s1 + $0xc0] sm:$0xff]
  %v55 = vld [vmem:[%s1 + $0xc8] sm:$0xf]
  %v56 = vld [vmem:[%s1 + $0xcc] sm:$0xff]
  %v57 = vld [vmem:[%s1 + $0xd4] sm:$0xf]
  %v58 = vld [vmem:[%s1 + $0xd8] sm:$0xff]
  %v59 = vld [vmem:[%s1 + $0xe0] sm:$0xf]
  %v60 = vld [vmem:[%s1 + $0xe4] sm:$0xff]
  %v61 = vld [vmem:[%s1 + $0xec] sm:$0xf]
  %v62 = vld [vmem:[%s1 + $0xf0] sm:$0xff]
  %v63 = vld [vmem:[%s1 + $0xf8] sm:$0xf]
  %v64 = vld [vmem:[%s1 + $0xfc] sm:$0xff]
  %v65 = vld [vmem:[%s1 + $0x104] sm:$0xf]
  %v66 = vld [vmem:[%s1 + $0x108] sm:$0xff]
  %v67 = vld [vmem:[%s1 + $0x110] sm:$0xf]
  %v68 = vld [vmem:[%s1 + $0x114] sm:$0xff]
  %v69 = vld [vmem:[%s1 + $0x11c] sm:$0xf]
  %v70 = vld [vmem:[%s1 + $0x120] sm:$0xff]
  %v71 = vld [vmem:[%s1 + $0x128] sm:$0xf]
  %v72 = vld [vmem:[%s1 + $0x12c] sm:$0xff]
  %v73 = vld [vmem:[%s1 + $0x134] sm:$0xf]
  %v74 = vld [vmem:[%s1 + $0x138] sm:$0xff]
  %v75 = vld [vmem:[%s1 + $0x140] sm:$0xf]
  %v76 = vld [vmem:[%s1 + $0x144] sm:$0xff]
  %v77 = vld [vmem:[%s1 + $0x14c] sm:$0xf]
  %v78 = vld [vmem:[%s1 + $0x150] sm:$0xff]
  %v79 = vld [vmem:[%s1 + $0x158] sm:$0xf]
  %v80 = vld [vmem:[%s1 + $0x15c] sm:$0xff]
  %v81 = vld [vmem:[%s1 + $0x164] sm:$0xf]
  %v82 = vld [vmem:[%s1 + $0x168] sm:$0xff]
  %v83 = vld [vmem:[%s1 + $0x170] sm:$0xf]
  %v84 = vld [vmem:[%s1 + $0x174] sm:$0xff]
  %v85 = vld [vmem:[%s1 + $0x17c] sm:$0xf]
  %v90 = vunpack.c.l.b16 %v18
  %v91 = vunpack.c.h.b16 %v18
  %v92 = vunpack.c.l.b16 %v19
  %v93 = vunpack.c.h.b16 %v19
  %v94 = vunpack.c.l.b16 %v20
  %v95 = vunpack.c.h.b16 %v20
  %v96 = vunpack.c.l.b16 %v21
  %v97 = vunpack.c.h.b16 %v21
  %v98 = vpack.c.b16 %v92, %v90
  %v99 = vpack.c.b16 %v93, %v91
  %v100 = vpack.c.b16 %v96, %v94
  %v101 = vpack.c.b16 %v97, %v95
  %v170 = vunpack.c.l.b16 %v22
  %v171 = vunpack.c.h.b16 %v22
  %v172 = vunpack.c.l.b16 %v23
  %v173 = vunpack.c.l.b16 %v24
  %v174 = vunpack.c.h.b16 %v24
  %v175 = vunpack.c.l.b16 %v25
  %v176 = vunpack.c.l.b16 %v26
  %v177 = vunpack.c.h.b16 %v26
  %v178 = vunpack.c.l.b16 %v27
  %v179 = vunpack.c.l.b16 %v28
  %v180 = vunpack.c.h.b16 %v28
  %v181 = vunpack.c.l.b16 %v29
  %v182 = vunpack.c.l.b16 %v30
  %v183 = vunpack.c.h.b16 %v30
  %v184 = vunpack.c.l.b16 %v31
  %v185 = vunpack.c.l.b16 %v32
  %v186 = vunpack.c.h.b16 %v32
  %v187 = vunpack.c.l.b16 %v33
  %v188 = vunpack.c.l.b16 %v34
  %v189 = vunpack.c.h.b16 %v34
  %v190 = vunpack.c.l.b16 %v35
  %v191 = vunpack.c.l.b16 %v36
  %v192 = vunpack.c.h.b16 %v36
  %v193 = vunpack.c.l.b16 %v37
  %v194 = vunpack.c.l.b16 %v38
  %v195 = vunpack.c.h.b16 %v38
  %v196 = vunpack.c.l.b16 %v39
  %v197 = vunpack.c.l.b16 %v40
  %v198 = vunpack.c.h.b16 %v40
  %v199 = vunpack.c.l.b16 %v41
  %v200 = vunpack.c.l.b16 %v42
  %v201 = vunpack.c.h.b16 %v42
  %v202 = vunpack.c.l.b16 %v43
  %v203 = vunpack.c.l.b16 %v44
  %v204 = vunpack.c.h.b16 %v44
  %v205 = vunpack.c.l.b16 %v45
  %v206 = vunpack.c.l.b16 %v46
  %v207 = vunpack.c.h.b16 %v46
  %v208 = vunpack.c.l.b16 %v47
  %v209 = vunpack.c.l.b16 %v48
  %v210 = vunpack.c.h.b16 %v48
  %v211 = vunpack.c.l.b16 %v49
  %v212 = vunpack.c.l.b16 %v50
  %v213 = vunpack.c.h.b16 %v50
  %v214 = vunpack.c.l.b16 %v51
  %v215 = vunpack.c.l.b16 %v52
  %v216 = vunpack.c.h.b16 %v52
  %v217 = vunpack.c.l.b16 %v53
  %v218 = vunpack.c.l.b16 %v54
  %v219 = vunpack.c.h.b16 %v54
  %v220 = vunpack.c.l.b16 %v55
  %v221 = vunpack.c.l.b16 %v56
  %v222 = vunpack.c.h.b16 %v56
  %v223 = vunpack.c.l.b16 %v57
  %v224 = vunpack.c.l.b16 %v58
  %v225 = vunpack.c.h.b16 %v58
  %v226 = vunpack.c.l.b16 %v59
  %v227 = vunpack.c.l.b16 %v60
  %v228 = vunpack.c.h.b16 %v60
  %v229 = vunpack.c.l.b16 %v61
  %v230 = vunpack.c.l.b16 %v62
  %v231 = vunpack.c.h.b16 %v62
  %v232 = vunpack.c.l.b16 %v63
  %v233 = vunpack.c.l.b16 %v64
  %v234 = vunpack.c.h.b16 %v64
  %v235 = vunpack.c.l.b16 %v65
  %v236 = vunpack.c.l.b16 %v66
  %v237 = vunpack.c.h.b16 %v66
  %v238 = vunpack.c.l.b16 %v67
  %v239 = vunpack.c.l.b16 %v68
  %v240 = vunpack.c.h.b16 %v68
  %v241 = vunpack.c.l.b16 %v69
  %v242 = vunpack.c.l.b16 %v70
  %v243 = vunpack.c.h.b16 %v70
  %v244 = vunpack.c.l.b16 %v71
  %v245 = vunpack.c.l.b16 %v72
  %v246 = vunpack.c.h.b16 %v72
  %v247 = vunpack.c.l.b16 %v73
  %v248 = vunpack.c.l.b16 %v74
  %v249 = vunpack.c.h.b16 %v74
  %v250 = vunpack.c.l.b16 %v75
  %v251 = vunpack.c.l.b16 %v76
  %v252 = vunpack.c.h.b16 %v76
  %v253 = vunpack.c.l.b16 %v77
  %v254 = vunpack.c.l.b16 %v78
  %v255 = vunpack.c.h.b16 %v78
  %v256 = vunpack.c.l.b16 %v79
  %v257 = vunpack.c.l.b16 %v80
  %v258 = vunpack.c.h.b16 %v80
  %v259 = vunpack.c.l.b16 %v81
  %v260 = vunpack.c.l.b16 %v82
  %v261 = vunpack.c.h.b16 %v82
  %v262 = vunpack.c.l.b16 %v83
  %v263 = vunpack.c.l.b16 %v84
  %v264 = vunpack.c.h.b16 %v84
  %v265 = vunpack.c.l.b16 %v85
  %v266 = vpack.c.b16 %v173, %v170
  %v267 = vpack.c.b16 %v174, %v171
  %v268 = vpack.c.b16 %v175, %v172
  %v269 = vpack.c.b16 %v179, %v176
  %v270 = vpack.c.b16 %v180, %v177
  %v271 = vpack.c.b16 %v181, %v178
  %v272 = vpack.c.b16 %v185, %v182
  %v273 = vpack.c.b16 %v186, %v183
  %v274 = vpack.c.b16 %v187, %v184
  %v275 = vpack.c.b16 %v191, %v188
  %v276 = vpack.c.b16 %v192, %v189
  %v277 = vpack.c.b16 %v193, %v190
  %v278 = vpack.c.b16 %v197, %v194
  %v279 = vpack.c.b16 %v198, %v195
  %v280 = vpack.c.b16 %v199, %v196
  %v281 = vpack.c.b16 %v203, %v200
  %v282 = vpack.c.b16 %v204, %v201
  %v283 = vpack.c.b16 %v205, %v202
  %v284 = vpack.c.b16 %v209, %v206
  %v285 = vpack.c.b16 %v210, %v207
  %v286 = vpack.c.b16 %v211, %v208
  %v287 = vpack.c.b16 %v215, %v212
  %v288 = vpack.c.b16 %v216, %v213
  %v289 = vpack.c.b16 %v217, %v214
  %v290 = vpack.c.b16 %v221, %v218
  %v291 = vpack.c.b16 %v222, %v219
  %v292 = vpack.c.b16 %v223, %v220
  %v293 = vpack.c.b16 %v227, %v224
  %v294 = vpack.c.b16 %v228, %v225
  %v295 = vpack.c.b16 %v229, %v226
  %v296 = vpack.c.b16 %v233, %v230
  %v297 = vpack.c.b16 %v234, %v231
  %v298 = vpack.c.b16 %v235, %v232
  %v299 = vpack.c.b16 %v239, %v236
  %v300 = vpack.c.b16 %v240, %v237
  %v301 = vpack.c.b16 %v241, %v238
  %v302 = vpack.c.b16 %v245, %v242
  %v303 = vpack.c.b16 %v246, %v243
  %v304 = vpack.c.b16 %v247, %v244
  %v305 = vpack.c.b16 %v251, %v248
  %v306 = vpack.c.b16 %v252, %v249
  %v307 = vpack.c.b16 %v253, %v250
  %v308 = vpack.c.b16 %v257, %v254
  %v309 = vpack.c.b16 %v258, %v255
  %v310 = vpack.c.b16 %v259, %v256
  %v311 = vpack.c.b16 %v263, %v260
  %v312 = vpack.c.b16 %v264, %v261
  %v313 = vpack.c.b16 %v265, %v262
  %362 = vmatprep.subr.bf16.mxu0 %v267
  %363 = vmatpush1.bf16.msra.mxu0 %v266
  %364 = vmatprep.subr.bf16.mxu0 %v270
  %365 = vmatpush1.bf16.msra.mxu0 %v269
  %366 = vmatprep.subr.bf16.mxu0 %v273
  %367 = vmatpush1.bf16.msra.mxu0 %v272
  %368 = vmatprep.subr.bf16.mxu0 %v276
  %369 = vmatpush1.bf16.msra.mxu0 %v275
  %370 = vmatprep.subr.bf16.mxu0 %v279
  %371 = vmatpush1.bf16.msra.mxu0 %v278
  %372 = vmatprep.subr.bf16.mxu0 %v282
  %373 = vmatpush1.bf16.msra.mxu0 %v281
  %374 = vmatprep.subr.bf16.mxu0 %v285
  %375 = vmatpush1.bf16.msra.mxu0 %v284
  %376 = vmatprep.subr.bf16.mxu0 %v288
  %377 = vmatpush1.bf16.msra.mxu0 %v287
  %378 = vmatprep.subr.bf16.mxu0 %v291
  %379 = vmatpush1.bf16.msra.mxu0 %v290
  %380 = vmatprep.subr.bf16.mxu0 %v294
  %381 = vmatpush1.bf16.msra.mxu0 %v293
  %382 = vmatprep.subr.bf16.mxu0 %v297
  %383 = vmatpush1.bf16.msra.mxu0 %v296
  %384 = vmatprep.subr.bf16.mxu0 %v300
  %385 = vmatpush1.bf16.msra.mxu0 %v299
  %386 = vmatprep.subr.bf16.mxu0 %v303
  %387 = vmatpush1.bf16.msra.mxu0 %v302
  %388 = vmatprep.subr.bf16.mxu0 %v306
  %389 = vmatpush1.bf16.msra.mxu0 %v305
  %390 = vmatprep.subr.bf16.mxu0 %v309
  %391 = vmatpush1.bf16.msra.mxu0 %v308
  %392 = vmatprep.subr.bf16.mxu0 %v312
  %393 = vmatpush1.bf16.msra.mxu0 %v311
  %394 = vmatprep.mubr.bf16.mxu0 %v99
  %395 = vmatmul.mubr.bf16.gmra.mrb[0].mxu0 %v98
  %v396 = vpop.f32.mrb[0].mxu0
  %v397 = vadd.f32 0.0, %v396
  %v398 = vpop.f32.mrb[0].mxu0
  %v399 = vadd.f32 0.0, %v398
  %v400 = vpop.f32.mrb[0].mxu0
  %v401 = vadd.f32 0.0, %v400
  %v402 = vpop.f32.mrb[0].mxu0
  %v403 = vadd.f32 0.0, %v402
  %404 = vmatprep.mubr.bf16.mxu0 %v101
  %405 = vmatmul.mubr.bf16.gmra.mrb[0].mxu0 %v100
  %v406 = vpop.f32.mrb[0].mxu0
  %v407 = vadd.f32 0.0, %v406
  %v408 = vpop.f32.mrb[0].mxu0
  %v409 = vadd.f32 0.0, %v408
  %v410 = vpop.f32.mrb[0].mxu0
  %v411 = vadd.f32 0.0, %v410
  %v412 = vpop.f32.mrb[0].mxu0
  %v413 = vadd.f32 0.0, %v412
  %414 = vdwg.mxu0
  %415 = vmatprep.subr.bf16.mxu0 0
  %416 = vmatpush1.bf16.msra.mxu0 %v268
  %417 = vmatprep.subr.bf16.mxu0 0
  %418 = vmatpush1.bf16.msra.mxu0 %v271
  %419 = vmatprep.subr.bf16.mxu0 0
  %420 = vmatpush1.bf16.msra.mxu0 %v274
  %421 = vmatprep.subr.bf16.mxu0 0
  %422 = vmatpush1.bf16.msra.mxu0 %v277
  %423 = vmatprep.subr.bf16.mxu0 0
  %424 = vmatpush1.bf16.msra.mxu0 %v280
  %425 = vmatprep.subr.bf16.mxu0 0
  %426 = vmatpush1.bf16.msra.mxu0 %v283
  %427 = vmatprep.subr.bf16.mxu0 0
  %428 = vmatpush1.bf16.msra.mxu0 %v286
  %429 = vmatprep.subr.bf16.mxu0 0
  %430 = vmatpush1.bf16.msra.mxu0 %v289
  %431 = vmatprep.subr.bf16.mxu0 0
  %432 = vmatpush1.bf16.msra.mxu0 %v292
  %433 = vmatprep.subr.bf16.mxu0 0
  %434 = vmatpush1.bf16.msra.mxu0 %v295
  %435 = vmatprep.subr.bf16.mxu0 0
  %436 = vmatpush1.bf16.msra.mxu0 %v298
  %437 = vmatprep.subr.bf16.mxu0 0
  %438 = vmatpush1.bf16.msra.mxu0 %v301
  %439 = vmatprep.subr.bf16.mxu0 0
  %440 = vmatpush1.bf16.msra.mxu0 %v304
  %441 = vmatprep.subr.bf16.mxu0 0
  %442 = vmatpush1.bf16.msra.mxu0 %v307
  %443 = vmatprep.subr.bf16.mxu0 0
  %444 = vmatpush1.bf16.msra.mxu0 %v310
  %445 = vmatprep.subr.bf16.mxu0 0
  %446 = vmatpush1.bf16.msra.mxu0 %v313
  %447 = vmatprep.mubr.bf16.mxu0 %v99
  %448 = vmatmul.mubr.bf16.gmra.mrb[0].mxu0 %v98
  %v449 = vpop.f32.mrb[0].mxu0
  %v450 = vadd.f32 0.0, %v449
  %v451 = vpop.f32.mrb[0].mxu0
  %v452 = vpop.f32.mrb[0].mxu0
  %v453 = vadd.f32 0.0, %v452
  %v454 = vpop.f32.mrb[0].mxu0
  %455 = vmatprep.mubr.bf16.mxu0 %v101
  %456 = vmatmul.mubr.bf16.gmra.mrb[0].mxu0 %v100
  %v457 = vpop.f32.mrb[0].mxu0
  %v458 = vadd.f32 0.0, %v457
  %v459 = vpop.f32.mrb[0].mxu0
  %v460 = vpop.f32.mrb[0].mxu0
  %v461 = vadd.f32 0.0, %v460
  %v462 = vpop.f32.mrb[0].mxu0
  %463 = vdwg.mxu0
  %v464 = vadd.f32 %v397, %v399
  %v465 = vadd.f32 %v464, %v450
  %466 = vadd.xlane.f32.xlu0 %v465
  %v467 = vpop.xlane.xlu0 %466
  %v468 = vadd.f32 %v401, %v403
  %v469 = vadd.f32 %v468, %v453
  %470 = vadd.xlane.f32.xlu0 %v469
  %v471 = vpop.xlane.xlu0 %470
  %v472 = vadd.f32 %v407, %v409
  %v473 = vadd.f32 %v472, %v458
  %474 = vadd.xlane.f32.xlu0 %v473
  %v475 = vpop.xlane.xlu0 %474
  %v476 = vadd.f32 %v411, %v413
  %v477 = vadd.f32 %v476, %v461
  %478 = vadd.xlane.f32.xlu0 %v477
  %v479 = vpop.xlane.xlu0 %478
  %v480 = vmul.f32 %v467, 0.0034722222
  %v481 = vmul.f32 %v471, 0.0034722222
  %v482 = vmul.f32 %v475, 0.0034722222
  %v483 = vmul.f32 %v479, 0.0034722222
  %v484 = vmul.f32 %v397, %v397
  %v485 = vmul.f32 %v399, %v399
  %v486 = vmul.f32 %v450, %v450
  %v487 = vmul.f32 %v401, %v401
  %v488 = vmul.f32 %v403, %v403
  %v489 = vmul.f32 %v453, %v453
  %v490 = vmul.f32 %v407, %v407
  %v491 = vmul.f32 %v409, %v409
  %v492 = vmul.f32 %v458, %v458
  %v493 = vmul.f32 %v411, %v411
  %v494 = vmul.f32 %v413, %v413
  %v495 = vmul.f32 %v461, %v461
  %v496 = vadd.f32 %v484, %v485
  %v497 = vadd.f32 %v496, %v486
  %498 = vadd.xlane.f32.xlu0 %v497
  %v499 = vpop.xlane.xlu0 %498
  %v500 = vadd.f32 %v487, %v488
  %v501 = vadd.f32 %v500, %v489
  %502 = vadd.xlane.f32.xlu0 %v501
  %v503 = vpop.xlane.xlu0 %502
  %v504 = vadd.f32 %v490, %v491
  %v505 = vadd.f32 %v504, %v492
  %506 = vadd.xlane.f32.xlu0 %v505
  %v507 = vpop.xlane.xlu0 %506
  %v508 = vadd.f32 %v493, %v494
  %v509 = vadd.f32 %v508, %v495
  %510 = vadd.xlane.f32.xlu0 %v509
  %v511 = vpop.xlane.xlu0 %510
  %v512 = vmul.f32 %v499, 0.0034722222
  %v513 = vmul.f32 %v503, 0.0034722222
  %v514 = vmul.f32 %v507, 0.0034722222
  %v515 = vmul.f32 %v511, 0.0034722222
  %v516 = vmul.f32 %v480, %v480
  %v517 = vmul.f32 %v481, %v481
  %v518 = vmul.f32 %v482, %v482
  %v519 = vmul.f32 %v483, %v483
  %v520 = vsub.f32 %v512, %v516
  %v521 = vsub.f32 %v513, %v517
  %v522 = vsub.f32 %v514, %v518
  %v523 = vsub.f32 %v515, %v519
  %v524 = vmax.f32 %v520, 0.0
  %v525 = vmax.f32 %v521, 0.0
  %v526 = vmax.f32 %v522, 0.0
  %v527 = vmax.f32 %v523, 0.0
  %v528 = vld [vmem:[%s2] sm:$0xff]
  %v529 = vld [vmem:[%s2 + $0x8] sm:$0xff]
  %v530 = vld [vmem:[%s2 + $0x10] sm:$0xff]
  %v531 = vld [vmem:[%s2 + $0x18] sm:$0xff]
  %v532 = vadd.f32 %v524, 1e-05
  %v533 = vadd.f32 %v525, 1e-05
  %v534 = vadd.f32 %v526, 1e-05
  %v535 = vadd.f32 %v527, 1e-05
  %v536 = vrsqrt.pop %v532
  %v537 = vrsqrt.pop %v533
  %v538 = vrsqrt.pop %v534
  %v539 = vrsqrt.pop %v535
  %v540 = vmul.f32 %v528, %v536
  %v541 = vmul.f32 %v529, %v537
  %v542 = vmul.f32 %v530, %v538
  %v543 = vmul.f32 %v531, %v539
  %v544 = vld [vmem:[%s3] sm:$0xff]
  %v545 = vld [vmem:[%s3 + $0x8] sm:$0xff]
  %v546 = vld [vmem:[%s3 + $0x10] sm:$0xff]
  %v547 = vld [vmem:[%s3 + $0x18] sm:$0xff]
  %v548 = vmul.f32 %v480, %v540
  %v549 = vmul.f32 %v481, %v541
  %v550 = vmul.f32 %v482, %v542
  %v551 = vmul.f32 %v483, %v543
  %v552 = vsub.f32 %v544, %v548
  %v553 = vsub.f32 %v545, %v549
  %v554 = vsub.f32 %v546, %v550
  %v555 = vsub.f32 %v547, %v551
  %557 = vset.pattern.permute.xlu0 0
  %558 = vperm.xlu0 %557, %v540
  %v559 = vpop.permute.xlu0 %558
  %562 = vset.pattern.permute.xlu0 0
  %563 = vperm.xlu0 %562, %v541
  %v564 = vpop.permute.xlu0 %563
  %567 = vset.pattern.permute.xlu0 0
  %568 = vperm.xlu0 %567, %v542
  %v569 = vpop.permute.xlu0 %568
  %572 = vset.pattern.permute.xlu0 0
  %573 = vperm.xlu0 %572, %v543
  %v574 = vpop.permute.xlu0 %573
  %v576 = vmul.f32 %v397, %v559
  %v577 = vmul.f32 %v399, %v559
  %v578 = vmul.f32 %v450, %v559
  %v579 = vmul.f32 %v401, %v564
  %v580 = vmul.f32 %v403, %v564
  %v581 = vmul.f32 %v453, %v564
  %v582 = vmul.f32 %v407, %v569
  %v583 = vmul.f32 %v409, %v569
  %v584 = vmul.f32 %v458, %v569
  %v585 = vmul.f32 %v411, %v574
  %v586 = vmul.f32 %v413, %v574
  %v587 = vmul.f32 %v461, %v574
  %589 = vset.pattern.permute.xlu0 0
  %590 = vperm.xlu0 %589, %v552
  %v591 = vpop.permute.xlu0 %590
  %594 = vset.pattern.permute.xlu0 0
  %595 = vperm.xlu0 %594, %v553
  %v596 = vpop.permute.xlu0 %595
  %599 = vset.pattern.permute.xlu0 0
  %600 = vperm.xlu0 %599, %v554
  %v601 = vpop.permute.xlu0 %600
  %604 = vset.pattern.permute.xlu0 0
  %605 = vperm.xlu0 %604, %v555
  %v606 = vpop.permute.xlu0 %605
  %v608 = vadd.f32 %v576, %v591
  %v609 = vadd.f32 %v577, %v591
  %v610 = vadd.f32 %v578, %v591
  %v611 = vadd.f32 %v579, %v596
  %v612 = vadd.f32 %v580, %v596
  %v613 = vadd.f32 %v581, %v596
  %v614 = vadd.f32 %v582, %v601
  %v615 = vadd.f32 %v583, %v601
  %v616 = vadd.f32 %v584, %v601
  %v617 = vadd.f32 %v585, %v606
  %v618 = vadd.f32 %v586, %v606
  %v619 = vadd.f32 %v587, %v606
  %v620 = vmax.f32 %v608, 0.0
  %v621 = vmax.f32 %v609, 0.0
  %v622 = vmax.f32 %v610, 0.0
  %v623 = vmax.f32 %v611, 0.0
  %v624 = vmax.f32 %v612, 0.0
  %v625 = vmax.f32 %v613, 0.0
  %v626 = vmax.f32 %v614, 0.0
  %v627 = vmax.f32 %v615, 0.0
  %v628 = vmax.f32 %v616, 0.0
  %v629 = vmax.f32 %v617, 0.0
  %v630 = vmax.f32 %v618, 0.0
  %v631 = vmax.f32 %v619, 0.0
  %v632 = vpack.c.bf16 %v623, %v620
  %v633 = vpack.c.bf16 %v624, %v621
  %v634 = vpack.c.bf16 %v625, %v622
  %v635 = vpack.c.bf16 %v629, %v626
  %v636 = vpack.c.bf16 %v630, %v627
  %v637 = vpack.c.bf16 %v631, %v628
  %v644 = vunpack.c.l.b16 %v632
  %v645 = vunpack.c.l.b16 %v633
  %v646 = vunpack.c.l.b16 %v634
  %v647 = vunpack.c.h.b16 %v632
  %v648 = vunpack.c.h.b16 %v633
  %v649 = vunpack.c.h.b16 %v634
  %v650 = vunpack.c.l.b16 %v635
  %v651 = vunpack.c.l.b16 %v636
  %v652 = vunpack.c.l.b16 %v637
  %v653 = vunpack.c.h.b16 %v635
  %v654 = vunpack.c.h.b16 %v636
  %v655 = vunpack.c.h.b16 %v637
  %v656 = vpack.c.b16 %v645, %v644
  %v657 = vpack.c.b16 %v646, %v646
  %v658 = vpack.c.b16 %v648, %v647
  %v659 = vpack.c.b16 %v649, %v649
  %v660 = vpack.c.b16 %v651, %v650
  %v661 = vpack.c.b16 %v652, %v652
  %v662 = vpack.c.b16 %v654, %v653
  %v663 = vpack.c.b16 %v655, %v655
  %672 = vst [vmem:[%s4] sm:$0xff] %v656
  %673 = vst [vmem:[%s4 + $0x8] sm:$0xf] %v657
  %674 = vst [vmem:[%s4 + $0xc] sm:$0xff] %v658
  %675 = vst [vmem:[%s4 + $0x14] sm:$0xf] %v659
  %676 = vst [vmem:[%s4 + $0x18] sm:$0xff] %v660
  %677 = vst [vmem:[%s4 + $0x20] sm:$0xf] %v661
  %678 = vst [vmem:[%s4 + $0x24] sm:$0xff] %v662
  %679 = vst [vmem:[%s4 + $0x2c] sm:$0xf] %v663
  // Predicated region
  $region18: #{convnet_forward.4} parent=0 // pred_check
    _
  $region19: #{convnet_forward.4} parent=0 // pred_check_branch
    %681 = sbr.rel (0) target = $region21
  $region20: #{convnet_forward.4} parent=0 // pred_region
    _
  $region21: #{convnet_forward.4} parent=0 // pred_fallthru
    _
  // Predicated region
  $region22: #{convnet_forward.4} parent=0 // pred_check
    _
  $region23: #{convnet_forward.4} parent=0 // pred_check_branch
    %683 = sbr.rel (0) target = $region25
  $region24: #{convnet_forward.4} parent=0 // pred_region
    _
  $region25: #{convnet_forward.4} parent=0 // pred_fallthru
    _

// kernel: convnet_forward.5
$region0: #{convnet_forward.5}
  #allocation0 [shape = 'u32[]', space=smem, size = 0x4, offset = 0x4, fixed_abs, tag = 'smem constant byte address 0x4 - core index']
  #allocation1 [shape = 'u32[144,128]{1,0:T(1,128)}', space=vmem, size = 0x12000, scoped, tag = 'internal scratch']
  %s0 = inlined_call_operand.vmem [shape: bf16[64,512], index: 0, kind: input, shape index: {}]
  %s1 = inlined_call_operand.vmem [shape: bf16[512,128], index: 1, kind: input, shape index: {}]
  %s2 = inlined_call_operand.vmem [shape: f32[64,1], index: 2, kind: input, shape index: {}]
  %s3 = inlined_call_operand.vmem [shape: f32[64,1], index: 3, kind: input, shape index: {}]
  %s4 = inlined_call_operand.vmem [shape: bf16[64,128], index: 4, kind: output, shape index: {}]
  %s5 = sld [smem:[#allocation0]]
  $region26: #{convnet_forward.5} parent=0
    _
  %s7 = ssub.s32 1, %s5
  %s8 = scalar_select 0, %s7, %s5
  // Predicated region
  $region2: #{convnet_forward.5} parent=0 // pred_check
    _
  $region3: #{convnet_forward.5} parent=0 // pred_check_branch
    %10 = sbr.rel (0) target = $region5
  $region4: #{convnet_forward.5} parent=0 // pred_region
    _
  $region5: #{convnet_forward.5} parent=0 // pred_fallthru
    _
  // Predicated region
  $region6: #{convnet_forward.5} parent=0 // pred_check
    _
  $region7: #{convnet_forward.5} parent=0 // pred_check_branch
    %12 = sbr.rel (0) target = $region9
  $region8: #{convnet_forward.5} parent=0 // pred_region
    _
  $region9: #{convnet_forward.5} parent=0 // pred_fallthru
    _
  // Predicated region
  $region10: #{convnet_forward.5} parent=0 // pred_check
    _
  $region11: #{convnet_forward.5} parent=0 // pred_check_branch
    %14 = sbr.rel (0) target = $region13
  $region12: #{convnet_forward.5} parent=0 // pred_region
    _
  $region13: #{convnet_forward.5} parent=0 // pred_fallthru
    _
  // Predicated region
  $region14: #{convnet_forward.5} parent=0 // pred_check
    _
  $region15: #{convnet_forward.5} parent=0 // pred_check_branch
    %16 = sbr.rel (0) target = $region17
  $region16: #{convnet_forward.5} parent=0 // pred_region
    _
  $region17: #{convnet_forward.5} parent=0 // pred_fallthru
    _
  %v18 = vld [vmem:[%s0] sm:$0xff]
  %v19 = vld [vmem:[%s0 + $0x8] sm:$0xff]
  %v20 = vld [vmem:[%s0 + $0x10] sm:$0xff]
  %v21 = vld [vmem:[%s0 + $0x18] sm:$0xff]
  %v22 = vld [vmem:[%s0 + $0x20] sm:$0xff]
  %v23 = vld [vmem:[%s0 + $0x28] sm:$0xff]
  %v24 = vld [vmem:[%s0 + $0x30] sm:$0xff]
  %v25 = vld [vmem:[%s0 + $0x38] sm:$0xff]
  %v26 = vld [vmem:[%s0 + $0x40] sm:$0xff]
  %v27 = vld [vmem:[%s0 + $0x48] sm:$0xff]
  %v28 = vld [vmem:[%s0 + $0x50] sm:$0xff]
  %v29 = vld [vmem:[%s0 + $0x58] sm:$0xff]
  %v30 = vld [vmem:[%s0 + $0x60] sm:$0xff]
  %v31 = vld [vmem:[%s0 + $0x68] sm:$0xff]
  %v32 = vld [vmem:[%s0 + $0x70] sm:$0xff]
  %v33 = vld [vmem:[%s0 + $0x78] sm:$0xff]
  %v34 = vld [vmem:[%s1] sm:$0xf]
  %v35 = vld [vmem:[%s1 + $0x4] sm:$0xf]
  %v36 = vld [vmem:[%s1 + $0x8] sm:$0xf]
  %v37 = vld [vmem:[%s1 + $0xc] sm:$0xf]
  %v38 = vld [vmem:[%s1 + $0x10] sm:$0xf]
  %v39 = vld [vmem:[%s1 + $0x14] sm:$0xf]
  %v40 = vld [vmem:[%s1 + $0x18] sm:$0xf]
  %v41 = vld [vmem:[%s1 + $0x1c] sm:$0xf]
  %v42 = vld [vmem:[%s1 + $0x20] sm:$0xf]
  %v43 = vld [vmem:[%s1 + $0x24] sm:$0xf]
  %v44 = vld [vmem:[%s1 + $0x28] sm:$0xf]
  %v45 = vld [vmem:[%s1 + $0x2c] sm:$0xf]
  %v46 = vld [vmem:[%s1 + $0x30] sm:$0xf]
  %v47 = vld [vmem:[%s1 + $0x34] sm:$0xf]
  %v48 = vld [vmem:[%s1 + $0x38] sm:$0xf]
  %v49 = vld [vmem:[%s1 + $0x3c] sm:$0xf]
  %v50 = vld [vmem:[%s1 + $0x40] sm:$0xf]
  %v51 = vld [vmem:[%s1 + $0x44] sm:$0xf]
  %v52 = vld [vmem:[%s1 + $0x48] sm:$0xf]
  %v53 = vld [vmem:[%s1 + $0x4c] sm:$0xf]
  %v54 = vld [vmem:[%s1 + $0x50] sm:$0xf]
  %v55 = vld [vmem:[%s1 + $0x54] sm:$0xf]
  %v56 = vld [vmem:[%s1 + $0x58] sm:$0xf]
  %v57 = vld [vmem:[%s1 + $0x5c] sm:$0xf]
  %v58 = vld [vmem:[%s1 + $0x60] sm:$0xf]
  %v59 = vld [vmem:[%s1 + $0x64] sm:$0xf]
  %v60 = vld [vmem:[%s1 + $0x68] sm:$0xf]
  %v61 = vld [vmem:[%s1 + $0x6c] sm:$0xf]
  %v62 = vld [vmem:[%s1 + $0x70] sm:$0xf]
  %v63 = vld [vmem:[%s1 + $0x74] sm:$0xf]
  %v64 = vld [vmem:[%s1 + $0x78] sm:$0xf]
  %v65 = vld [vmem:[%s1 + $0x7c] sm:$0xf]
  %v66 = vld [vmem:[%s1 + $0x80] sm:$0xf]
  %v67 = vld [vmem:[%s1 + $0x84] sm:$0xf]
  %v68 = vld [vmem:[%s1 + $0x88] sm:$0xf]
  %v69 = vld [vmem:[%s1 + $0x8c] sm:$0xf]
  %v70 = vld [vmem:[%s1 + $0x90] sm:$0xf]
  %v71 = vld [vmem:[%s1 + $0x94] sm:$0xf]
  %v72 = vld [vmem:[%s1 + $0x98] sm:$0xf]
  %v73 = vld [vmem:[%s1 + $0x9c] sm:$0xf]
  %v74 = vld [vmem:[%s1 + $0xa0] sm:$0xf]
  %v75 = vld [vmem:[%s1 + $0xa4] sm:$0xf]
  %v76 = vld [vmem:[%s1 + $0xa8] sm:$0xf]
  %v77 = vld [vmem:[%s1 + $0xac] sm:$0xf]
  %v78 = vld [vmem:[%s1 + $0xb0] sm:$0xf]
  %v79 = vld [vmem:[%s1 + $0xb4] sm:$0xf]
  %v80 = vld [vmem:[%s1 + $0xb8] sm:$0xf]
  %v81 = vld [vmem:[%s1 + $0xbc] sm:$0xf]
  %v82 = vld [vmem:[%s1 + $0xc0] sm:$0xf]
  %v83 = vld [vmem:[%s1 + $0xc4] sm:$0xf]
  %v84 = vld [vmem:[%s1 + $0xc8] sm:$0xf]
  %v85 = vld [vmem:[%s1 + $0xcc] sm:$0xf]
  %v86 = vld [vmem:[%s1 + $0xd0] sm:$0xf]
  %v87 = vld [vmem:[%s1 + $0xd4] sm:$0xf]
  %v88 = vld [vmem:[%s1 + $0xd8] sm:$0xf]
  %v89 = vld [vmem:[%s1 + $0xdc] sm:$0xf]
  %v90 = vld [vmem:[%s1 + $0xe0] sm:$0xf]
  %v91 = vld [vmem:[%s1 + $0xe4] sm:$0xf]
  %v92 = vld [vmem:[%s1 + $0xe8] sm:$0xf]
  %v93 = vld [vmem:[%s1 + $0xec] sm:$0xf]
  %v94 = vld [vmem:[%s1 + $0xf0] sm:$0xf]
  %v95 = vld [vmem:[%s1 + $0xf4] sm:$0xf]
  %v96 = vld [vmem:[%s1 + $0xf8] sm:$0xf]
  %v97 = vld [vmem:[%s1 + $0xfc] sm:$0xf]
  %v114 = vunpack.c.l.b16 %v18
  %v115 = vunpack.c.h.b16 %v18
  %v116 = vunpack.c.l.b16 %v19
  %v117 = vunpack.c.h.b16 %v19
  %v118 = vunpack.c.l.b16 %v20
  %v119 = vunpack.c.h.b16 %v20
  %v120 = vunpack.c.l.b16 %v21
  %v121 = vunpack.c.h.b16 %v21
  %v122 = vunpack.c.l.b16 %v22
  %v123 = vunpack.c.h.b16 %v22
  %v124 = vunpack.c.l.b16 %v23
  %v125 = vunpack.c.h.b16 %v23
  %v126 = vunpack.c.l.b16 %v24
  %v127 = vunpack.c.h.b16 %v24
  %v128 = vunpack.c.l.b16 %v25
  %v129 = vunpack.c.h.b16 %v25
  %v130 = vunpack.c.l.b16 %v26
  %v131 = vunpack.c.h.b16 %v26
  %v132 = vunpack.c.l.b16 %v27
  %v133 = vunpack.c.h.b16 %v27
  %v134 = vunpack.c.l.b16 %v28
  %v135 = vunpack.c.h.b16 %v28
  %v136 = vunpack.c.l.b16 %v29
  %v137 = vunpack.c.h.b16 %v29
  %v138 = vunpack.c.l.b16 %v30
  %v139 = vunpack.c.h.b16 %v30
  %v140 = vunpack.c.l.b16 %v31
  %v141 = vunpack.c.h.b16 %v31
  %v142 = vunpack.c.l.b16 %v32
  %v143 = vunpack.c.h.b16 %v32
  %v144 = vunpack.c.l.b16 %v33
  %v145 = vunpack.c.h.b16 %v33
  %v146 = vpack.c.b16 %v118, %v114
  %v147 = vpack.c.b16 %v119, %v115
  %v148 = vpack.c.b16 %v120, %v116
  %v149 = vpack.c.b16 %v121, %v117
  %v150 = vpack.c.b16 %v126, %v122
  %v151 = vpack.c.b16 %v127, %v123
  %v152 = vpack.c.b16 %v128, %v124
  %v153 = vpack.c.b16 %v129, %v125
  %v154 = vpack.c.b16 %v134, %v130
  %v155 = vpack.c.b16 %v135, %v131
  %v156 = vpack.c.b16 %v136, %v132
  %v157 = vpack.c.b16 %v137, %v133
  %v158 = vpack.c.b16 %v142, %v138
  %v159 = vpack.c.b16 %v143, %v139
  %v160 = vpack.c.b16 %v144, %v140
  %v161 = vpack.c.b16 %v145, %v141
  %v242 = vunpack.c.l.b16 %v34
  %v243 = vunpack.c.l.b16 %v35
  %v244 = vunpack.c.l.b16 %v36
  %v245 = vunpack.c.l.b16 %v37
  %v246 = vunpack.c.l.b16 %v38
  %v247 = vunpack.c.l.b16 %v39
  %v248 = vunpack.c.l.b16 %v40
  %v249 = vunpack.c.l.b16 %v41
  %v250 = vunpack.c.l.b16 %v42
  %v251 = vunpack.c.l.b16 %v43
  %v252 = vunpack.c.l.b16 %v44
  %v253 = vunpack.c.l.b16 %v45
  %v254 = vunpack.c.l.b16 %v46
  %v255 = vunpack.c.l.b16 %v47
  %v256 = vunpack.c.l.b16 %v48
  %v257 = vunpack.c.l.b16 %v49
  %v258 = vunpack.c.l.b16 %v50
  %v259 = vunpack.c.l.b16 %v51
  %v260 = vunpack.c.l.b16 %v52
  %v261 = vunpack.c.l.b16 %v53
  %v262 = vunpack.c.l.b16 %v54
  %v263 = vunpack.c.l.b16 %v55
  %v264 = vunpack.c.l.b16 %v56
  %v265 = vunpack.c.l.b16 %v57
  %v266 = vunpack.c.l.b16 %v58
  %v267 = vunpack.c.l.b16 %v59
  %v268 = vunpack.c.l.b16 %v60
  %v269 = vunpack.c.l.b16 %v61
  %v270 = vunpack.c.l.b16 %v62
  %v271 = vunpack.c.l.b16 %v63
  %v272 = vunpack.c.l.b16 %v64
  %v273 = vunpack.c.l.b16 %v65
  %v274 = vunpack.c.l.b16 %v66
  %v275 = vunpack.c.l.b16 %v67
  %v276 = vunpack.c.l.b16 %v68
  %v277 = vunpack.c.l.b16 %v69
  %v278 = vunpack.c.l.b16 %v70
  %v279 = vunpack.c.l.b16 %v71
  %v280 = vunpack.c.l.b16 %v72
  %v281 = vunpack.c.l.b16 %v73
  %v282 = vunpack.c.l.b16 %v74
  %v283 = vunpack.c.l.b16 %v75
  %v284 = vunpack.c.l.b16 %v76
  %v285 = vunpack.c.l.b16 %v77
  %v286 = vunpack.c.l.b16 %v78
  %v287 = vunpack.c.l.b16 %v79
  %v288 = vunpack.c.l.b16 %v80
  %v289 = vunpack.c.l.b16 %v81
  %v290 = vunpack.c.l.b16 %v82
  %v291 = vunpack.c.l.b16 %v83
  %v292 = vunpack.c.l.b16 %v84
  %v293 = vunpack.c.l.b16 %v85
  %v294 = vunpack.c.l.b16 %v86
  %v295 = vunpack.c.l.b16 %v87
  %v296 = vunpack.c.l.b16 %v88
  %v297 = vunpack.c.l.b16 %v89
  %v298 = vunpack.c.l.b16 %v90
  %v299 = vunpack.c.l.b16 %v91
  %v300 = vunpack.c.l.b16 %v92
  %v301 = vunpack.c.l.b16 %v93
  %v302 = vunpack.c.l.b16 %v94
  %v303 = vunpack.c.l.b16 %v95
  %v304 = vunpack.c.l.b16 %v96
  %v305 = vunpack.c.l.b16 %v97
  %v306 = vpack.c.b16 %v243, %v242
  %v307 = vpack.c.b16 %v245, %v244
  %v308 = vpack.c.b16 %v247, %v246
  %v309 = vpack.c.b16 %v249, %v248
  %v310 = vpack.c.b16 %v251, %v250
  %v311 = vpack.c.b16 %v253, %v252
  %v312 = vpack.c.b16 %v255, %v254
  %v313 = vpack.c.b16 %v257, %v256
  %v314 = vpack.c.b16 %v259, %v258
  %v315 = vpack.c.b16 %v261, %v260
  %v316 = vpack.c.b16 %v263, %v262
  %v317 = vpack.c.b16 %v265, %v264
  %v318 = vpack.c.b16 %v267, %v266
  %v319 = vpack.c.b16 %v269, %v268
  %v320 = vpack.c.b16 %v271, %v270
  %v321 = vpack.c.b16 %v273, %v272
  %v322 = vpack.c.b16 %v275, %v274
  %v323 = vpack.c.b16 %v277, %v276
  %v324 = vpack.c.b16 %v279, %v278
  %v325 = vpack.c.b16 %v281, %v280
  %v326 = vpack.c.b16 %v283, %v282
  %v327 = vpack.c.b16 %v285, %v284
  %v328 = vpack.c.b16 %v287, %v286
  %v329 = vpack.c.b16 %v289, %v288
  %v330 = vpack.c.b16 %v291, %v290
  %v331 = vpack.c.b16 %v293, %v292
  %v332 = vpack.c.b16 %v295, %v294
  %v333 = vpack.c.b16 %v297, %v296
  %v334 = vpack.c.b16 %v299, %v298
  %v335 = vpack.c.b16 %v301, %v300
  %v336 = vpack.c.b16 %v303, %v302
  %v337 = vpack.c.b16 %v305, %v304
  %370 = vmatprep.subr.bf16.mxu0 0
  %371 = vmatpush1.bf16.msra.mxu0 %v306
  %372 = vmatprep.subr.bf16.mxu0 0
  %373 = vmatpush1.bf16.msra.mxu0 %v307
  %374 = vmatprep.subr.bf16.mxu0 0
  %375 = vmatpush1.bf16.msra.mxu0 %v308
  %376 = vmatprep.subr.bf16.mxu0 0
  %377 = vmatpush1.bf16.msra.mxu0 %v309
  %378 = vmatprep.subr.bf16.mxu0 0
  %379 = vmatpush1.bf16.msra.mxu0 %v310
  %380 = vmatprep.subr.bf16.mxu0 0
  %381 = vmatpush1.bf16.msra.mxu0 %v311
  %382 = vmatprep.subr.bf16.mxu0 0
  %383 = vmatpush1.bf16.msra.mxu0 %v312
  %384 = vmatprep.subr.bf16.mxu0 0
  %385 = vmatpush1.bf16.msra.mxu0 %v313
  %386 = vmatprep.subr.bf16.mxu0 0
  %387 = vmatpush1.bf16.msra.mxu0 %v314
  %388 = vmatprep.subr.bf16.mxu0 0
  %389 = vmatpush1.bf16.msra.mxu0 %v315
  %390 = vmatprep.subr.bf16.mxu0 0
  %391 = vmatpush1.bf16.msra.mxu0 %v316
  %392 = vmatprep.subr.bf16.mxu0 0
  %393 = vmatpush1.bf16.msra.mxu0 %v317
  %394 = vmatprep.subr.bf16.mxu0 0
  %395 = vmatpush1.bf16.msra.mxu0 %v318
  %396 = vmatprep.subr.bf16.mxu0 0
  %397 = vmatpush1.bf16.msra.mxu0 %v319
  %398 = vmatprep.subr.bf16.mxu0 0
  %399 = vmatpush1.bf16.msra.mxu0 %v320
  %400 = vmatprep.subr.bf16.mxu0 0
  %401 = vmatpush1.bf16.msra.mxu0 %v321
  %402 = vmatprep.mubr.bf16.mxu0 %v147
  %403 = vmatmul.mubr.bf16.gmra.mrb[0].mxu0 %v146
  %v404 = vpop.f32.mrb[0].mxu0
  %v405 = vadd.f32 0.0, %v404
  %v406 = vpop.f32.mrb[0].mxu0
  %v407 = vpop.f32.mrb[0].mxu0
  %v408 = vadd.f32 0.0, %v407
  %v409 = vpop.f32.mrb[0].mxu0
  %410 = vmatprep.mubr.bf16.mxu0 %v151
  %411 = vmatmul.mubr.bf16.gmra.mrb[0].mxu0 %v150
  %v412 = vpop.f32.mrb[0].mxu0
  %v413 = vadd.f32 0.0, %v412
  %v414 = vpop.f32.mrb[0].mxu0
  %v415 = vpop.f32.mrb[0].mxu0
  %v416 = vadd.f32 0.0, %v415
  %v417 = vpop.f32.mrb[0].mxu0
  %418 = vmatprep.mubr.bf16.mxu0 %v155
  %419 = vmatmul.mubr.bf16.gmra.mrb[0].mxu0 %v154
  %v420 = vpop.f32.mrb[0].mxu0
  %v421 = vadd.f32 0.0, %v420
  %v422 = vpop.f32.mrb[0].mxu0
  %v423 = vpop.f32.mrb[0].mxu0
  %v424 = vadd.f32 0.0, %v423
  %v425 = vpop.f32.mrb[0].mxu0
  %426 = vmatprep.mubr.bf16.mxu0 %v159
  %427 = vmatmul.mubr.bf16.gmra.mrb[0].mxu0 %v158
  %v428 = vpop.f32.mrb[0].mxu0
  %v429 = vadd.f32 0.0, %v428
  %v430 = vpop.f32.mrb[0].mxu0
  %v431 = vpop.f32.mrb[0].mxu0
  %v432 = vadd.f32 0.0, %v431
  %v433 = vpop.f32.mrb[0].mxu0
  %434 = vdwg.mxu0
  %435 = vmatprep.subr.bf16.mxu0 0
  %436 = vmatpush1.bf16.msra.mxu0 %v322
  %437 = vmatprep.subr.bf16.mxu0 0
  %438 = vmatpush1.bf16.msra.mxu0 %v323
  %439 = vmatprep.subr.bf16.mxu0 0
  %440 = vmatpush1.bf16.msra.mxu0 %v324
  %441 = vmatprep.subr.bf16.mxu0 0
  %442 = vmatpush1.bf16.msra.mxu0 %v325
  %443 = vmatprep.subr.bf16.mxu0 0
  %444 = vmatpush1.bf16.msra.mxu0 %v326
  %445 = vmatprep.subr.bf16.mxu0 0
  %446 = vmatpush1.bf16.msra.mxu0 %v327
  %447 = vmatprep.subr.bf16.mxu0 0
  %448 = vmatpush1.bf16.msra.mxu0 %v328
  %449 = vmatprep.subr.bf16.mxu0 0
  %450 = vmatpush1.bf16.msra.mxu0 %v329
  %451 = vmatprep.subr.bf16.mxu0 0
  %452 = vmatpush1.bf16.msra.mxu0 %v330
  %453 = vmatprep.subr.bf16.mxu0 0
  %454 = vmatpush1.bf16.msra.mxu0 %v331
  %455 = vmatprep.subr.bf16.mxu0 0
  %456 = vmatpush1.bf16.msra.mxu0 %v332
  %457 = vmatprep.subr.bf16.mxu0 0
  %458 = vmatpush1.bf16.msra.mxu0 %v333
  %459 = vmatprep.subr.bf16.mxu0 0
  %460 = vmatpush1.bf16.msra.mxu0 %v334
  %461 = vmatprep.subr.bf16.mxu0 0
  %462 = vmatpush1.bf16.msra.mxu0 %v335
  %463 = vmatprep.subr.bf16.mxu0 0
  %464 = vmatpush1.bf16.msra.mxu0 %v336
  %465 = vmatprep.subr.bf16.mxu0 0
  %466 = vmatpush1.bf16.msra.mxu0 %v337
  %467 = vmatprep.mubr.bf16.mxu0 %v149
  %468 = vmatmul.mubr.bf16.gmra.mrb[0].mxu0 %v148
  %v469 = vpop.f32.mrb[0].mxu0
  %v470 = vadd.f32 %v405, %v469
  %v471 = vpop.f32.mrb[0].mxu0
  %v472 = vpop.f32.mrb[0].mxu0
  %v473 = vadd.f32 %v408, %v472
  %v474 = vpop.f32.mrb[0].mxu0
  %475 = vmatprep.mubr.bf16.mxu0 %v153
  %476 = vmatmul.mubr.bf16.gmra.mrb[0].mxu0 %v152
  %v477 = vpop.f32.mrb[0].mxu0
  %v478 = vadd.f32 %v413, %v477
  %v479 = vpop.f32.mrb[0].mxu0
  %v480 = vpop.f32.mrb[0].mxu0
  %v481 = vadd.f32 %v416, %v480
  %v482 = vpop.f32.mrb[0].mxu0
  %483 = vmatprep.mubr.bf16.mxu0 %v157
  %484 = vmatmul.mubr.bf16.gmra.mrb[0].mxu0 %v156
  %v485 = vpop.f32.mrb[0].mxu0
  %v486 = vadd.f32 %v421, %v485
  %v487 = vpop.f32.mrb[0].mxu0
  %v488 = vpop.f32.mrb[0].mxu0
  %v489 = vadd.f32 %v424, %v488
  %v490 = vpop.f32.mrb[0].mxu0
  %491 = vmatprep.mubr.bf16.mxu0 %v161
  %492 = vmatmul.mubr.bf16.gmra.mrb[0].mxu0 %v160
  %v493 = vpop.f32.mrb[0].mxu0
  %v494 = vadd.f32 %v429, %v493
  %v495 = vpop.f32.mrb[0].mxu0
  %v496 = vpop.f32.mrb[0].mxu0
  %v497 = vadd.f32 %v432, %v496
  %v498 = vpop.f32.mrb[0].mxu0
  %499 = vdwg.mxu0
  %500 = vadd.xlane.f32.xlu0 %v470
  %v501 = vpop.xlane.xlu0 %500
  %502 = vadd.xlane.f32.xlu0 %v473
  %v503 = vpop.xlane.xlu0 %502
  %504 = vadd.xlane.f32.xlu0 %v478
  %v505 = vpop.xlane.xlu0 %504
  %506 = vadd.xlane.f32.xlu0 %v481
  %v507 = vpop.xlane.xlu0 %506
  %508 = vadd.xlane.f32.xlu0 %v486
  %v509 = vpop.xlane.xlu0 %508
  %510 = vadd.xlane.f32.xlu0 %v489
  %v511 = vpop.xlane.xlu0 %510
  %512 = vadd.xlane.f32.xlu0 %v494
  %v513 = vpop.xlane.xlu0 %512
  %514 = vadd.xlane.f32.xlu0 %v497
  %v515 = vpop.xlane.xlu0 %514
  %v516 = vmul.f32 %v501, 0.02
  %v517 = vmul.f32 %v503, 0.02
  %v518 = vmul.f32 %v505, 0.02
  %v519 = vmul.f32 %v507, 0.02
  %v520 = vmul.f32 %v509, 0.02
  %v521 = vmul.f32 %v511, 0.02
  %v522 = vmul.f32 %v513, 0.02
  %v523 = vmul.f32 %v515, 0.02
  %v524 = vmul.f32 %v470, %v470
  %v525 = vmul.f32 %v473, %v473
  %v526 = vmul.f32 %v478, %v478
  %v527 = vmul.f32 %v481, %v481
  %v528 = vmul.f32 %v486, %v486
  %v529 = vmul.f32 %v489, %v489
  %v530 = vmul.f32 %v494, %v494
  %v531 = vmul.f32 %v497, %v497
  %532 = vadd.xlane.f32.xlu0 %v524
  %v533 = vpop.xlane.xlu0 %532
  %534 = vadd.xlane.f32.xlu0 %v525
  %v535 = vpop.xlane.xlu0 %534
  %536 = vadd.xlane.f32.xlu0 %v526
  %v537 = vpop.xlane.xlu0 %536
  %538 = vadd.xlane.f32.xlu0 %v527
  %v539 = vpop.xlane.xlu0 %538
  %540 = vadd.xlane.f32.xlu0 %v528
  %v541 = vpop.xlane.xlu0 %540
  %542 = vadd.xlane.f32.xlu0 %v529
  %v543 = vpop.xlane.xlu0 %542
  %544 = vadd.xlane.f32.xlu0 %v530
  %v545 = vpop.xlane.xlu0 %544
  %546 = vadd.xlane.f32.xlu0 %v531
  %v547 = vpop.xlane.xlu0 %546
  %v548 = vmul.f32 %v533, 0.02
  %v549 = vmul.f32 %v535, 0.02
  %v550 = vmul.f32 %v537, 0.02
  %v551 = vmul.f32 %v539, 0.02
  %v552 = vmul.f32 %v541, 0.02
  %v553 = vmul.f32 %v543, 0.02
  %v554 = vmul.f32 %v545, 0.02
  %v555 = vmul.f32 %v547, 0.02
  %v556 = vmul.f32 %v516, %v516
  %v557 = vmul.f32 %v517, %v517
  %v558 = vmul.f32 %v518, %v518
  %v559 = vmul.f32 %v519, %v519
  %v560 = vmul.f32 %v520, %v520
  %v561 = vmul.f32 %v521, %v521
  %v562 = vmul.f32 %v522, %v522
  %v563 = vmul.f32 %v523, %v523
  %v564 = vsub.f32 %v548, %v556
  %v565 = vsub.f32 %v549, %v557
  %v566 = vsub.f32 %v550, %v558
  %v567 = vsub.f32 %v551, %v559
  %v568 = vsub.f32 %v552, %v560
  %v569 = vsub.f32 %v553, %v561
  %v570 = vsub.f32 %v554, %v562
  %v571 = vsub.f32 %v555, %v563
  %v572 = vmax.f32 %v564, 0.0
  %v573 = vmax.f32 %v565, 0.0
  %v574 = vmax.f32 %v566, 0.0
  %v575 = vmax.f32 %v567, 0.0
  %v576 = vmax.f32 %v568, 0.0
  %v577 = vmax.f32 %v569, 0.0
  %v578 = vmax.f32 %v570, 0.0
  %v579 = vmax.f32 %v571, 0.0
  %v580 = vld [vmem:[%s2] sm:$0xff]
  %v581 = vld [vmem:[%s2 + $0x8] sm:$0xff]
  %v582 = vld [vmem:[%s2 + $0x10] sm:$0xff]
  %v583 = vld [vmem:[%s2 + $0x18] sm:$0xff]
  %v584 = vld [vmem:[%s2 + $0x20] sm:$0xff]
  %v585 = vld [vmem:[%s2 + $0x28] sm:$0xff]
  %v586 = vld [vmem:[%s2 + $0x30] sm:$0xff]
  %v587 = vld [vmem:[%s2 + $0x38] sm:$0xff]
  %v588 = vadd.f32 %v572, 1e-05
  %v589 = vadd.f32 %v573, 1e-05
  %v590 = vadd.f32 %v574, 1e-05
  %v591 = vadd.f32 %v575, 1e-05
  %v592 = vadd.f32 %v576, 1e-05
  %v593 = vadd.f32 %v577, 1e-05
  %v594 = vadd.f32 %v578, 1e-05
  %v595 = vadd.f32 %v579, 1e-05
  %v596 = vrsqrt.pop %v588
  %v597 = vrsqrt.pop %v589
  %v598 = vrsqrt.pop %v590
  %v599 = vrsqrt.pop %v591
  %v600 = vrsqrt.pop %v592
  %v601 = vrsqrt.pop %v593
  %v602 = vrsqrt.pop %v594
  %v603 = vrsqrt.pop %v595
  %v604 = vmul.f32 %v580, %v596
  %v605 = vmul.f32 %v581, %v597
  %v606 = vmul.f32 %v582, %v598
  %v607 = vmul.f32 %v583, %v599
  %v608 = vmul.f32 %v584, %v600
  %v609 = vmul.f32 %v585, %v601
  %v610 = vmul.f32 %v586, %v602
  %v611 = vmul.f32 %v587, %v603
  %v612 = vld [vmem:[%s3] sm:$0xff]
  %v613 = vld [vmem:[%s3 + $0x8] sm:$0xff]
  %v614 = vld [vmem:[%s3 + $0x10] sm:$0xff]
  %v615 = vld [vmem:[%s3 + $0x18] sm:$0xff]
  %v616 = vld [vmem:[%s3 + $0x20] sm:$0xff]
  %v617 = vld [vmem:[%s3 + $0x28] sm:$0xff]
  %v618 = vld [vmem:[%s3 + $0x30] sm:$0xff]
  %v619 = vld [vmem:[%s3 + $0x38] sm:$0xff]
  %v620 = vmul.f32 %v516, %v604
  %v621 = vmul.f32 %v517, %v605
  %v622 = vmul.f32 %v518, %v606
  %v623 = vmul.f32 %v519, %v607
  %v624 = vmul.f32 %v520, %v608
  %v625 = vmul.f32 %v521, %v609
  %v626 = vmul.f32 %v522, %v610
  %v627 = vmul.f32 %v523, %v611
  %v628 = vsub.f32 %v612, %v620
  %v629 = vsub.f32 %v613, %v621
  %v630 = vsub.f32 %v614, %v622
  %v631 = vsub.f32 %v615, %v623
  %v632 = vsub.f32 %v616, %v624
  %v633 = vsub.f32 %v617, %v625
  %v634 = vsub.f32 %v618, %v626
  %v635 = vsub.f32 %v619, %v627
  %637 = vset.pattern.permute.xlu0 0
  %638 = vperm.xlu0 %637, %v604
  %v639 = vpop.permute.xlu0 %638
  %642 = vset.pattern.permute.xlu0 0
  %643 = vperm.xlu0 %642, %v605
  %v644 = vpop.permute.xlu0 %643
  %647 = vset.pattern.permute.xlu0 0
  %648 = vperm.xlu0 %647, %v606
  %v649 = vpop.permute.xlu0 %648
  %652 = vset.pattern.permute.xlu0 0
  %653 = vperm.xlu0 %652, %v607
  %v654 = vpop.permute.xlu0 %653
  %657 = vset.pattern.permute.xlu0 0
  %658 = vperm.xlu0 %657, %v608
  %v659 = vpop.permute.xlu0 %658
  %662 = vset.pattern.permute.xlu0 0
  %663 = vperm.xlu0 %662, %v609
  %v664 = vpop.permute.xlu0 %663
  %667 = vset.pattern.permute.xlu0 0
  %668 = vperm.xlu0 %667, %v610
  %v669 = vpop.permute.xlu0 %668
  %672 = vset.pattern.permute.xlu0 0
  %673 = vperm.xlu0 %672, %v611
  %v674 = vpop.permute.xlu0 %673
  %v676 = vmul.f32 %v470, %v639
  %v677 = vmul.f32 %v473, %v644
  %v678 = vmul.f32 %v478, %v649
  %v679 = vmul.f32 %v481, %v654
  %v680 = vmul.f32 %v486, %v659
  %v681 = vmul.f32 %v489, %v664
  %v682 = vmul.f32 %v494, %v669
  %v683 = vmul.f32 %v497, %v674
  %685 = vset.pattern.permute.xlu0 0
  %686 = vperm.xlu0 %685, %v628
  %v687 = vpop.permute.xlu0 %686
  %690 = vset.pattern.permute.xlu0 0
  %691 = vperm.xlu0 %690, %v629
  %v692 = vpop.permute.xlu0 %691
  %695 = vset.pattern.permute.xlu0 0
  %696 = vperm.xlu0 %695, %v630
  %v697 = vpop.permute.xlu0 %696
  %700 = vset.pattern.permute.xlu0 0
  %701 = vperm.xlu0 %700, %v631
  %v702 = vpop.permute.xlu0 %701
  %705 = vset.pattern.permute.xlu0 0
  %706 = vperm.xlu0 %705, %v632
  %v707 = vpop.permute.xlu0 %706
  %710 = vset.pattern.permute.xlu0 0
  %711 = vperm.xlu0 %710, %v633
  %v712 = vpop.permute.xlu0 %711
  %715 = vset.pattern.permute.xlu0 0
  %716 = vperm.xlu0 %715, %v634
  %v717 = vpop.permute.xlu0 %716
  %720 = vset.pattern.permute.xlu0 0
  %721 = vperm.xlu0 %720, %v635
  %v722 = vpop.permute.xlu0 %721
  %v724 = vadd.f32 %v676, %v687
  %v725 = vadd.f32 %v677, %v692
  %v726 = vadd.f32 %v678, %v697
  %v727 = vadd.f32 %v679, %v702
  %v728 = vadd.f32 %v680, %v707
  %v729 = vadd.f32 %v681, %v712
  %v730 = vadd.f32 %v682, %v717
  %v731 = vadd.f32 %v683, %v722
  %v732 = vmax.f32 %v724, 0.0
  %v733 = vmax.f32 %v725, 0.0
  %v734 = vmax.f32 %v726, 0.0
  %v735 = vmax.f32 %v727, 0.0
  %v736 = vmax.f32 %v728, 0.0
  %v737 = vmax.f32 %v729, 0.0
  %v738 = vmax.f32 %v730, 0.0
  %v739 = vmax.f32 %v731, 0.0
  %v740 = vpack.c.bf16 %v733, %v732
  %v741 = vpack.c.bf16 %v735, %v734
  %v742 = vpack.c.bf16 %v737, %v736
  %v743 = vpack.c.bf16 %v739, %v738
  %v748 = vunpack.c.l.b16 %v740
  %v749 = vunpack.c.h.b16 %v740
  %v750 = vunpack.c.l.b16 %v741
  %v751 = vunpack.c.h.b16 %v741
  %v752 = vunpack.c.l.b16 %v742
  %v753 = vunpack.c.h.b16 %v742
  %v754 = vunpack.c.l.b16 %v743
  %v755 = vunpack.c.h.b16 %v743
  %v756 = vpack.c.b16 %v748, %v748
  %v757 = vpack.c.b16 %v749, %v749
  %v758 = vpack.c.b16 %v750, %v750
  %v759 = vpack.c.b16 %v751, %v751
  %v760 = vpack.c.b16 %v752, %v752
  %v761 = vpack.c.b16 %v753, %v753
  %v762 = vpack.c.b16 %v754, %v754
  %v763 = vpack.c.b16 %v755, %v755
  %772 = vst [vmem:[%s4] sm:$0xf] %v756
  %773 = vst [vmem:[%s4 + $0x4] sm:$0xf] %v757
  %774 = vst [vmem:[%s4 + $0x8] sm:$0xf] %v758
  %775 = vst [vmem:[%s4 + $0xc] sm:$0xf] %v759
  %776 = vst [vmem:[%s4 + $0x10] sm:$0xf] %v760
  %777 = vst [vmem:[%s4 + $0x14] sm:$0xf] %v761
  %778 = vst [vmem:[%s4 + $0x18] sm:$0xf] %v762
  %779 = vst [vmem:[%s4 + $0x1c] sm:$0xf] %v763
  // Predicated region
  $region18: #{convnet_forward.5} parent=0 // pred_check
    _
  $region19: #{convnet_forward.5} parent=0 // pred_check_branch
    %781 = sbr.rel (0) target = $region21
  $region20: #{convnet_forward.5} parent=0 // pred_region
    _
  $region21: #{convnet_forward.5} parent=0 // pred_fallthru
    _
  // Predicated region
  $region22: #{convnet_forward.5} parent=0 // pred_check
    _
  $region23: #{convnet_forward.5} parent=0 // pred_check_branch
    %783 = sbr.rel (0) target = $region25
  $region24: #{convnet_forward.5} parent=0 // pred_region
    _
  $region25: #{convnet_forward.5} parent=0 // pred_fallthru
    _

// kernel: convnet_forward.6
$region0: #{convnet_forward.6}
  #allocation0 [shape = 'u32[]', space=smem, size = 0x4, offset = 0x4, fixed_abs, tag = 'smem constant byte address 0x4 - core index']
  #allocation1 [shape = 'u32[144,128]{1,0:T(1,128)}', space=vmem, size = 0x12000, scoped, tag = 'internal scratch']
  %s0 = inlined_call_operand.vmem [shape: bf16[64,640], index: 0, kind: input, shape index: {}]
  %s1 = inlined_call_operand.vmem [shape: bf16[640,128], index: 1, kind: input, shape index: {}]
  %s2 = inlined_call_operand.vmem [shape: f32[64,1], index: 2, kind: input, shape index: {}]
  %s3 = inlined_call_operand.vmem [shape: f32[64,1], index: 3, kind: input, shape index: {}]
  %s4 = inlined_call_operand.vmem [shape: bf16[64,128], index: 4, kind: output, shape index: {}]
  %s5 = sld [smem:[#allocation0]]
  $region26: #{convnet_forward.6} parent=0
    _
  %s7 = ssub.s32 1, %s5
  %s8 = scalar_select 0, %s7, %s5
  // Predicated region
  $region2: #{convnet_forward.6} parent=0 // pred_check
    _
  $region3: #{convnet_forward.6} parent=0 // pred_check_branch
    %10 = sbr.rel (0) target = $region5
  $region4: #{convnet_forward.6} parent=0 // pred_region
    _
  $region5: #{convnet_forward.6} parent=0 // pred_fallthru
    _
  // Predicated region
  $region6: #{convnet_forward.6} parent=0 // pred_check
    _
  $region7: #{convnet_forward.6} parent=0 // pred_check_branch
    %12 = sbr.rel (0) target = $region9
  $region8: #{convnet_forward.6} parent=0 // pred_region
    _
  $region9: #{convnet_forward.6} parent=0 // pred_fallthru
    _
  // Predicated region
  $region10: #{convnet_forward.6} parent=0 // pred_check
    _
  $region11: #{convnet_forward.6} parent=0 // pred_check_branch
    %14 = sbr.rel (0) target = $region13
  $region12: #{convnet_forward.6} parent=0 // pred_region
    _
  $region13: #{convnet_forward.6} parent=0 // pred_fallthru
    _
  // Predicated region
  $region14: #{convnet_forward.6} parent=0 // pred_check
    _
  $region15: #{convnet_forward.6} parent=0 // pred_check_branch
    %16 = sbr.rel (0) target = $region17
  $region16: #{convnet_forward.6} parent=0 // pred_region
    _
  $region17: #{convnet_forward.6} parent=0 // pred_fallthru
    _
  %v18 = vld [vmem:[%s0] sm:$0xff]
  %v19 = vld [vmem:[%s0 + $0x8] sm:$0xff]
  %v20 = vld [vmem:[%s0 + $0x10] sm:$0xf]
  %v21 = vld [vmem:[%s0 + $0x14] sm:$0xff]
  %v22 = vld [vmem:[%s0 + $0x1c] sm:$0xff]
  %v23 = vld [vmem:[%s0 + $0x24] sm:$0xf]
  %v24 = vld [vmem:[%s0 + $0x28] sm:$0xff]
  %v25 = vld [vmem:[%s0 + $0x30] sm:$0xff]
  %v26 = vld [vmem:[%s0 + $0x38] sm:$0xf]
  %v27 = vld [vmem:[%s0 + $0x3c] sm:$0xff]
  %v28 = vld [vmem:[%s0 + $0x44] sm:$0xff]
  %v29 = vld [vmem:[%s0 + $0x4c] sm:$0xf]
  %v30 = vld [vmem:[%s0 + $0x50] sm:$0xff]
  %v31 = vld [vmem:[%s0 + $0x58] sm:$0xff]
  %v32 = vld [vmem:[%s0 + $0x60] sm:$0xf]
  %v33 = vld [vmem:[%s0 + $0x64] sm:$0xff]
  %v34 = vld [vmem:[%s0 + $0x6c] sm:$0xff]
  %v35 = vld [vmem:[%s0 + $0x74] sm:$0xf]
  %v36 = vld [vmem:[%s0 + $0x78] sm:$0xff]
  %v37 = vld [vmem:[%s0 + $0x80] sm:$0xff]
  %v38 = vld [vmem:[%s0 + $0x88] sm:$0xf]
  %v39 = vld [vmem:[%s0 + $0x8c] sm:$0xff]
  %v40 = vld [vmem:[%s0 + $0x94] sm:$0xff]
  %v41 = vld [vmem:[%s0 + $0x9c] sm:$0xf]
  %v42 = vld [vmem:[%s1] sm:$0xf]
  %v43 = vld [vmem:[%s1 + $0x4] sm:$0xf]
  %v44 = vld [vmem:[%s1 + $0x8] sm:$0xf]
  %v45 = vld [vmem:[%s1 + $0xc] sm:$0xf]
  %v46 = vld [vmem:[%s1 + $0x10] sm:$0xf]
  %v47 = vld [vmem:[%s1 + $0x14] sm:$0xf]
  %v48 = vld [vmem:[%s1 + $0x18] sm:$0xf]
  %v49 = vld [vmem:[%s1 + $0x1c] sm:$0xf]
  %v50 = vld [vmem:[%s1 + $0x20] sm:$0xf]
  %v51 = vld [vmem:[%s1 + $0x24] sm:$0xf]
  %v52 = vld [vmem:[%s1 + $0x28] sm:$0xf]
  %v53 = vld [vmem:[%s1 + $0x2c] sm:$0xf]
  %v54 = vld [vmem:[%s1 + $0x30] sm:$0xf]
  %v55 = vld [vmem:[%s1 + $0x34] sm:$0xf]
  %v56 = vld [vmem:[%s1 + $0x38] sm:$0xf]
  %v57 = vld [vmem:[%s1 + $0x3c] sm:$0xf]
  %v58 = vld [vmem:[%s1 + $0x40] sm:$0xf]
  %v59 = vld [vmem:[%s1 + $0x44] sm:$0xf]
  %v60 = vld [vmem:[%s1 + $0x48] sm:$0xf]
  %v61 = vld [vmem:[%s1 + $0x4c] sm:$0xf]
  %v62 = vld [vmem:[%s1 + $0x50] sm:$0xf]
  %v63 = vld [vmem:[%s1 + $0x54] sm:$0xf]
  %v64 = vld [vmem:[%s1 + $0x58] sm:$0xf]
  %v65 = vld [vmem:[%s1 + $0x5c] sm:$0xf]
  %v66 = vld [vmem:[%s1 + $0x60] sm:$0xf]
  %v67 = vld [vmem:[%s1 + $0x64] sm:$0xf]
  %v68 = vld [vmem:[%s1 + $0x68] sm:$0xf]
  %v69 = vld [vmem:[%s1 + $0x6c] sm:$0xf]
  %v70 = vld [vmem:[%s1 + $0x70] sm:$0xf]
  %v71 = vld [vmem:[%s1 + $0x74] sm:$0xf]
  %v72 = vld [vmem:[%s1 + $0x78] sm:$0xf]
  %v73 = vld [vmem:[%s1 + $0x7c] sm:$0xf]
  %v74 = vld [vmem:[%s1 + $0x80] sm:$0xf]
  %v75 = vld [vmem:[%s1 + $0x84] sm:$0xf]
  %v76 = vld [vmem:[%s1 + $0x88] sm:$0xf]
  %v77 = vld [vmem:[%s1 + $0x8c] sm:$0xf]
  %v78 = vld [vmem:[%s1 + $0x90] sm:$0xf]
  %v79 = vld [vmem:[%s1 + $0x94] sm:$0xf]
  %v80 = vld [vmem:[%s1 + $0x98] sm:$0xf]
  %v81 = vld [vmem:[%s1 + $0x9c] sm:$0xf]
  %v82 = vld [vmem:[%s1 + $0xa0] sm:$0xf]
  %v83 = vld [vmem:[%s1 + $0xa4] sm:$0xf]
  %v84 = vld [vmem:[%s1 + $0xa8] sm:$0xf]
  %v85 = vld [vmem:[%s1 + $0xac] sm:$0xf]
  %v86 = vld [vmem:[%s1 + $0xb0] sm:$0xf]
  %v87 = vld [vmem:[%s1 + $0xb4] sm:$0xf]
  %v88 = vld [vmem:[%s1 + $0xb8] sm:$0xf]
  %v89 = vld [vmem:[%s1 + $0xbc] sm:$0xf]
  %v90 = vld [vmem:[%s1 + $0xc0] sm:$0xf]
  %v91 = vld [vmem:[%s1 + $0xc4] sm:$0xf]
  %v92 = vld [vmem:[%s1 + $0xc8] sm:$0xf]
  %v93 = vld [vmem:[%s1 + $0xcc] sm:$0xf]
  %v94 = vld [vmem:[%s1 + $0xd0] sm:$0xf]
  %v95 = vld [vmem:[%s1 + $0xd4] sm:$0xf]
  %v96 = vld [vmem:[%s1 + $0xd8] sm:$0xf]
  %v97 = vld [vmem:[%s1 + $0xdc] sm:$0xf]
  %v98 = vld [vmem:[%s1 + $0xe0] sm:$0xf]
  %v99 = vld [vmem:[%s1 + $0xe4] sm:$0xf]
  %v100 = vld [vmem:[%s1 + $0xe8] sm:$0xf]
  %v101 = vld [vmem:[%s1 + $0xec] sm:$0xf]
  %v102 = vld [vmem:[%s1 + $0xf0] sm:$0xf]
  %v103 = vld [vmem:[%s1 + $0xf4] sm:$0xf]
  %v104 = vld [vmem:[%s1 + $0xf8] sm:$0xf]
  %v105 = vld [vmem:[%s1 + $0xfc] sm:$0xf]
  %v106 = vld [vmem:[%s1 + $0x100] sm:$0xf]
  %v107 = vld [vmem:[%s1 + $0x104] sm:$0xf]
  %v108 = vld [vmem:[%s1 + $0x108] sm:$0xf]
  %v109 = vld [vmem:[%s1 + $0x10c] sm:$0xf]
  %v110 = vld [vmem:[%s1 + $0x110] sm:$0xf]
  %v111 = vld [vmem:[%s1 + $0x114] sm:$0xf]
  %v112 = vld [vmem:[%s1 + $0x118] sm:$0xf]
  %v113 = vld [vmem:[%s1 + $0x11c] sm:$0xf]
  %v114 = vld [vmem:[%s1 + $0x120] sm:$0xf]
  %v115 = vld [vmem:[%s1 + $0x124] sm:$0xf]
  %v116 = vld [vmem:[%s1 + $0x128] sm:$0xf]
  %v117 = vld [vmem:[%s1 + $0x12c] sm:$0xf]
  %v118 = vld [vmem:[%s1 + $0x130] sm:$0xf]
  %v119 = vld [vmem:[%s1 + $0x134] sm:$0xf]
  %v120 = vld [vmem:[%s1 + $0x138] sm:$0xf]
  %v121 = vld [vmem:[%s1 + $0x13c] sm:$0xf]
  %v146 = vunpack.c.l.b16 %v18
  %v147 = vunpack.c.h.b16 %v18
  %v148 = vunpack.c.l.b16 %v19
  %v149 = vunpack.c.h.b16 %v19
  %v150 = vunpack.c.l.b16 %v20
  %v151 = vunpack.c.l.b16 %v21
  %v152 = vunpack.c.h.b16 %v21
  %v153 = vunpack.c.l.b16 %v22
  %v154 = vunpack.c.h.b16 %v22
  %v155 = vunpack.c.l.b16 %v23
  %v156 = vunpack.c.l.b16 %v24
  %v157 = vunpack.c.h.b16 %v24
  %v158 = vunpack.c.l.b16 %v25
  %v159 = vunpack.c.h.b16 %v25
  %v160 = vunpack.c.l.b16 %v26
  %v161 = vunpack.c.l.b16 %v27
  %v162 = vunpack.c.h.b16 %v27
  %v163 = vunpack.c.l.b16 %v28
  %v164 = vunpack.c.h.b16 %v28
  %v165 = vunpack.c.l.b16 %v29
  %v166 = vunpack.c.l.b16 %v30
  %v167 = vunpack.c.h.b16 %v30
  %v168 = vunpack.c.l.b16 %v31
  %v169 = vunpack.c.h.b16 %v31
  %v170 = vunpack.c.l.b16 %v32
  %v171 = vunpack.c.l.b16 %v33
  %v172 = vunpack.c.h.b16 %v33
  %v173 = vunpack.c.l.b16 %v34
  %v174 = vunpack.c.h.b16 %v34
  %v175 = vunpack.c.l.b16 %v35
  %v176 = vunpack.c.l.b16 %v36
  %v177 = vunpack.c.h.b16 %v36
  %v178 = vunpack.c.l.b16 %v37
  %v179 = vunpack.c.h.b16 %v37
  %v180 = vunpack.c.l.b16 %v38
  %v181 = vunpack.c.l.b16 %v39
  %v182 = vunpack.c.h.b16 %v39
  %v183 = vunpack.c.l.b16 %v40
  %v184 = vunpack.c.h.b16 %v40
  %v185 = vunpack.c.l.b16 %v41
  %v186 = vpack.c.b16 %v151, %v146
  %v187 = vpack.c.b16 %v152, %v147
  %v188 = vpack.c.b16 %v153, %v148
  %v189 = vpack.c.b16 %v154, %v149
  %v190 = vpack.c.b16 %v155, %v150
  %v191 = vpack.c.b16 %v161, %v156
  %v192 = vpack.c.b16 %v162, %v157
  %v193 = vpack.c.b16 %v163, %v158
  %v194 = vpack.c.b16 %v164, %v159
  %v195 = vpack.c.b16 %v165, %v160
  %v196 = vpack.c.b16 %v171, %v166
  %v197 = vpack.c.b16 %v172, %v167
  %v198 = vpack.c.b16 %v173, %v168
  %v199 = vpack.c.b16 %v174, %v169
  %v200 = vpack.c.b16 %v175, %v170
  %v201 = vpack.c.b16 %v181, %v176
  %v202 = vpack.c.b16 %v182, %v177
  %v203 = vpack.c.b16 %v183, %v178
  %v204 = vpack.c.b16 %v184, %v179
  %v205 = vpack.c.b16 %v185, %v180
  %v306 = vunpack.c.l.b16 %v42
  %v307 = vunpack.c.l.b16 %v43
  %v308 = vunpack.c.l.b16 %v44
  %v309 = vunpack.c.l.b16 %v45
  %v310 = vunpack.c.l.b16 %v46
  %v311 = vunpack.c.l.b16 %v47
  %v312 = vunpack.c.l.b16 %v48
  %v313 = vunpack.c.l.b16 %v49
  %v314 = vunpack.c.l.b16 %v50
  %v315 = vunpack.c.l.b16 %v51
  %v316 = vunpack.c.l.b16 %v52
  %v317 = vunpack.c.l.b16 %v53
  %v318 = vunpack.c.l.b16 %v54
  %v319 = vunpack.c.l.b16 %v55
  %v320 = vunpack.c.l.b16 %v56
  %v321 = vunpack.c.l.b16 %v57
  %v322 = vunpack.c.l.b16 %v58
  %v323 = vunpack.c.l.b16 %v59
  %v324 = vunpack.c.l.b16 %v60
  %v325 = vunpack.c.l.b16 %v61
  %v326 = vunpack.c.l.b16 %v62
  %v327 = vunpack.c.l.b16 %v63
  %v328 = vunpack.c.l.b16 %v64
  %v329 = vunpack.c.l.b16 %v65
  %v330 = vunpack.c.l.b16 %v66
  %v331 = vunpack.c.l.b16 %v67
  %v332 = vunpack.c.l.b16 %v68
  %v333 = vunpack.c.l.b16 %v69
  %v334 = vunpack.c.l.b16 %v70
  %v335 = vunpack.c.l.b16 %v71
  %v336 = vunpack.c.l.b16 %v72
  %v337 = vunpack.c.l.b16 %v73
  %v338 = vunpack.c.l.b16 %v74
  %v339 = vunpack.c.l.b16 %v75
  %v340 = vunpack.c.l.b16 %v76
  %v341 = vunpack.c.l.b16 %v77
  %v342 = vunpack.c.l.b16 %v78
  %v343 = vunpack.c.l.b16 %v79
  %v344 = vunpack.c.l.b16 %v80
  %v345 = vunpack.c.l.b16 %v81
  %v346 = vunpack.c.l.b16 %v82
  %v347 = vunpack.c.l.b16 %v83
  %v348 = vunpack.c.l.b16 %v84
  %v349 = vunpack.c.l.b16 %v85
  %v350 = vunpack.c.l.b16 %v86
  %v351 = vunpack.c.l.b16 %v87
  %v352 = vunpack.c.l.b16 %v88
  %v353 = vunpack.c.l.b16 %v89
  %v354 = vunpack.c.l.b16 %v90
  %v355 = vunpack.c.l.b16 %v91
  %v356 = vunpack.c.l.b16 %v92
  %v357 = vunpack.c.l.b16 %v93
  %v358 = vunpack.c.l.b16 %v94
  %v359 = vunpack.c.l.b16 %v95
  %v360 = vunpack.c.l.b16 %v96
  %v361 = vunpack.c.l.b16 %v97
  %v362 = vunpack.c.l.b16 %v98
  %v363 = vunpack.c.l.b16 %v99
  %v364 = vunpack.c.l.b16 %v100
  %v365 = vunpack.c.l.b16 %v101
  %v366 = vunpack.c.l.b16 %v102
  %v367 = vunpack.c.l.b16 %v103
  %v368 = vunpack.c.l.b16 %v104
  %v369 = vunpack.c.l.b16 %v105
  %v370 = vunpack.c.l.b16 %v106
  %v371 = vunpack.c.l.b16 %v107
  %v372 = vunpack.c.l.b16 %v108
  %v373 = vunpack.c.l.b16 %v109
  %v374 = vunpack.c.l.b16 %v110
  %v375 = vunpack.c.l.b16 %v111
  %v376 = vunpack.c.l.b16 %v112
  %v377 = vunpack.c.l.b16 %v113
  %v378 = vunpack.c.l.b16 %v114
  %v379 = vunpack.c.l.b16 %v115
  %v380 = vunpack.c.l.b16 %v116
  %v381 = vunpack.c.l.b16 %v117
  %v382 = vunpack.c.l.b16 %v118
  %v383 = vunpack.c.l.b16 %v119
  %v384 = vunpack.c.l.b16 %v120
  %v385 = vunpack.c.l.b16 %v121
  %v386 = vpack.c.b16 %v307, %v306
  %v387 = vpack.c.b16 %v309, %v308
  %v388 = vpack.c.b16 %v311, %v310
  %v389 = vpack.c.b16 %v313, %v312
  %v390 = vpack.c.b16 %v315, %v314
  %v391 = vpack.c.b16 %v317, %v316
  %v392 = vpack.c.b16 %v319, %v318
  %v393 = vpack.c.b16 %v321, %v320
  %v394 = vpack.c.b16 %v323, %v322
  %v395 = vpack.c.b16 %v325, %v324
  %v396 = vpack.c.b16 %v327, %v326
  %v397 = vpack.c.b16 %v329, %v328
  %v398 = vpack.c.b16 %v331, %v330
  %v399 = vpack.c.b16 %v333, %v332
  %v400 = vpack.c.b16 %v335, %v334
  %v401 = vpack.c.b16 %v337, %v336
  %v402 = vpack.c.b16 %v339, %v338
  %v403 = vpack.c.b16 %v341, %v340
  %v404 = vpack.c.b16 %v343, %v342
  %v405 = vpack.c.b16 %v345, %v344
  %v406 = vpack.c.b16 %v347, %v346
  %v407 = vpack.c.b16 %v349, %v348
  %v408 = vpack.c.b16 %v351, %v350
  %v409 = vpack.c.b16 %v353, %v352
  %v410 = vpack.c.b16 %v355, %v354
  %v411 = vpack.c.b16 %v357, %v356
  %v412 = vpack.c.b16 %v359, %v358
  %v413 = vpack.c.b16 %v361, %v360
  %v414 = vpack.c.b16 %v363, %v362
  %v415 = vpack.c.b16 %v365, %v364
  %v416 = vpack.c.b16 %v367, %v366
  %v417 = vpack.c.b16 %v369, %v368
  %v418 = vpack.c.b16 %v371, %v370
  %v419 = vpack.c.b16 %v373, %v372
  %v420 = vpack.c.b16 %v375, %v374
  %v421 = vpack.c.b16 %v377, %v376
  %v422 = vpack.c.b16 %v379, %v378
  %v423 = vpack.c.b16 %v381, %v380
  %v424 = vpack.c.b16 %v383, %v382
  %v425 = vpack.c.b16 %v385, %v384
  %466 = vmatprep.subr.bf16.mxu0 0
  %467 = vmatpush1.bf16.msra.mxu0 %v386
  %468 = vmatprep.subr.bf16.mxu0 0
  %469 = vmatpush1.bf16.msra.mxu0 %v387
  %470 = vmatprep.subr.bf16.mxu0 0
  %471 = vmatpush1.bf16.msra.mxu0 %v388
  %472 = vmatprep.subr.bf16.mxu0 0
  %473 = vmatpush1.bf16.msra.mxu0 %v389
  %474 = vmatprep.subr.bf16.mxu0 0
  %475 = vmatpush1.bf16.msra.mxu0 %v390
  %476 = vmatprep.subr.bf16.mxu0 0
  %477 = vmatpush1.bf16.msra.mxu0 %v391
  %478 = vmatprep.subr.bf16.mxu0 0
  %479 = vmatpush1.bf16.msra.mxu0 %v392
  %480 = vmatprep.subr.bf16.mxu0 0
  %481 = vmatpush1.bf16.msra.mxu0 %v393
  %482 = vmatprep.subr.bf16.mxu0 0
  %483 = vmatpush1.bf16.msra.mxu0 %v394
  %484 = vmatprep.subr.bf16.mxu0 0
  %485 = vmatpush1.bf16.msra.mxu0 %v395
  %486 = vmatprep.subr.bf16.mxu0 0
  %487 = vmatpush1.bf16.msra.mxu0 %v396
  %488 = vmatprep.subr.bf16.mxu0 0
  %489 = vmatpush1.bf16.msra.mxu0 %v397
  %490 = vmatprep.subr.bf16.mxu0 0
  %491 = vmatpush1.bf16.msra.mxu0 %v398
  %492 = vmatprep.subr.bf16.mxu0 0
  %493 = vmatpush1.bf16.msra.mxu0 %v399
  %494 = vmatprep.subr.bf16.mxu0 0
  %495 = vmatpush1.bf16.msra.mxu0 %v400
  %496 = vmatprep.subr.bf16.mxu0 0
  %497 = vmatpush1.bf16.msra.mxu0 %v401
  %498 = vmatprep.mubr.bf16.mxu0 %v187
  %499 = vmatmul.mubr.bf16.gmra.mrb[0].mxu0 %v186
  %v500 = vpop.f32.mrb[0].mxu0
  %v501 = vadd.f32 0.0, %v500
  %v502 = vpop.f32.mrb[0].mxu0
  %v503 = vpop.f32.mrb[0].mxu0
  %v504 = vadd.f32 0.0, %v503
  %v505 = vpop.f32.mrb[0].mxu0
  %506 = vmatprep.mubr.bf16.mxu0 %v192
  %507 = vmatmul.mubr.bf16.gmra.mrb[0].mxu0 %v191
  %v508 = vpop.f32.mrb[0].mxu0
  %v509 = vadd.f32 0.0, %v508
  %v510 = vpop.f32.mrb[0].mxu0
  %v511 = vpop.f32.mrb[0].mxu0
  %v512 = vadd.f32 0.0, %v511
  %v513 = vpop.f32.mrb[0].mxu0
  %514 = vmatprep.mubr.bf16.mxu0 %v197
  %515 = vmatmul.mubr.bf16.gmra.mrb[0].mxu0 %v196
  %v516 = vpop.f32.mrb[0].mxu0
  %v517 = vadd.f32 0.0, %v516
  %v518 = vpop.f32.mrb[0].mxu0
  %v519 = vpop.f32.mrb[0].mxu0
  %v520 = vadd.f32 0.0, %v519
  %v521 = vpop.f32.mrb[0].mxu0
  %522 = vmatprep.mubr.bf16.mxu0 %v202
  %523 = vmatmul.mubr.bf16.gmra.mrb[0].mxu0 %v201
  %v524 = vpop.f32.mrb[0].mxu0
  %v525 = vadd.f32 0.0, %v524
  %v526 = vpop.f32.mrb[0].mxu0
  %v527 = vpop.f32.mrb[0].mxu0
  %v528 = vadd.f32 0.0, %v527
  %v529 = vpop.f32.mrb[0].mxu0
  %530 = vdwg.mxu0
  %531 = vmatprep.subr.bf16.mxu0 0
  %532 = vmatpush1.bf16.msra.mxu0 %v402
  %533 = vmatprep.subr.bf16.mxu0 0
  %534 = vmatpush1.bf16.msra.mxu0 %v403
  %535 = vmatprep.subr.bf16.mxu0 0
  %536 = vmatpush1.bf16.msra.mxu0 %v404
  %537 = vmatprep.subr.bf16.mxu0 0
  %538 = vmatpush1.bf16.msra.mxu0 %v405
  %539 = vmatprep.subr.bf16.mxu0 0
  %540 = vmatpush1.bf16.msra.mxu0 %v406
  %541 = vmatprep.subr.bf16.mxu0 0
  %542 = vmatpush1.bf16.msra.mxu0 %v407
  %543 = vmatprep.subr.bf16.mxu0 0
  %544 = vmatpush1.bf16.msra.mxu0 %v408
  %545 = vmatprep.subr.bf16.mxu0 0
  %546 = vmatpush1.bf16.msra.mxu0 %v409
  %547 = vmatprep.subr.bf16.mxu0 0
  %548 = vmatpush1.bf16.msra.mxu0 %v410
  %549 = vmatprep.subr.bf16.mxu0 0
  %550 = vmatpush1.bf16.msra.mxu0 %v411
  %551 = vmatprep.subr.bf16.mxu0 0
  %552 = vmatpush1.bf16.msra.mxu0 %v412
  %553 = vmatprep.subr.bf16.mxu0 0
  %554 = vmatpush1.bf16.msra.mxu0 %v413
  %555 = vmatprep.subr.bf16.mxu0 0
  %556 = vmatpush1.bf16.msra.mxu0 %v414
  %557 = vmatprep.subr.bf16.mxu0 0
  %558 = vmatpush1.bf16.msra.mxu0 %v415
  %559 = vmatprep.subr.bf16.mxu0 0
  %560 = vmatpush1.bf16.msra.mxu0 %v416
  %561 = vmatprep.subr.bf16.mxu0 0
  %562 = vmatpush1.bf16.msra.mxu0 %v417
  %563 = vmatprep.mubr.bf16.mxu0 %v189
  %564 = vmatmul.mubr.bf16.gmra.mrb[0].mxu0 %v188
  %v565 = vpop.f32.mrb[0].mxu0
  %v566 = vadd.f32 %v501, %v565
  %v567 = vpop.f32.mrb[0].mxu0
  %v568 = vpop.f32.mrb[0].mxu0
  %v569 = vadd.f32 %v504, %v568
  %v570 = vpop.f32.mrb[0].mxu0
  %571 = vmatprep.mubr.bf16.mxu0 %v194
  %572 = vmatmul.mubr.bf16.gmra.mrb[0].mxu0 %v193
  %v573 = vpop.f32.mrb[0].mxu0
  %v574 = vadd.f32 %v509, %v573
  %v575 = vpop.f32.mrb[0].mxu0
  %v576 = vpop.f32.mrb[0].mxu0
  %v577 = vadd.f32 %v512, %v576
  %v578 = vpop.f32.mrb[0].mxu0
  %579 = vmatprep.mubr.bf16.mxu0 %v199
  %580 = vmatmul.mubr.bf16.gmra.mrb[0].mxu0 %v198
  %v581 = vpop.f32.mrb[0].mxu0
  %v582 = vadd.f32 %v517, %v581
  %v583 = vpop.f32.mrb[0].mxu0
  %v584 = vpop.f32.mrb[0].mxu0
  %v585 = vadd.f32 %v520, %v584
  %v586 = vpop.f32.mrb[0].mxu0
  %587 = vmatprep.mubr.bf16.mxu0 %v204
  %588 = vmatmul.mubr.bf16.gmra.mrb[0].mxu0 %v203
  %v589 = vpop.f32.mrb[0].mxu0
  %v590 = vadd.f32 %v525, %v589
  %v591 = vpop.f32.mrb[0].mxu0
  %v592 = vpop.f32.mrb[0].mxu0
  %v593 = vadd.f32 %v528, %v592
  %v594 = vpop.f32.mrb[0].mxu0
  %595 = vdwg.mxu0
  %596 = vmatprep.subr.bf16.mxu0 0
  %597 = vmatpush1.bf16.msra.mxu0 %v418
  %598 = vmatprep.subr.bf16.mxu0 0
  %599 = vmatpush1.bf16.msra.mxu0 %v419
  %600 = vmatprep.subr.bf16.mxu0 0
  %601 = vmatpush1.bf16.msra.mxu0 %v420
  %602 = vmatprep.subr.bf16.mxu0 0
  %603 = vmatpush1.bf16.msra.mxu0 %v421
  %604 = vmatprep.subr.bf16.mxu0 0
  %605 = vmatpush1.bf16.msra.mxu0 %v422
  %606 = vmatprep.subr.bf16.mxu0 0
  %607 = vmatpush1.bf16.msra.mxu0 %v423
  %608 = vmatprep.subr.bf16.mxu0 0
  %609 = vmatpush1.bf16.msra.mxu0 %v424
  %610 = vmatprep.subr.bf16.mxu0 0
  %611 = vmatpush1.bf16.msra.mxu0 %v425
  %612 = vmatprep.subr.bf16.mxu0 0
  %613 = vmatpush1.bf16.msra.mxu0 0
  %614 = vmatprep.subr.bf16.mxu0 0
  %615 = vmatpush1.bf16.msra.mxu0 0
  %616 = vmatprep.subr.bf16.mxu0 0
  %617 = vmatpush1.bf16.msra.mxu0 0
  %618 = vmatprep.subr.bf16.mxu0 0
  %619 = vmatpush1.bf16.msra.mxu0 0
  %620 = vmatprep.subr.bf16.mxu0 0
  %621 = vmatpush1.bf16.msra.mxu0 0
  %622 = vmatprep.subr.bf16.mxu0 0
  %623 = vmatpush1.bf16.msra.mxu0 0
  %624 = vmatprep.subr.bf16.mxu0 0
  %625 = vmatpush1.bf16.msra.mxu0 0
  %626 = vmatprep.subr.bf16.mxu0 0
  %627 = vmatpush1.bf16.msra.mxu0 0
  %628 = vmatprep.mubr.bf16.mxu0 0
  %629 = vmatmul.mubr.bf16.gmra.mrb[0].mxu0 %v190
  %v630 = vpop.f32.mrb[0].mxu0
  %v631 = vadd.f32 %v566, %v630
  %v632 = vpop.f32.mrb[0].mxu0
  %v633 = vpop.f32.mrb[0].mxu0
  %v634 = vadd.f32 %v569, %v633
  %v635 = vpop.f32.mrb[0].mxu0
  %636 = vmatprep.mubr.bf16.mxu0 0
  %637 = vmatmul.mubr.bf16.gmra.mrb[0].mxu0 %v195
  %v638 = vpop.f32.mrb[0].mxu0
  %v639 = vadd.f32 %v574, %v638
  %v640 = vpop.f32.mrb[0].mxu0
  %v641 = vpop.f32.mrb[0].mxu0
  %v642 = vadd.f32 %v577, %v641
  %v643 = vpop.f32.mrb[0].mxu0
  %644 = vmatprep.mubr.bf16.mxu0 0
  %645 = vmatmul.mubr.bf16.gmra.mrb[0].mxu0 %v200
  %v646 = vpop.f32.mrb[0].mxu0
  %v647 = vadd.f32 %v582, %v646
  %v648 = vpop.f32.mrb[0].mxu0
  %v649 = vpop.f32.mrb[0].mxu0
  %v650 = vadd.f32 %v585, %v649
  %v651 = vpop.f32.mrb[0].mxu0
  %652 = vmatprep.mubr.bf16.mxu0 0
  %653 = vmatmul.mubr.bf16.gmra.mrb[0].mxu0 %v205
  %v654 = vpop.f32.mrb[0].mxu0
  %v655 = vadd.f32 %v590, %v654
  %v656 = vpop.f32.mrb[0].mxu0
  %v657 = vpop.f32.mrb[0].mxu0
  %v658 = vadd.f32 %v593, %v657
  %v659 = vpop.f32.mrb[0].mxu0
  %660 = vdwg.mxu0
  %661 = vadd.xlane.f32.xlu0 %v631
  %v662 = vpop.xlane.xlu0 %661
  %663 = vadd.xlane.f32.xlu0 %v634
  %v664 = vpop.xlane.xlu0 %663
  %665 = vadd.xlane.f32.xlu0 %v639
  %v666 = vpop.xlane.xlu0 %665
  %667 = vadd.xlane.f32.xlu0 %v642
  %v668 = vpop.xlane.xlu0 %667
  %669 = vadd.xlane.f32.xlu0 %v647
  %v670 = vpop.xlane.xlu0 %669
  %671 = vadd.xlane.f32.xlu0 %v650
  %v672 = vpop.xlane.xlu0 %671
  %673 = vadd.xlane.f32.xlu0 %v655
  %v674 = vpop.xlane.xlu0 %673
  %675 = vadd.xlane.f32.xlu0 %v658
  %v676 = vpop.xlane.xlu0 %675
  %v677 = vmul.f32 %v662, 0.055555556
  %v678 = vmul.f32 %v664, 0.055555556
  %v679 = vmul.f32 %v666, 0.055555556
  %v680 = vmul.f32 %v668, 0.055555556
  %v681 = vmul.f32 %v670, 0.055555556
  %v682 = vmul.f32 %v672, 0.055555556
  %v683 = vmul.f32 %v674, 0.055555556
  %v684 = vmul.f32 %v676, 0.055555556
  %v685 = vmul.f32 %v631, %v631
  %v686 = vmul.f32 %v634, %v634
  %v687 = vmul.f32 %v639, %v639
  %v688 = vmul.f32 %v642, %v642
  %v689 = vmul.f32 %v647, %v647
  %v690 = vmul.f32 %v650, %v650
  %v691 = vmul.f32 %v655, %v655
  %v692 = vmul.f32 %v658, %v658
  %693 = vadd.xlane.f32.xlu0 %v685
  %v694 = vpop.xlane.xlu0 %693
  %695 = vadd.xlane.f32.xlu0 %v686
  %v696 = vpop.xlane.xlu0 %695
  %697 = vadd.xlane.f32.xlu0 %v687
  %v698 = vpop.xlane.xlu0 %697
  %699 = vadd.xlane.f32.xlu0 %v688
  %v700 = vpop.xlane.xlu0 %699
  %701 = vadd.xlane.f32.xlu0 %v689
  %v702 = vpop.xlane.xlu0 %701
  %703 = vadd.xlane.f32.xlu0 %v690
  %v704 = vpop.xlane.xlu0 %703
  %705 = vadd.xlane.f32.xlu0 %v691
  %v706 = vpop.xlane.xlu0 %705
  %707 = vadd.xlane.f32.xlu0 %v692
  %v708 = vpop.xlane.xlu0 %707
  %v709 = vmul.f32 %v694, 0.055555556
  %v710 = vmul.f32 %v696, 0.055555556
  %v711 = vmul.f32 %v698, 0.055555556
  %v712 = vmul.f32 %v700, 0.055555556
  %v713 = vmul.f32 %v702, 0.055555556
  %v714 = vmul.f32 %v704, 0.055555556
  %v715 = vmul.f32 %v706, 0.055555556
  %v716 = vmul.f32 %v708, 0.055555556
  %v717 = vmul.f32 %v677, %v677
  %v718 = vmul.f32 %v678, %v678
  %v719 = vmul.f32 %v679, %v679
  %v720 = vmul.f32 %v680, %v680
  %v721 = vmul.f32 %v681, %v681
  %v722 = vmul.f32 %v682, %v682
  %v723 = vmul.f32 %v683, %v683
  %v724 = vmul.f32 %v684, %v684
  %v725 = vsub.f32 %v709, %v717
  %v726 = vsub.f32 %v710, %v718
  %v727 = vsub.f32 %v711, %v719
  %v728 = vsub.f32 %v712, %v720
  %v729 = vsub.f32 %v713, %v721
  %v730 = vsub.f32 %v714, %v722
  %v731 = vsub.f32 %v715, %v723
  %v732 = vsub.f32 %v716, %v724
  %v733 = vmax.f32 %v725, 0.0
  %v734 = vmax.f32 %v726, 0.0
  %v735 = vmax.f32 %v727, 0.0
  %v736 = vmax.f32 %v728, 0.0
  %v737 = vmax.f32 %v729, 0.0
  %v738 = vmax.f32 %v730, 0.0
  %v739 = vmax.f32 %v731, 0.0
  %v740 = vmax.f32 %v732, 0.0
  %v741 = vld [vmem:[%s2] sm:$0xff]
  %v742 = vld [vmem:[%s2 + $0x8] sm:$0xff]
  %v743 = vld [vmem:[%s2 + $0x10] sm:$0xff]
  %v744 = vld [vmem:[%s2 + $0x18] sm:$0xff]
  %v745 = vld [vmem:[%s2 + $0x20] sm:$0xff]
  %v746 = vld [vmem:[%s2 + $0x28] sm:$0xff]
  %v747 = vld [vmem:[%s2 + $0x30] sm:$0xff]
  %v748 = vld [vmem:[%s2 + $0x38] sm:$0xff]
  %v749 = vadd.f32 %v733, 1e-05
  %v750 = vadd.f32 %v734, 1e-05
  %v751 = vadd.f32 %v735, 1e-05
  %v752 = vadd.f32 %v736, 1e-05
  %v753 = vadd.f32 %v737, 1e-05
  %v754 = vadd.f32 %v738, 1e-05
  %v755 = vadd.f32 %v739, 1e-05
  %v756 = vadd.f32 %v740, 1e-05
  %v757 = vrsqrt.pop %v749
  %v758 = vrsqrt.pop %v750
  %v759 = vrsqrt.pop %v751
  %v760 = vrsqrt.pop %v752
  %v761 = vrsqrt.pop %v753
  %v762 = vrsqrt.pop %v754
  %v763 = vrsqrt.pop %v755
  %v764 = vrsqrt.pop %v756
  %v765 = vmul.f32 %v741, %v757
  %v766 = vmul.f32 %v742, %v758
  %v767 = vmul.f32 %v743, %v759
  %v768 = vmul.f32 %v744, %v760
  %v769 = vmul.f32 %v745, %v761
  %v770 = vmul.f32 %v746, %v762
  %v771 = vmul.f32 %v747, %v763
  %v772 = vmul.f32 %v748, %v764
  %v773 = vld [vmem:[%s3] sm:$0xff]
  %v774 = vld [vmem:[%s3 + $0x8] sm:$0xff]
  %v775 = vld [vmem:[%s3 + $0x10] sm:$0xff]
  %v776 = vld [vmem:[%s3 + $0x18] sm:$0xff]
  %v777 = vld [vmem:[%s3 + $0x20] sm:$0xff]
  %v778 = vld [vmem:[%s3 + $0x28] sm:$0xff]
  %v779 = vld [vmem:[%s3 + $0x30] sm:$0xff]
  %v780 = vld [vmem:[%s3 + $0x38] sm:$0xff]
  %v781 = vmul.f32 %v677, %v765
  %v782 = vmul.f32 %v678, %v766
  %v783 = vmul.f32 %v679, %v767
  %v784 = vmul.f32 %v680, %v768
  %v785 = vmul.f32 %v681, %v769
  %v786 = vmul.f32 %v682, %v770
  %v787 = vmul.f32 %v683, %v771
  %v788 = vmul.f32 %v684, %v772
  %v789 = vsub.f32 %v773, %v781
  %v790 = vsub.f32 %v774, %v782
  %v791 = vsub.f32 %v775, %v783
  %v792 = vsub.f32 %v776, %v784
  %v793 = vsub.f32 %v777, %v785
  %v794 = vsub.f32 %v778, %v786
  %v795 = vsub.f32 %v779, %v787
  %v796 = vsub.f32 %v780, %v788
  %798 = vset.pattern.permute.xlu0 0
  %799 = vperm.xlu0 %798, %v765
  %v800 = vpop.permute.xlu0 %799
  %803 = vset.pattern.permute.xlu0 0
  %804 = vperm.xlu0 %803, %v766
  %v805 = vpop.permute.xlu0 %804
  %808 = vset.pattern.permute.xlu0 0
  %809 = vperm.xlu0 %808, %v767
  %v810 = vpop.permute.xlu0 %809
  %813 = vset.pattern.permute.xlu0 0
  %814 = vperm.xlu0 %813, %v768
  %v815 = vpop.permute.xlu0 %814
  %818 = vset.pattern.permute.xlu0 0
  %819 = vperm.xlu0 %818, %v769
  %v820 = vpop.permute.xlu0 %819
  %823 = vset.pattern.permute.xlu0 0
  %824 = vperm.xlu0 %823, %v770
  %v825 = vpop.permute.xlu0 %824
  %828 = vset.pattern.permute.xlu0 0
  %829 = vperm.xlu0 %828, %v771
  %v830 = vpop.permute.xlu0 %829
  %833 = vset.pattern.permute.xlu0 0
  %834 = vperm.xlu0 %833, %v772
  %v835 = vpop.permute.xlu0 %834
  %v837 = vmul.f32 %v631, %v800
  %v838 = vmul.f32 %v634, %v805
  %v839 = vmul.f32 %v639, %v810
  %v840 = vmul.f32 %v642, %v815
  %v841 = vmul.f32 %v647, %v820
  %v842 = vmul.f32 %v650, %v825
  %v843 = vmul.f32 %v655, %v830
  %v844 = vmul.f32 %v658, %v835
  %846 = vset.pattern.permute.xlu0 0
  %847 = vperm.xlu0 %846, %v789
  %v848 = vpop.permute.xlu0 %847
  %851 = vset.pattern.permute.xlu0 0
  %852 = vperm.xlu0 %851, %v790
  %v853 = vpop.permute.xlu0 %852
  %856 = vset.pattern.permute.xlu0 0
  %857 = vperm.xlu0 %856, %v791
  %v858 = vpop.permute.xlu0 %857
  %861 = vset.pattern.permute.xlu0 0
  %862 = vperm.xlu0 %861, %v792
  %v863 = vpop.permute.xlu0 %862
  %866 = vset.pattern.permute.xlu0 0
  %867 = vperm.xlu0 %866, %v793
  %v868 = vpop.permute.xlu0 %867
  %871 = vset.pattern.permute.xlu0 0
  %872 = vperm.xlu0 %871, %v794
  %v873 = vpop.permute.xlu0 %872
  %876 = vset.pattern.permute.xlu0 0
  %877 = vperm.xlu0 %876, %v795
  %v878 = vpop.permute.xlu0 %877
  %881 = vset.pattern.permute.xlu0 0
  %882 = vperm.xlu0 %881, %v796
  %v883 = vpop.permute.xlu0 %882
  %v885 = vadd.f32 %v837, %v848
  %v886 = vadd.f32 %v838, %v853
  %v887 = vadd.f32 %v839, %v858
  %v888 = vadd.f32 %v840, %v863
  %v889 = vadd.f32 %v841, %v868
  %v890 = vadd.f32 %v842, %v873
  %v891 = vadd.f32 %v843, %v878
  %v892 = vadd.f32 %v844, %v883
  %v893 = vmax.f32 %v885, 0.0
  %v894 = vmax.f32 %v886, 0.0
  %v895 = vmax.f32 %v887, 0.0
  %v896 = vmax.f32 %v888, 0.0
  %v897 = vmax.f32 %v889, 0.0
  %v898 = vmax.f32 %v890, 0.0
  %v899 = vmax.f32 %v891, 0.0
  %v900 = vmax.f32 %v892, 0.0
  %v901 = vpack.c.bf16 %v894, %v893
  %v902 = vpack.c.bf16 %v896, %v895
  %v903 = vpack.c.bf16 %v898, %v897
  %v904 = vpack.c.bf16 %v900, %v899
  %v909 = vunpack.c.l.b16 %v901
  %v910 = vunpack.c.h.b16 %v901
  %v911 = vunpack.c.l.b16 %v902
  %v912 = vunpack.c.h.b16 %v902
  %v913 = vunpack.c.l.b16 %v903
  %v914 = vunpack.c.h.b16 %v903
  %v915 = vunpack.c.l.b16 %v904
  %v916 = vunpack.c.h.b16 %v904
  %v917 = vpack.c.b16 %v909, %v909
  %v918 = vpack.c.b16 %v910, %v910
  %v919 = vpack.c.b16 %v911, %v911
  %v920 = vpack.c.b16 %v912, %v912
  %v921 = vpack.c.b16 %v913, %v913
  %v922 = vpack.c.b16 %v914, %v914
  %v923 = vpack.c.b16 %v915, %v915
  %v924 = vpack.c.b16 %v916, %v916
  %933 = vst [vmem:[%s4] sm:$0xf] %v917
  %934 = vst [vmem:[%s4 + $0x4] sm:$0xf] %v918
  %935 = vst [vmem:[%s4 + $0x8] sm:$0xf] %v919
  %936 = vst [vmem:[%s4 + $0xc] sm:$0xf] %v920
  %937 = vst [vmem:[%s4 + $0x10] sm:$0xf] %v921
  %938 = vst [vmem:[%s4 + $0x14] sm:$0xf] %v922
  %939 = vst [vmem:[%s4 + $0x18] sm:$0xf] %v923
  %940 = vst [vmem:[%s4 + $0x1c] sm:$0xf] %v924
  // Predicated region
  $region18: #{convnet_forward.6} parent=0 // pred_check
    _
  $region19: #{convnet_forward.6} parent=0 // pred_check_branch
    %942 = sbr.rel (0) target = $region21
  $region20: #{convnet_forward.6} parent=0 // pred_region
    _
  $region21: #{convnet_forward.6} parent=0 // pred_fallthru
    _
  // Predicated region
  $region22: #{convnet_forward.6} parent=0 // pred_check
    _
  $region23: #{convnet_forward.6} parent=0 // pred_check_branch
    %944 = sbr.rel (0) target = $region25
  $region24: #{convnet_forward.6} parent=0 // pred_region
    _
  $region25: #{convnet_forward.6} parent=0 // pred_fallthru
    _

// kernel: convnet_forward.7
$region0: #{convnet_forward.7}
  #allocation0 [shape = 'u32[]', space=smem, size = 0x4, offset = 0x4, fixed_abs, tag = 'smem constant byte address 0x4 - core index']
  #allocation1 [shape = 'u32[144,128]{1,0:T(1,128)}', space=vmem, size = 0x12000, scoped, tag = 'internal scratch']
  %s0 = inlined_call_operand.vmem [shape: bf16[8,640], index: 0, kind: input, shape index: {}]
  %s1 = inlined_call_operand.vmem [shape: bf16[640,512], index: 1, kind: input, shape index: {}]
  %s2 = inlined_call_operand.vmem [shape: f32[1,512], index: 2, kind: input, shape index: {}]
  %s3 = inlined_call_operand.vmem [shape: bf16[512,128], index: 3, kind: input, shape index: {}]
  %s4 = inlined_call_operand.vmem [shape: f32[1,128], index: 4, kind: input, shape index: {}]
  %s5 = inlined_call_operand.vmem [shape: f32[8,128], index: 5, kind: output, shape index: {}]
  %s6 = sld [smem:[#allocation0]]
  $region30: #{convnet_forward.7} parent=0
    _
  %s8 = ssub.s32 1, %s6
  %s9 = scalar_select 0, %s8, %s6
  // Predicated region
  $region2: #{convnet_forward.7} parent=0 // pred_check
    _
  $region3: #{convnet_forward.7} parent=0 // pred_check_branch
    %11 = sbr.rel (0) target = $region5
  $region4: #{convnet_forward.7} parent=0 // pred_region
    _
  $region5: #{convnet_forward.7} parent=0 // pred_fallthru
    _
  // Predicated region
  $region6: #{convnet_forward.7} parent=0 // pred_check
    _
  $region7: #{convnet_forward.7} parent=0 // pred_check_branch
    %13 = sbr.rel (0) target = $region9
  $region8: #{convnet_forward.7} parent=0 // pred_region
    _
  $region9: #{convnet_forward.7} parent=0 // pred_fallthru
    _
  // Predicated region
  $region10: #{convnet_forward.7} parent=0 // pred_check
    _
  $region11: #{convnet_forward.7} parent=0 // pred_check_branch
    %15 = sbr.rel (0) target = $region13
  $region12: #{convnet_forward.7} parent=0 // pred_region
    _
  $region13: #{convnet_forward.7} parent=0 // pred_fallthru
    _
  // Predicated region
  $region14: #{convnet_forward.7} parent=0 // pred_check
    _
  $region15: #{convnet_forward.7} parent=0 // pred_check_branch
    %17 = sbr.rel (0) target = $region17
  $region16: #{convnet_forward.7} parent=0 // pred_region
    _
  $region17: #{convnet_forward.7} parent=0 // pred_fallthru
    _
  // Predicated region
  $region18: #{convnet_forward.7} parent=0 // pred_check
    _
  $region19: #{convnet_forward.7} parent=0 // pred_check_branch
    %19 = sbr.rel (0) target = $region21
  $region20: #{convnet_forward.7} parent=0 // pred_region
    _
  $region21: #{convnet_forward.7} parent=0 // pred_fallthru
    _
  %v21 = vld [vmem:[%s0] sm:$0xff]
  %v22 = vld [vmem:[%s0 + $0x8] sm:$0xff]
  %v23 = vld [vmem:[%s0 + $0x10] sm:$0xf]
  %v24 = vld [vmem:[%s1] sm:$0xff]
  %v25 = vld [vmem:[%s1 + $0x8] sm:$0xff]
  %v26 = vld [vmem:[%s1 + $0x10] sm:$0xff]
  %v27 = vld [vmem:[%s1 + $0x18] sm:$0xff]
  %v28 = vld [vmem:[%s1 + $0x20] sm:$0xff]
  %v29 = vld [vmem:[%s1 + $0x28] sm:$0xff]
  %v30 = vld [vmem:[%s1 + $0x30] sm:$0xff]
  %v31 = vld [vmem:[%s1 + $0x38] sm:$0xff]
  %v32 = vld [vmem:[%s1 + $0x40] sm:$0xff]
  %v33 = vld [vmem:[%s1 + $0x48] sm:$0xff]
  %v34 = vld [vmem:[%s1 + $0x50] sm:$0xff]
  %v35 = vld [vmem:[%s1 + $0x58] sm:$0xff]
  %v36 = vld [vmem:[%s1 + $0x60] sm:$0xff]
  %v37 = vld [vmem:[%s1 + $0x68] sm:$0xff]
  %v38 = vld [vmem:[%s1 + $0x70] sm:$0xff]
  %v39 = vld [vmem:[%s1 + $0x78] sm:$0xff]
  %v40 = vld [vmem:[%s1 + $0x80] sm:$0xff]
  %v41 = vld [vmem:[%s1 + $0x88] sm:$0xff]
  %v42 = vld [vmem:[%s1 + $0x90] sm:$0xff]
  %v43 = vld [vmem:[%s1 + $0x98] sm:$0xff]
  %v44 = vld [vmem:[%s1 + $0xa0] sm:$0xff]
  %v45 = vld [vmem:[%s1 + $0xa8] sm:$0xff]
  %v46 = vld [vmem:[%s1 + $0xb0] sm:$0xff]
  %v47 = vld [vmem:[%s1 + $0xb8] sm:$0xff]
  %v48 = vld [vmem:[%s1 + $0xc0] sm:$0xff]
  %v49 = vld [vmem:[%s1 + $0xc8] sm:$0xff]
  %v50 = vld [vmem:[%s1 + $0xd0] sm:$0xff]
  %v51 = vld [vmem:[%s1 + $0xd8] sm:$0xff]
  %v52 = vld [vmem:[%s1 + $0xe0] sm:$0xff]
  %v53 = vld [vmem:[%s1 + $0xe8] sm:$0xff]
  %v54 = vld [vmem:[%s1 + $0xf0] sm:$0xff]
  %v55 = vld [vmem:[%s1 + $0xf8] sm:$0xff]
  %v56 = vld [vmem:[%s1 + $0x100] sm:$0xff]
  %v57 = vld [vmem:[%s1 + $0x108] sm:$0xff]
  %v58 = vld [vmem:[%s1 + $0x110] sm:$0xff]
  %v59 = vld [vmem:[%s1 + $0x118] sm:$0xff]
  %v60 = vld [vmem:[%s1 + $0x120] sm:$0xff]
  %v61 = vld [vmem:[%s1 + $0x128] sm:$0xff]
  %v62 = vld [vmem:[%s1 + $0x130] sm:$0xff]
  %v63 = vld [vmem:[%s1 + $0x138] sm:$0xff]
  %v64 = vld [vmem:[%s1 + $0x140] sm:$0xff]
  %v65 = vld [vmem:[%s1 + $0x148] sm:$0xff]
  %v66 = vld [vmem:[%s1 + $0x150] sm:$0xff]
  %v67 = vld [vmem:[%s1 + $0x158] sm:$0xff]
  %v68 = vld [vmem:[%s1 + $0x160] sm:$0xff]
  %v69 = vld [vmem:[%s1 + $0x168] sm:$0xff]
  %v70 = vld [vmem:[%s1 + $0x170] sm:$0xff]
  %v71 = vld [vmem:[%s1 + $0x178] sm:$0xff]
  %v72 = vld [vmem:[%s1 + $0x180] sm:$0xff]
  %v73 = vld [vmem:[%s1 + $0x188] sm:$0xff]
  %v74 = vld [vmem:[%s1 + $0x190] sm:$0xff]
  %v75 = vld [vmem:[%s1 + $0x198] sm:$0xff]
  %v76 = vld [vmem:[%s1 + $0x1a0] sm:$0xff]
  %v77 = vld [vmem:[%s1 + $0x1a8] sm:$0xff]
  %v78 = vld [vmem:[%s1 + $0x1b0] sm:$0xff]
  %v79 = vld [vmem:[%s1 + $0x1b8] sm:$0xff]
  %v80 = vld [vmem:[%s1 + $0x1c0] sm:$0xff]
  %v81 = vld [vmem:[%s1 + $0x1c8] sm:$0xff]
  %v82 = vld [vmem:[%s1 + $0x1d0] sm:$0xff]
  %v83 = vld [vmem:[%s1 + $0x1d8] sm:$0xff]
  %v84 = vld [vmem:[%s1 + $0x1e0] sm:$0xff]
  %v85 = vld [vmem:[%s1 + $0x1e8] sm:$0xff]
  %v86 = vld [vmem:[%s1 + $0x1f0] sm:$0xff]
  %v87 = vld [vmem:[%s1 + $0x1f8] sm:$0xff]
  %v88 = vld [vmem:[%s1 + $0x200] sm:$0xff]
  %v89 = vld [vmem:[%s1 + $0x208] sm:$0xff]
  %v90 = vld [vmem:[%s1 + $0x210] sm:$0xff]
  %v91 = vld [vmem:[%s1 + $0x218] sm:$0xff]
  %v92 = vld [vmem:[%s1 + $0x220] sm:$0xff]
  %v93 = vld [vmem:[%s1 + $0x228] sm:$0xff]
  %v94 = vld [vmem:[%s1 + $0x230] sm:$0xff]
  %v95 = vld [vmem:[%s1 + $0x238] sm:$0xff]
  %v96 = vld [vmem:[%s1 + $0x240] sm:$0xff]
  %v97 = vld [vmem:[%s1 + $0x248] sm:$0xff]
  %v98 = vld [vmem:[%s1 + $0x250] sm:$0xff]
  %v99 = vld [vmem:[%s1 + $0x258] sm:$0xff]
  %v100 = vld [vmem:[%s1 + $0x260] sm:$0xff]
  %v101 = vld [vmem:[%s1 + $0x268] sm:$0xff]
  %v102 = vld [vmem:[%s1 + $0x270] sm:$0xff]
  %v103 = vld [vmem:[%s1 + $0x278] sm:$0xff]
  %v104 = vld [vmem:[%s1 + $0x280] sm:$0xff]
  %v105 = vld [vmem:[%s1 + $0x288] sm:$0xff]
  %v106 = vld [vmem:[%s1 + $0x290] sm:$0xff]
  %v107 = vld [vmem:[%s1 + $0x298] sm:$0xff]
  %v108 = vld [vmem:[%s1 + $0x2a0] sm:$0xff]
  %v109 = vld [vmem:[%s1 + $0x2a8] sm:$0xff]
  %v110 = vld [vmem:[%s1 + $0x2b0] sm:$0xff]
  %v111 = vld [vmem:[%s1 + $0x2b8] sm:$0xff]
  %v112 = vld [vmem:[%s1 + $0x2c0] sm:$0xff]
  %v113 = vld [vmem:[%s1 + $0x2c8] sm:$0xff]
  %v114 = vld [vmem:[%s1 + $0x2d0] sm:$0xff]
  %v115 = vld [vmem:[%s1 + $0x2d8] sm:$0xff]
  %v116 = vld [vmem:[%s1 + $0x2e0] sm:$0xff]
  %v117 = vld [vmem:[%s1 + $0x2e8] sm:$0xff]
  %v118 = vld [vmem:[%s1 + $0x2f0] sm:$0xff]
  %v119 = vld [vmem:[%s1 + $0x2f8] sm:$0xff]
  %v120 = vld [vmem:[%s1 + $0x300] sm:$0xff]
  %v121 = vld [vmem:[%s1 + $0x308] sm:$0xff]
  %v122 = vld [vmem:[%s1 + $0x310] sm:$0xff]
  %v123 = vld [vmem:[%s1 + $0x318] sm:$0xff]
  %v124 = vld [vmem:[%s1 + $0x320] sm:$0xff]
  %v125 = vld [vmem:[%s1 + $0x328] sm:$0xff]
  %v126 = vld [vmem:[%s1 + $0x330] sm:$0xff]
  %v127 = vld [vmem:[%s1 + $0x338] sm:$0xff]
  %v128 = vld [vmem:[%s1 + $0x340] sm:$0xff]
  %v129 = vld [vmem:[%s1 + $0x348] sm:$0xff]
  %v130 = vld [vmem:[%s1 + $0x350] sm:$0xff]
  %v131 = vld [vmem:[%s1 + $0x358] sm:$0xff]
  %v132 = vld [vmem:[%s1 + $0x360] sm:$0xff]
  %v133 = vld [vmem:[%s1 + $0x368] sm:$0xff]
  %v134 = vld [vmem:[%s1 + $0x370] sm:$0xff]
  %v135 = vld [vmem:[%s1 + $0x378] sm:$0xff]
  %v136 = vld [vmem:[%s1 + $0x380] sm:$0xff]
  %v137 = vld [vmem:[%s1 + $0x388] sm:$0xff]
  %v138 = vld [vmem:[%s1 + $0x390] sm:$0xff]
  %v139 = vld [vmem:[%s1 + $0x398] sm:$0xff]
  %v140 = vld [vmem:[%s1 + $0x3a0] sm:$0xff]
  %v141 = vld [vmem:[%s1 + $0x3a8] sm:$0xff]
  %v142 = vld [vmem:[%s1 + $0x3b0] sm:$0xff]
  %v143 = vld [vmem:[%s1 + $0x3b8] sm:$0xff]
  %v144 = vld [vmem:[%s1 + $0x3c0] sm:$0xff]
  %v145 = vld [vmem:[%s1 + $0x3c8] sm:$0xff]
  %v146 = vld [vmem:[%s1 + $0x3d0] sm:$0xff]
  %v147 = vld [vmem:[%s1 + $0x3d8] sm:$0xff]
  %v148 = vld [vmem:[%s1 + $0x3e0] sm:$0xff]
  %v149 = vld [vmem:[%s1 + $0x3e8] sm:$0xff]
  %v150 = vld [vmem:[%s1 + $0x3f0] sm:$0xff]
  %v151 = vld [vmem:[%s1 + $0x3f8] sm:$0xff]
  %v152 = vld [vmem:[%s1 + $0x400] sm:$0xff]
  %v153 = vld [vmem:[%s1 + $0x408] sm:$0xff]
  %v154 = vld [vmem:[%s1 + $0x410] sm:$0xff]
  %v155 = vld [vmem:[%s1 + $0x418] sm:$0xff]
  %v156 = vld [vmem:[%s1 + $0x420] sm:$0xff]
  %v157 = vld [vmem:[%s1 + $0x428] sm:$0xff]
  %v158 = vld [vmem:[%s1 + $0x430] sm:$0xff]
  %v159 = vld [vmem:[%s1 + $0x438] sm:$0xff]
  %v160 = vld [vmem:[%s1 + $0x440] sm:$0xff]
  %v161 = vld [vmem:[%s1 + $0x448] sm:$0xff]
  %v162 = vld [vmem:[%s1 + $0x450] sm:$0xff]
  %v163 = vld [vmem:[%s1 + $0x458] sm:$0xff]
  %v164 = vld [vmem:[%s1 + $0x460] sm:$0xff]
  %v165 = vld [vmem:[%s1 + $0x468] sm:$0xff]
  %v166 = vld [vmem:[%s1 + $0x470] sm:$0xff]
  %v167 = vld [vmem:[%s1 + $0x478] sm:$0xff]
  %v168 = vld [vmem:[%s1 + $0x480] sm:$0xff]
  %v169 = vld [vmem:[%s1 + $0x488] sm:$0xff]
  %v170 = vld [vmem:[%s1 + $0x490] sm:$0xff]
  %v171 = vld [vmem:[%s1 + $0x498] sm:$0xff]
  %v172 = vld [vmem:[%s1 + $0x4a0] sm:$0xff]
  %v173 = vld [vmem:[%s1 + $0x4a8] sm:$0xff]
  %v174 = vld [vmem:[%s1 + $0x4b0] sm:$0xff]
  %v175 = vld [vmem:[%s1 + $0x4b8] sm:$0xff]
  %v176 = vld [vmem:[%s1 + $0x4c0] sm:$0xff]
  %v177 = vld [vmem:[%s1 + $0x4c8] sm:$0xff]
  %v178 = vld [vmem:[%s1 + $0x4d0] sm:$0xff]
  %v179 = vld [vmem:[%s1 + $0x4d8] sm:$0xff]
  %v180 = vld [vmem:[%s1 + $0x4e0] sm:$0xff]
  %v181 = vld [vmem:[%s1 + $0x4e8] sm:$0xff]
  %v182 = vld [vmem:[%s1 + $0x4f0] sm:$0xff]
  %v183 = vld [vmem:[%s1 + $0x4f8] sm:$0xff]
  %v184 = vld [vmem:[%s2] sm:$0xf]
  %v186 = vlaneseq
  %v187 = vshrl.u32 %v186, 7
  %v188 = vsub.s32 0, %v187
  %v189 = vrot.slane %v184, %v188
  %v190 = vlaneseq
  %v191 = vshrl.u32 %v190, 7
  %v192 = vsub.s32 1, %v191
  %v193 = vrot.slane %v184, %v192
  %v194 = vlaneseq
  %v195 = vshrl.u32 %v194, 7
  %v196 = vsub.s32 2, %v195
  %v197 = vrot.slane %v184, %v196
  %v198 = vlaneseq
  %v199 = vshrl.u32 %v198, 7
  %v200 = vsub.s32 3, %v199
  %v201 = vrot.slane %v184, %v200
  %v209 = vunpack.c.l.b16 %v21
  %v210 = vunpack.c.h.b16 %v21
  %v211 = vunpack.c.l.b16 %v22
  %v212 = vunpack.c.h.b16 %v22
  %v213 = vunpack.c.l.b16 %v23
  %v214 = vpack.c.b16 %v209, %v209
  %v215 = vpack.c.b16 %v210, %v210
  %v216 = vpack.c.b16 %v211, %v211
  %v217 = vpack.c.b16 %v212, %v212
  %v218 = vpack.c.b16 %v213, %v213
  %v384 = vunpack.c.l.b16 %v24
  %v385 = vunpack.c.h.b16 %v24
  %v386 = vunpack.c.l.b16 %v25
  %v387 = vunpack.c.h.b16 %v25
  %v388 = vunpack.c.l.b16 %v26
  %v389 = vunpack.c.h.b16 %v26
  %v390 = vunpack.c.l.b16 %v27
  %v391 = vunpack.c.h.b16 %v27
  %v392 = vunpack.c.l.b16 %v28
  %v393 = vunpack.c.h.b16 %v28
  %v394 = vunpack.c.l.b16 %v29
  %v395 = vunpack.c.h.b16 %v29
  %v396 = vunpack.c.l.b16 %v30
  %v397 = vunpack.c.h.b16 %v30
  %v398 = vunpack.c.l.b16 %v31
  %v399 = vunpack.c.h.b16 %v31
  %v400 = vunpack.c.l.b16 %v32
  %v401 = vunpack.c.h.b16 %v32
  %v402 = vunpack.c.l.b16 %v33
  %v403 = vunpack.c.h.b16 %v33
  %v404 = vunpack.c.l.b16 %v34
  %v405 = vunpack.c.h.b16 %v34
  %v406 = vunpack.c.l.b16 %v35
  %v407 = vunpack.c.h.b16 %v35
  %v408 = vunpack.c.l.b16 %v36
  %v409 = vunpack.c.h.b16 %v36
  %v410 = vunpack.c.l.b16 %v37
  %v411 = vunpack.c.h.b16 %v37
  %v412 = vunpack.c.l.b16 %v38
  %v413 = vunpack.c.h.b16 %v38
  %v414 = vunpack.c.l.b16 %v39
  %v415 = vunpack.c.h.b16 %v39
  %v416 = vunpack.c.l.b16 %v40
  %v417 = vunpack.c.h.b16 %v40
  %v418 = vunpack.c.l.b16 %v41
  %v419 = vunpack.c.h.b16 %v41
  %v420 = vunpack.c.l.b16 %v42
  %v421 = vunpack.c.h.b16 %v42
  %v422 = vunpack.c.l.b16 %v43
  %v423 = vunpack.c.h.b16 %v43
  %v424 = vunpack.c.l.b16 %v44
  %v425 = vunpack.c.h.b16 %v44
  %v426 = vunpack.c.l.b16 %v45
  %v427 = vunpack.c.h.b16 %v45
  %v428 = vunpack.c.l.b16 %v46
  %v429 = vunpack.c.h.b16 %v46
  %v430 = vunpack.c.l.b16 %v47
  %v431 = vunpack.c.h.b16 %v47
  %v432 = vunpack.c.l.b16 %v48
  %v433 = vunpack.c.h.b16 %v48
  %v434 = vunpack.c.l.b16 %v49
  %v435 = vunpack.c.h.b16 %v49
  %v436 = vunpack.c.l.b16 %v50
  %v437 = vunpack.c.h.b16 %v50
  %v438 = vunpack.c.l.b16 %v51
  %v439 = vunpack.c.h.b16 %v51
  %v440 = vunpack.c.l.b16 %v52
  %v441 = vunpack.c.h.b16 %v52
  %v442 = vunpack.c.l.b16 %v53
  %v443 = vunpack.c.h.b16 %v53
  %v444 = vunpack.c.l.b16 %v54
  %v445 = vunpack.c.h.b16 %v54
  %v446 = vunpack.c.l.b16 %v55
  %v447 = vunpack.c.h.b16 %v55
  %v448 = vunpack.c.l.b16 %v56
  %v449 = vunpack.c.h.b16 %v56
  %v450 = vunpack.c.l.b16 %v57
  %v451 = vunpack.c.h.b16 %v57
  %v452 = vunpack.c.l.b16 %v58
  %v453 = vunpack.c.h.b16 %v58
  %v454 = vunpack.c.l.b16 %v59
  %v455 = vunpack.c.h.b16 %v59
  %v456 = vunpack.c.l.b16 %v60
  %v457 = vunpack.c.h.b16 %v60
  %v458 = vunpack.c.l.b16 %v61
  %v459 = vunpack.c.h.b16 %v61
  %v460 = vunpack.c.l.b16 %v62
  %v461 = vunpack.c.h.b16 %v62
  %v462 = vunpack.c.l.b16 %v63
  %v463 = vunpack.c.h.b16 %v63
  %v464 = vunpack.c.l.b16 %v64
  %v465 = vunpack.c.h.b16 %v64
  %v466 = vunpack.c.l.b16 %v65
  %v467 = vunpack.c.h.b16 %v65
  %v468 = vunpack.c.l.b16 %v66
  %v469 = vunpack.c.h.b16 %v66
  %v470 = vunpack.c.l.b16 %v67
  %v471 = vunpack.c.h.b16 %v67
  %v472 = vunpack.c.l.b16 %v68
  %v473 = vunpack.c.h.b16 %v68
  %v474 = vunpack.c.l.b16 %v69
  %v475 = vunpack.c.h.b16 %v69
  %v476 = vunpack.c.l.b16 %v70
  %v477 = vunpack.c.h.b16 %v70
  %v478 = vunpack.c.l.b16 %v71
  %v479 = vunpack.c.h.b16 %v71
  %v480 = vunpack.c.l.b16 %v72
  %v481 = vunpack.c.h.b16 %v72
  %v482 = vunpack.c.l.b16 %v73
  %v483 = vunpack.c.h.b16 %v73
  %v484 = vunpack.c.l.b16 %v74
  %v485 = vunpack.c.h.b16 %v74
  %v486 = vunpack.c.l.b16 %v75
  %v487 = vunpack.c.h.b16 %v75
  %v488 = vunpack.c.l.b16 %v76
  %v489 = vunpack.c.h.b16 %v76
  %v490 = vunpack.c.l.b16 %v77
  %v491 = vunpack.c.h.b16 %v77
  %v492 = vunpack.c.l.b16 %v78
  %v493 = vunpack.c.h.b16 %v78
  %v494 = vunpack.c.l.b16 %v79
  %v495 = vunpack.c.h.b16 %v79
  %v496 = vunpack.c.l.b16 %v80
  %v497 = vunpack.c.h.b16 %v80
  %v498 = vunpack.c.l.b16 %v81
  %v499 = vunpack.c.h.b16 %v81
  %v500 = vunpack.c.l.b16 %v82
  %v501 = vunpack.c.h.b16 %v82
  %v502 = vunpack.c.l.b16 %v83
  %v503 = vunpack.c.h.b16 %v83
  %v504 = vunpack.c.l.b16 %v84
  %v505 = vunpack.c.h.b16 %v84
  %v506 = vunpack.c.l.b16 %v85
  %v507 = vunpack.c.h.b16 %v85
  %v508 = vunpack.c.l.b16 %v86
  %v509 = vunpack.c.h.b16 %v86
  %v510 = vunpack.c.l.b16 %v87
  %v511 = vunpack.c.h.b16 %v87
  %v512 = vunpack.c.l.b16 %v88
  %v513 = vunpack.c.h.b16 %v88
  %v514 = vunpack.c.l.b16 %v89
  %v515 = vunpack.c.h.b16 %v89
  %v516 = vunpack.c.l.b16 %v90
  %v517 = vunpack.c.h.b16 %v90
  %v518 = vunpack.c.l.b16 %v91
  %v519 = vunpack.c.h.b16 %v91
  %v520 = vunpack.c.l.b16 %v92
  %v521 = vunpack.c.h.b16 %v92
  %v522 = vunpack.c.l.b16 %v93
  %v523 = vunpack.c.h.b16 %v93
  %v524 = vunpack.c.l.b16 %v94
  %v525 = vunpack.c.h.b16 %v94
  %v526 = vunpack.c.l.b16 %v95
  %v527 = vunpack.c.h.b16 %v95
  %v528 = vunpack.c.l.b16 %v96
  %v529 = vunpack.c.h.b16 %v96
  %v530 = vunpack.c.l.b16 %v97
  %v531 = vunpack.c.h.b16 %v97
  %v532 = vunpack.c.l.b16 %v98
  %v533 = vunpack.c.h.b16 %v98
  %v534 = vunpack.c.l.b16 %v99
  %v535 = vunpack.c.h.b16 %v99
  %v536 = vunpack.c.l.b16 %v100
  %v537 = vunpack.c.h.b16 %v100
  %v538 = vunpack.c.l.b16 %v101
  %v539 = vunpack.c.h.b16 %v101
  %v540 = vunpack.c.l.b16 %v102
  %v541 = vunpack.c.h.b16 %v102
  %v542 = vunpack.c.l.b16 %v103
  %v543 = vunpack.c.h.b16 %v103
  %v544 = vunpack.c.l.b16 %v104
  %v545 = vunpack.c.h.b16 %v104
  %v546 = vunpack.c.l.b16 %v105
  %v547 = vunpack.c.h.b16 %v105
  %v548 = vunpack.c.l.b16 %v106
  %v549 = vunpack.c.h.b16 %v106
  %v550 = vunpack.c.l.b16 %v107
  %v551 = vunpack.c.h.b16 %v107
  %v552 = vunpack.c.l.b16 %v108
  %v553 = vunpack.c.h.b16 %v108
  %v554 = vunpack.c.l.b16 %v109
  %v555 = vunpack.c.h.b16 %v109
  %v556 = vunpack.c.l.b16 %v110
  %v557 = vunpack.c.h.b16 %v110
  %v558 = vunpack.c.l.b16 %v111
  %v559 = vunpack.c.h.b16 %v111
  %v560 = vunpack.c.l.b16 %v112
  %v561 = vunpack.c.h.b16 %v112
  %v562 = vunpack.c.l.b16 %v113
  %v563 = vunpack.c.h.b16 %v113
  %v564 = vunpack.c.l.b16 %v114
  %v565 = vunpack.c.h.b16 %v114
  %v566 = vunpack.c.l.b16 %v115
  %v567 = vunpack.c.h.b16 %v115
  %v568 = vunpack.c.l.b16 %v116
  %v569 = vunpack.c.h.b16 %v116
  %v570 = vunpack.c.l.b16 %v117
  %v571 = vunpack.c.h.b16 %v117
  %v572 = vunpack.c.l.b16 %v118
  %v573 = vunpack.c.h.b16 %v118
  %v574 = vunpack.c.l.b16 %v119
  %v575 = vunpack.c.h.b16 %v119
  %v576 = vunpack.c.l.b16 %v120
  %v577 = vunpack.c.h.b16 %v120
  %v578 = vunpack.c.l.b16 %v121
  %v579 = vunpack.c.h.b16 %v121
  %v580 = vunpack.c.l.b16 %v122
  %v581 = vunpack.c.h.b16 %v122
  %v582 = vunpack.c.l.b16 %v123
  %v583 = vunpack.c.h.b16 %v123
  %v584 = vunpack.c.l.b16 %v124
  %v585 = vunpack.c.h.b16 %v124
  %v586 = vunpack.c.l.b16 %v125
  %v587 = vunpack.c.h.b16 %v125
  %v588 = vunpack.c.l.b16 %v126
  %v589 = vunpack.c.h.b16 %v126
  %v590 = vunpack.c.l.b16 %v127
  %v591 = vunpack.c.h.b16 %v127
  %v592 = vunpack.c.l.b16 %v128
  %v593 = vunpack.c.h.b16 %v128
  %v594 = vunpack.c.l.b16 %v129
  %v595 = vunpack.c.h.b16 %v129
  %v596 = vunpack.c.l.b16 %v130
  %v597 = vunpack.c.h.b16 %v130
  %v598 = vunpack.c.l.b16 %v131
  %v599 = vunpack.c.h.b16 %v131
  %v600 = vunpack.c.l.b16 %v132
  %v601 = vunpack.c.h.b16 %v132
  %v602 = vunpack.c.l.b16 %v133
  %v603 = vunpack.c.h.b16 %v133
  %v604 = vunpack.c.l.b16 %v134
  %v605 = vunpack.c.h.b16 %v134
  %v606 = vunpack.c.l.b16 %v135
  %v607 = vunpack.c.h.b16 %v135
  %v608 = vunpack.c.l.b16 %v136
  %v609 = vunpack.c.h.b16 %v136
  %v610 = vunpack.c.l.b16 %v137
  %v611 = vunpack.c.h.b16 %v137
  %v612 = vunpack.c.l.b16 %v138
  %v613 = vunpack.c.h.b16 %v138
  %v614 = vunpack.c.l.b16 %v139
  %v615 = vunpack.c.h.b16 %v139
  %v616 = vunpack.c.l.b16 %v140
  %v617 = vunpack.c.h.b16 %v140
  %v618 = vunpack.c.l.b16 %v141
  %v619 = vunpack.c.h.b16 %v141
  %v620 = vunpack.c.l.b16 %v142
  %v621 = vunpack.c.h.b16 %v142
  %v622 = vunpack.c.l.b16 %v143
  %v623 = vunpack.c.h.b16 %v143
  %v624 = vunpack.c.l.b16 %v144
  %v625 = vunpack.c.h.b16 %v144
  %v626 = vunpack.c.l.b16 %v145
  %v627 = vunpack.c.h.b16 %v145
  %v628 = vunpack.c.l.b16 %v146
  %v629 = vunpack.c.h.b16 %v146
  %v630 = vunpack.c.l.b16 %v147
  %v631 = vunpack.c.h.b16 %v147
  %v632 = vunpack.c.l.b16 %v148
  %v633 = vunpack.c.h.b16 %v148
  %v634 = vunpack.c.l.b16 %v149
  %v635 = vunpack.c.h.b16 %v149
  %v636 = vunpack.c.l.b16 %v150
  %v637 = vunpack.c.h.b16 %v150
  %v638 = vunpack.c.l.b16 %v151
  %v639 = vunpack.c.h.b16 %v151
  %v640 = vunpack.c.l.b16 %v152
  %v641 = vunpack.c.h.b16 %v152
  %v642 = vunpack.c.l.b16 %v153
  %v643 = vunpack.c.h.b16 %v153
  %v644 = vunpack.c.l.b16 %v154
  %v645 = vunpack.c.h.b16 %v154
  %v646 = vunpack.c.l.b16 %v155
  %v647 = vunpack.c.h.b16 %v155
  %v648 = vunpack.c.l.b16 %v156
  %v649 = vunpack.c.h.b16 %v156
  %v650 = vunpack.c.l.b16 %v157
  %v651 = vunpack.c.h.b16 %v157
  %v652 = vunpack.c.l.b16 %v158
  %v653 = vunpack.c.h.b16 %v158
  %v654 = vunpack.c.l.b16 %v159
  %v655 = vunpack.c.h.b16 %v159
  %v656 = vunpack.c.l.b16 %v160
  %v657 = vunpack.c.h.b16 %v160
  %v658 = vunpack.c.l.b16 %v161
  %v659 = vunpack.c.h.b16 %v161
  %v660 = vunpack.c.l.b16 %v162
  %v661 = vunpack.c.h.b16 %v162
  %v662 = vunpack.c.l.b16 %v163
  %v663 = vunpack.c.h.b16 %v163
  %v664 = vunpack.c.l.b16 %v164
  %v665 = vunpack.c.h.b16 %v164
  %v666 = vunpack.c.l.b16 %v165
  %v667 = vunpack.c.h.b16 %v165
  %v668 = vunpack.c.l.b16 %v166
  %v669 = vunpack.c.h.b16 %v166
  %v670 = vunpack.c.l.b16 %v167
  %v671 = vunpack.c.h.b16 %v167
  %v672 = vunpack.c.l.b16 %v168
  %v673 = vunpack.c.h.b16 %v168
  %v674 = vunpack.c.l.b16 %v169
  %v675 = vunpack.c.h.b16 %v169
  %v676 = vunpack.c.l.b16 %v170
  %v677 = vunpack.c.h.b16 %v170
  %v678 = vunpack.c.l.b16 %v171
  %v679 = vunpack.c.h.b16 %v171
  %v680 = vunpack.c.l.b16 %v172
  %v681 = vunpack.c.h.b16 %v172
  %v682 = vunpack.c.l.b16 %v173
  %v683 = vunpack.c.h.b16 %v173
  %v684 = vunpack.c.l.b16 %v174
  %v685 = vunpack.c.h.b16 %v174
  %v686 = vunpack.c.l.b16 %v175
  %v687 = vunpack.c.h.b16 %v175
  %v688 = vunpack.c.l.b16 %v176
  %v689 = vunpack.c.h.b16 %v176
  %v690 = vunpack.c.l.b16 %v177
  %v691 = vunpack.c.h.b16 %v177
  %v692 = vunpack.c.l.b16 %v178
  %v693 = vunpack.c.h.b16 %v178
  %v694 = vunpack.c.l.b16 %v179
  %v695 = vunpack.c.h.b16 %v179
  %v696 = vunpack.c.l.b16 %v180
  %v697 = vunpack.c.h.b16 %v180
  %v698 = vunpack.c.l.b16 %v181
  %v699 = vunpack.c.h.b16 %v181
  %v700 = vunpack.c.l.b16 %v182
  %v701 = vunpack.c.h.b16 %v182
  %v702 = vunpack.c.l.b16 %v183
  %v703 = vunpack.c.h.b16 %v183
  %v704 = vpack.c.b16 %v388, %v384
  %v705 = vpack.c.b16 %v389, %v385
  %v706 = vpack.c.b16 %v390, %v386
  %v707 = vpack.c.b16 %v391, %v387
  %v708 = vpack.c.b16 %v396, %v392
  %v709 = vpack.c.b16 %v397, %v393
  %v710 = vpack.c.b16 %v398, %v394
  %v711 = vpack.c.b16 %v399, %v395
  %v712 = vpack.c.b16 %v404, %v400
  %v713 = vpack.c.b16 %v405, %v401
  %v714 = vpack.c.b16 %v406, %v402
  %v715 = vpack.c.b16 %v407, %v403
  %v716 = vpack.c.b16 %v412, %v408
  %v717 = vpack.c.b16 %v413, %v409
  %v718 = vpack.c.b16 %v414, %v410
  %v719 = vpack.c.b16 %v415, %v411
  %v720 = vpack.c.b16 %v420, %v416
  %v721 = vpack.c.b16 %v421, %v417
  %v722 = vpack.c.b16 %v422, %v418
  %v723 = vpack.c.b16 %v423, %v419
  %v724 = vpack.c.b16 %v428, %v424
  %v725 = vpack.c.b16 %v429, %v425
  %v726 = vpack.c.b16 %v430, %v426
  %v727 = vpack.c.b16 %v431, %v427
  %v728 = vpack.c.b16 %v436, %v432
  %v729 = vpack.c.b16 %v437, %v433
  %v730 = vpack.c.b16 %v438, %v434
  %v731 = vpack.c.b16 %v439, %v435
  %v732 = vpack.c.b16 %v444, %v440
  %v733 = vpack.c.b16 %v445, %v441
  %v734 = vpack.c.b16 %v446, %v442
  %v735 = vpack.c.b16 %v447, %v443
  %v736 = vpack.c.b16 %v452, %v448
  %v737 = vpack.c.b16 %v453, %v449
  %v738 = vpack.c.b16 %v454, %v450
  %v739 = vpack.c.b16 %v455, %v451
  %v740 = vpack.c.b16 %v460, %v456
  %v741 = vpack.c.b16 %v461, %v457
  %v742 = vpack.c.b16 %v462, %v458
  %v743 = vpack.c.b16 %v463, %v459
  %v744 = vpack.c.b16 %v468, %v464
  %v745 = vpack.c.b16 %v469, %v465
  %v746 = vpack.c.b16 %v470, %v466
  %v747 = vpack.c.b16 %v471, %v467
  %v748 = vpack.c.b16 %v476, %v472
  %v749 = vpack.c.b16 %v477, %v473
  %v750 = vpack.c.b16 %v478, %v474
  %v751 = vpack.c.b16 %v479, %v475
  %v752 = vpack.c.b16 %v484, %v480
  %v753 = vpack.c.b16 %v485, %v481
  %v754 = vpack.c.b16 %v486, %v482
  %v755 = vpack.c.b16 %v487, %v483
  %v756 = vpack.c.b16 %v492, %v488
  %v757 = vpack.c.b16 %v493, %v489
  %v758 = vpack.c.b16 %v494, %v490
  %v759 = vpack.c.b16 %v495, %v491
  %v760 = vpack.c.b16 %v500, %v496
  %v761 = vpack.c.b16 %v501, %v497
  %v762 = vpack.c.b16 %v502, %v498
  %v763 = vpack.c.b16 %v503, %v499
  %v764 = vpack.c.b16 %v508, %v504
  %v765 = vpack.c.b16 %v509, %v505
  %v766 = vpack.c.b16 %v510, %v506
  %v767 = vpack.c.b16 %v511, %v507
  %v768 = vpack.c.b16 %v516, %v512
  %v769 = vpack.c.b16 %v517, %v513
  %v770 = vpack.c.b16 %v518, %v514
  %v771 = vpack.c.b16 %v519, %v515
  %v772 = vpack.c.b16 %v524, %v520
  %v773 = vpack.c.b16 %v525, %v521
  %v774 = vpack.c.b16 %v526, %v522
  %v775 = vpack.c.b16 %v527, %v523
  %v776 = vpack.c.b16 %v532, %v528
  %v777 = vpack.c.b16 %v533, %v529
  %v778 = vpack.c.b16 %v534, %v530
  %v779 = vpack.c.b16 %v535, %v531
  %v780 = vpack.c.b16 %v540, %v536
  %v781 = vpack.c.b16 %v541, %v537
  %v782 = vpack.c.b16 %v542, %v538
  %v783 = vpack.c.b16 %v543, %v539
  %v784 = vpack.c.b16 %v548, %v544
  %v785 = vpack.c.b16 %v549, %v545
  %v786 = vpack.c.b16 %v550, %v546
  %v787 = vpack.c.b16 %v551, %v547
  %v788 = vpack.c.b16 %v556, %v552
  %v789 = vpack.c.b16 %v557, %v553
  %v790 = vpack.c.b16 %v558, %v554
  %v791 = vpack.c.b16 %v559, %v555
  %v792 = vpack.c.b16 %v564, %v560
  %v793 = vpack.c.b16 %v565, %v561
  %v794 = vpack.c.b16 %v566, %v562
  %v795 = vpack.c.b16 %v567, %v563
  %v796 = vpack.c.b16 %v572, %v568
  %v797 = vpack.c.b16 %v573, %v569
  %v798 = vpack.c.b16 %v574, %v570
  %v799 = vpack.c.b16 %v575, %v571
  %v800 = vpack.c.b16 %v580, %v576
  %v801 = vpack.c.b16 %v581, %v577
  %v802 = vpack.c.b16 %v582, %v578
  %v803 = vpack.c.b16 %v583, %v579
  %v804 = vpack.c.b16 %v588, %v584
  %v805 = vpack.c.b16 %v589, %v585
  %v806 = vpack.c.b16 %v590, %v586
  %v807 = vpack.c.b16 %v591, %v587
  %v808 = vpack.c.b16 %v596, %v592
  %v809 = vpack.c.b16 %v597, %v593
  %v810 = vpack.c.b16 %v598, %v594
  %v811 = vpack.c.b16 %v599, %v595
  %v812 = vpack.c.b16 %v604, %v600
  %v813 = vpack.c.b16 %v605, %v601
  %v814 = vpack.c.b16 %v606, %v602
  %v815 = vpack.c.b16 %v607, %v603
  %v816 = vpack.c.b16 %v612, %v608
  %v817 = vpack.c.b16 %v613, %v609
  %v818 = vpack.c.b16 %v614, %v610
  %v819 = vpack.c.b16 %v615, %v611
  %v820 = vpack.c.b16 %v620, %v616
  %v821 = vpack.c.b16 %v621, %v617
  %v822 = vpack.c.b16 %v622, %v618
  %v823 = vpack.c.b16 %v623, %v619
  %v824 = vpack.c.b16 %v628, %v624
  %v825 = vpack.c.b16 %v629, %v625
  %v826 = vpack.c.b16 %v630, %v626
  %v827 = vpack.c.b16 %v631, %v627
  %v828 = vpack.c.b16 %v636, %v632
  %v829 = vpack.c.b16 %v637, %v633
  %v830 = vpack.c.b16 %v638, %v634
  %v831 = vpack.c.b16 %v639, %v635
  %v832 = vpack.c.b16 %v644, %v640
  %v833 = vpack.c.b16 %v645, %v641
  %v834 = vpack.c.b16 %v646, %v642
  %v835 = vpack.c.b16 %v647, %v643
  %v836 = vpack.c.b16 %v652, %v648
  %v837 = vpack.c.b16 %v653, %v649
  %v838 = vpack.c.b16 %v654, %v650
  %v839 = vpack.c.b16 %v655, %v651
  %v840 = vpack.c.b16 %v660, %v656
  %v841 = vpack.c.b16 %v661, %v657
  %v842 = vpack.c.b16 %v662, %v658
  %v843 = vpack.c.b16 %v663, %v659
  %v844 = vpack.c.b16 %v668, %v664
  %v845 = vpack.c.b16 %v669, %v665
  %v846 = vpack.c.b16 %v670, %v666
  %v847 = vpack.c.b16 %v671, %v667
  %v848 = vpack.c.b16 %v676, %v672
  %v849 = vpack.c.b16 %v677, %v673
  %v850 = vpack.c.b16 %v678, %v674
  %v851 = vpack.c.b16 %v679, %v675
  %v852 = vpack.c.b16 %v684, %v680
  %v853 = vpack.c.b16 %v685, %v681
  %v854 = vpack.c.b16 %v686, %v682
  %v855 = vpack.c.b16 %v687, %v683
  %v856 = vpack.c.b16 %v692, %v688
  %v857 = vpack.c.b16 %v693, %v689
  %v858 = vpack.c.b16 %v694, %v690
  %v859 = vpack.c.b16 %v695, %v691
  %v860 = vpack.c.b16 %v700, %v696
  %v861 = vpack.c.b16 %v701, %v697
  %v862 = vpack.c.b16 %v702, %v698
  %v863 = vpack.c.b16 %v703, %v699
  %1024 = vmatprep.subr.bf16.mxu0 %v705
  %1025 = vmatpush1.bf16.msra.mxu0 %v704
  %1026 = vmatprep.subr.bf16.mxu0 %v709
  %1027 = vmatpush1.bf16.msra.mxu0 %v708
  %1028 = vmatprep.subr.bf16.mxu0 %v713
  %1029 = vmatpush1.bf16.msra.mxu0 %v712
  %1030 = vmatprep.subr.bf16.mxu0 %v717
  %1031 = vmatpush1.bf16.msra.mxu0 %v716
  %1032 = vmatprep.subr.bf16.mxu0 %v721
  %1033 = vmatpush1.bf16.msra.mxu0 %v720
  %1034 = vmatprep.subr.bf16.mxu0 %v725
  %1035 = vmatpush1.bf16.msra.mxu0 %v724
  %1036 = vmatprep.subr.bf16.mxu0 %v729
  %1037 = vmatpush1.bf16.msra.mxu0 %v728
  %1038 = vmatprep.subr.bf16.mxu0 %v733
  %1039 = vmatpush1.bf16.msra.mxu0 %v732
  %1040 = vmatprep.subr.bf16.mxu0 %v737
  %1041 = vmatpush1.bf16.msra.mxu0 %v736
  %1042 = vmatprep.subr.bf16.mxu0 %v741
  %1043 = vmatpush1.bf16.msra.mxu0 %v740
  %1044 = vmatprep.subr.bf16.mxu0 %v745
  %1045 = vmatpush1.bf16.msra.mxu0 %v744
  %1046 = vmatprep.subr.bf16.mxu0 %v749
  %1047 = vmatpush1.bf16.msra.mxu0 %v748
  %1048 = vmatprep.subr.bf16.mxu0 %v753
  %1049 = vmatpush1.bf16.msra.mxu0 %v752
  %1050 = vmatprep.subr.bf16.mxu0 %v757
  %1051 = vmatpush1.bf16.msra.mxu0 %v756
  %1052 = vmatprep.subr.bf16.mxu0 %v761
  %1053 = vmatpush1.bf16.msra.mxu0 %v760
  %1054 = vmatprep.subr.bf16.mxu0 %v765
  %1055 = vmatpush1.bf16.msra.mxu0 %v764
  %1056 = vmatprep.mubr.bf16.mxu0 %v215
  %1057 = vmatmul.mubr.bf16.gmra.mrb[0].mxu0 %v214
  %v1058 = vpop.f32.mrb[0].mxu0
  %v1059 = vadd.f32 %v189, %v1058
  %v1060 = vpop.f32.mrb[0].mxu0
  %v1061 = vadd.f32 %v193, %v1060
  %v1062 = vpop.f32.mrb[0].mxu0
  %v1063 = vpop.f32.mrb[0].mxu0
  %1064 = vdwg.mxu0
  %1065 = vmatprep.subr.bf16.mxu0 %v769
  %1066 = vmatpush1.bf16.msra.mxu0 %v768
  %1067 = vmatprep.subr.bf16.mxu0 %v773
  %1068 = vmatpush1.bf16.msra.mxu0 %v772
  %1069 = vmatprep.subr.bf16.mxu0 %v777
  %1070 = vmatpush1.bf16.msra.mxu0 %v776
  %1071 = vmatprep.subr.bf16.mxu0 %v781
  %1072 = vmatpush1.bf16.msra.mxu0 %v780
  %1073 = vmatprep.subr.bf16.mxu0 %v785
  %1074 = vmatpush1.bf16.msra.mxu0 %v784
  %1075 = vmatprep.subr.bf16.mxu0 %v789
  %1076 = vmatpush1.bf16.msra.mxu0 %v788
  %1077 = vmatprep.subr.bf16.mxu0 %v793
  %1078 = vmatpush1.bf16.msra.mxu0 %v792
  %1079 = vmatprep.subr.bf16.mxu0 %v797
  %1080 = vmatpush1.bf16.msra.mxu0 %v796
  %1081 = vmatprep.subr.bf16.mxu0 %v801
  %1082 = vmatpush1.bf16.msra.mxu0 %v800
  %1083 = vmatprep.subr.bf16.mxu0 %v805
  %1084 = vmatpush1.bf16.msra.mxu0 %v804
  %1085 = vmatprep.subr.bf16.mxu0 %v809
  %1086 = vmatpush1.bf16.msra.mxu0 %v808
  %1087 = vmatprep.subr.bf16.mxu0 %v813
  %1088 = vmatpush1.bf16.msra.mxu0 %v812
  %1089 = vmatprep.subr.bf16.mxu0 %v817
  %1090 = vmatpush1.bf16.msra.mxu0 %v816
  %1091 = vmatprep.subr.bf16.mxu0 %v821
  %1092 = vmatpush1.bf16.msra.mxu0 %v820
  %1093 = vmatprep.subr.bf16.mxu0 %v825
  %1094 = vmatpush1.bf16.msra.mxu0 %v824
  %1095 = vmatprep.subr.bf16.mxu0 %v829
  %1096 = vmatpush1.bf16.msra.mxu0 %v828
  %1097 = vmatprep.mubr.bf16.mxu0 %v217
  %1098 = vmatmul.mubr.bf16.gmra.mrb[0].mxu0 %v216
  %v1099 = vpop.f32.mrb[0].mxu0
  %v1100 = vadd.f32 %v1059, %v1099
  %v1101 = vpop.f32.mrb[0].mxu0
  %v1102 = vadd.f32 %v1061, %v1101
  %v1103 = vpop.f32.mrb[0].mxu0
  %v1104 = vpop.f32.mrb[0].mxu0
  %1105 = vdwg.mxu0
  %1106 = vmatprep.subr.bf16.mxu0 %v833
  %1107 = vmatpush1.bf16.msra.mxu0 %v832
  %1108 = vmatprep.subr.bf16.mxu0 %v837
  %1109 = vmatpush1.bf16.msra.mxu0 %v836
  %1110 = vmatprep.subr.bf16.mxu0 %v841
  %1111 = vmatpush1.bf16.msra.mxu0 %v840
  %1112 = vmatprep.subr.bf16.mxu0 %v845
  %1113 = vmatpush1.bf16.msra.mxu0 %v844
  %1114 = vmatprep.subr.bf16.mxu0 %v849
  %1115 = vmatpush1.bf16.msra.mxu0 %v848
  %1116 = vmatprep.subr.bf16.mxu0 %v853
  %1117 = vmatpush1.bf16.msra.mxu0 %v852
  %1118 = vmatprep.subr.bf16.mxu0 %v857
  %1119 = vmatpush1.bf16.msra.mxu0 %v856
  %1120 = vmatprep.subr.bf16.mxu0 %v861
  %1121 = vmatpush1.bf16.msra.mxu0 %v860
  %1122 = vmatprep.subr.bf16.mxu0 0
  %1123 = vmatpush1.bf16.msra.mxu0 0
  %1124 = vmatprep.subr.bf16.mxu0 0
  %1125 = vmatpush1.bf16.msra.mxu0 0
  %1126 = vmatprep.subr.bf16.mxu0 0
  %1127 = vmatpush1.bf16.msra.mxu0 0
  %1128 = vmatprep.subr.bf16.mxu0 0
  %1129 = vmatpush1.bf16.msra.mxu0 0
  %1130 = vmatprep.subr.bf16.mxu0 0
  %1131 = vmatpush1.bf16.msra.mxu0 0
  %1132 = vmatprep.subr.bf16.mxu0 0
  %1133 = vmatpush1.bf16.msra.mxu0 0
  %1134 = vmatprep.subr.bf16.mxu0 0
  %1135 = vmatpush1.bf16.msra.mxu0 0
  %1136 = vmatprep.subr.bf16.mxu0 0
  %1137 = vmatpush1.bf16.msra.mxu0 0
  %1138 = vmatprep.mubr.bf16.mxu0 0
  %1139 = vmatmul.mubr.bf16.gmra.mrb[0].mxu0 %v218
  %v1140 = vpop.f32.mrb[0].mxu0
  %v1141 = vadd.f32 %v1100, %v1140
  %v1142 = vpop.f32.mrb[0].mxu0
  %v1143 = vadd.f32 %v1102, %v1142
  %v1144 = vpop.f32.mrb[0].mxu0
  %v1145 = vpop.f32.mrb[0].mxu0
  %1146 = vdwg.mxu0
  %1147 = vmatprep.subr.bf16.mxu0 %v707
  %1148 = vmatpush1.bf16.msra.mxu0 %v706
  %1149 = vmatprep.subr.bf16.mxu0 %v711
  %1150 = vmatpush1.bf16.msra.mxu0 %v710
  %1151 = vmatprep.subr.bf16.mxu0 %v715
  %1152 = vmatpush1.bf16.msra.mxu0 %v714
  %1153 = vmatprep.subr.bf16.mxu0 %v719
  %1154 = vmatpush1.bf16.msra.mxu0 %v718
  %1155 = vmatprep.subr.bf16.mxu0 %v723
  %1156 = vmatpush1.bf16.msra.mxu0 %v722
  %1157 = vmatprep.subr.bf16.mxu0 %v727
  %1158 = vmatpush1.bf16.msra.mxu0 %v726
  %1159 = vmatprep.subr.bf16.mxu0 %v731
  %1160 = vmatpush1.bf16.msra.mxu0 %v730
  %1161 = vmatprep.subr.bf16.mxu0 %v735
  %1162 = vmatpush1.bf16.msra.mxu0 %v734
  %1163 = vmatprep.subr.bf16.mxu0 %v739
  %1164 = vmatpush1.bf16.msra.mxu0 %v738
  %1165 = vmatprep.subr.bf16.mxu0 %v743
  %1166 = vmatpush1.bf16.msra.mxu0 %v742
  %1167 = vmatprep.subr.bf16.mxu0 %v747
  %1168 = vmatpush1.bf16.msra.mxu0 %v746
  %1169 = vmatprep.subr.bf16.mxu0 %v751
  %1170 = vmatpush1.bf16.msra.mxu0 %v750
  %1171 = vmatprep.subr.bf16.mxu0 %v755
  %1172 = vmatpush1.bf16.msra.mxu0 %v754
  %1173 = vmatprep.subr.bf16.mxu0 %v759
  %1174 = vmatpush1.bf16.msra.mxu0 %v758
  %1175 = vmatprep.subr.bf16.mxu0 %v763
  %1176 = vmatpush1.bf16.msra.mxu0 %v762
  %1177 = vmatprep.subr.bf16.mxu0 %v767
  %1178 = vmatpush1.bf16.msra.mxu0 %v766
  %1179 = vmatprep.mubr.bf16.mxu0 %v215
  %1180 = vmatmul.mubr.bf16.gmra.mrb[0].mxu0 %v214
  %v1181 = vpop.f32.mrb[0].mxu0
  %v1182 = vadd.f32 %v197, %v1181
  %v1183 = vpop.f32.mrb[0].mxu0
  %v1184 = vadd.f32 %v201, %v1183
  %v1185 = vpop.f32.mrb[0].mxu0
  %v1186 = vpop.f32.mrb[0].mxu0
  %1187 = vdwg.mxu0
  %1188 = vmatprep.subr.bf16.mxu0 %v771
  %1189 = vmatpush1.bf16.msra.mxu0 %v770
  %1190 = vmatprep.subr.bf16.mxu0 %v775
  %1191 = vmatpush1.bf16.msra.mxu0 %v774
  %1192 = vmatprep.subr.bf16.mxu0 %v779
  %1193 = vmatpush1.bf16.msra.mxu0 %v778
  %1194 = vmatprep.subr.bf16.mxu0 %v783
  %1195 = vmatpush1.bf16.msra.mxu0 %v782
  %1196 = vmatprep.subr.bf16.mxu0 %v787
  %1197 = vmatpush1.bf16.msra.mxu0 %v786
  %1198 = vmatprep.subr.bf16.mxu0 %v791
  %1199 = vmatpush1.bf16.msra.mxu0 %v790
  %1200 = vmatprep.subr.bf16.mxu0 %v795
  %1201 = vmatpush1.bf16.msra.mxu0 %v794
  %1202 = vmatprep.subr.bf16.mxu0 %v799
  %1203 = vmatpush1.bf16.msra.mxu0 %v798
  %1204 = vmatprep.subr.bf16.mxu0 %v803
  %1205 = vmatpush1.bf16.msra.mxu0 %v802
  %1206 = vmatprep.subr.bf16.mxu0 %v807
  %1207 = vmatpush1.bf16.msra.mxu0 %v806
  %1208 = vmatprep.subr.bf16.mxu0 %v811
  %1209 = vmatpush1.bf16.msra.mxu0 %v810
  %1210 = vmatprep.subr.bf16.mxu0 %v815
  %1211 = vmatpush1.bf16.msra.mxu0 %v814
  %1212 = vmatprep.subr.bf16.mxu0 %v819
  %1213 = vmatpush1.bf16.msra.mxu0 %v818
  %1214 = vmatprep.subr.bf16.mxu0 %v823
  %1215 = vmatpush1.bf16.msra.mxu0 %v822
  %1216 = vmatprep.subr.bf16.mxu0 %v827
  %1217 = vmatpush1.bf16.msra.mxu0 %v826
  %1218 = vmatprep.subr.bf16.mxu0 %v831
  %1219 = vmatpush1.bf16.msra.mxu0 %v830
  %1220 = vmatprep.mubr.bf16.mxu0 %v217
  %1221 = vmatmul.mubr.bf16.gmra.mrb[0].mxu0 %v216
  %v1222 = vpop.f32.mrb[0].mxu0
  %v1223 = vadd.f32 %v1182, %v1222
  %v1224 = vpop.f32.mrb[0].mxu0
  %v1225 = vadd.f32 %v1184, %v1224
  %v1226 = vpop.f32.mrb[0].mxu0
  %v1227 = vpop.f32.mrb[0].mxu0
  %1228 = vdwg.mxu0
  %1229 = vmatprep.subr.bf16.mxu0 %v835
  %1230 = vmatpush1.bf16.msra.mxu0 %v834
  %1231 = vmatprep.subr.bf16.mxu0 %v839
  %1232 = vmatpush1.bf16.msra.mxu0 %v838
  %1233 = vmatprep.subr.bf16.mxu0 %v843
  %1234 = vmatpush1.bf16.msra.mxu0 %v842
  %1235 = vmatprep.subr.bf16.mxu0 %v847
  %1236 = vmatpush1.bf16.msra.mxu0 %v846
  %1237 = vmatprep.subr.bf16.mxu0 %v851
  %1238 = vmatpush1.bf16.msra.mxu0 %v850
  %1239 = vmatprep.subr.bf16.mxu0 %v855
  %1240 = vmatpush1.bf16.msra.mxu0 %v854
  %1241 = vmatprep.subr.bf16.mxu0 %v859
  %1242 = vmatpush1.bf16.msra.mxu0 %v858
  %1243 = vmatprep.subr.bf16.mxu0 %v863
  %1244 = vmatpush1.bf16.msra.mxu0 %v862
  %1245 = vmatprep.subr.bf16.mxu0 0
  %1246 = vmatpush1.bf16.msra.mxu0 0
  %1247 = vmatprep.subr.bf16.mxu0 0
  %1248 = vmatpush1.bf16.msra.mxu0 0
  %1249 = vmatprep.subr.bf16.mxu0 0
  %1250 = vmatpush1.bf16.msra.mxu0 0
  %1251 = vmatprep.subr.bf16.mxu0 0
  %1252 = vmatpush1.bf16.msra.mxu0 0
  %1253 = vmatprep.subr.bf16.mxu0 0
  %1254 = vmatpush1.bf16.msra.mxu0 0
  %1255 = vmatprep.subr.bf16.mxu0 0
  %1256 = vmatpush1.bf16.msra.mxu0 0
  %1257 = vmatprep.subr.bf16.mxu0 0
  %1258 = vmatpush1.bf16.msra.mxu0 0
  %1259 = vmatprep.subr.bf16.mxu0 0
  %1260 = vmatpush1.bf16.msra.mxu0 0
  %1261 = vmatprep.mubr.bf16.mxu0 0
  %1262 = vmatmul.mubr.bf16.gmra.mrb[0].mxu0 %v218
  %v1263 = vpop.f32.mrb[0].mxu0
  %v1264 = vadd.f32 %v1223, %v1263
  %v1265 = vpop.f32.mrb[0].mxu0
  %v1266 = vadd.f32 %v1225, %v1265
  %v1267 = vpop.f32.mrb[0].mxu0
  %v1268 = vpop.f32.mrb[0].mxu0
  %1269 = vdwg.mxu0
  %v1270 = vmax.f32 %v1141, 0.0
  %v1271 = vmax.f32 %v1143, 0.0
  %v1272 = vmax.f32 %v1264, 0.0
  %v1273 = vmax.f32 %v1266, 0.0
  %v1274 = vpack.c.bf16 %v1270, %v1270
  %v1275 = vpack.c.bf16 %v1271, %v1271
  %v1276 = vpack.c.bf16 %v1272, %v1272
  %v1277 = vpack.c.bf16 %v1273, %v1273
  %v1278 = vld [vmem:[%s3] sm:$0xf]
  %v1279 = vld [vmem:[%s3 + $0x4] sm:$0xf]
  %v1280 = vld [vmem:[%s3 + $0x8] sm:$0xf]
  %v1281 = vld [vmem:[%s3 + $0xc] sm:$0xf]
  %v1282 = vld [vmem:[%s3 + $0x10] sm:$0xf]
  %v1283 = vld [vmem:[%s3 + $0x14] sm:$0xf]
  %v1284 = vld [vmem:[%s3 + $0x18] sm:$0xf]
  %v1285 = vld [vmem:[%s3 + $0x1c] sm:$0xf]
  %v1286 = vld [vmem:[%s3 + $0x20] sm:$0xf]
  %v1287 = vld [vmem:[%s3 + $0x24] sm:$0xf]
  %v1288 = vld [vmem:[%s3 + $0x28] sm:$0xf]
  %v1289 = vld [vmem:[%s3 + $0x2c] sm:$0xf]
  %v1290 = vld [vmem:[%s3 + $0x30] sm:$0xf]
  %v1291 = vld [vmem:[%s3 + $0x34] sm:$0xf]
  %v1292 = vld [vmem:[%s3 + $0x38] sm:$0xf]
  %v1293 = vld [vmem:[%s3 + $0x3c] sm:$0xf]
  %v1294 = vld [vmem:[%s3 + $0x40] sm:$0xf]
  %v1295 = vld [vmem:[%s3 + $0x44] sm:$0xf]
  %v1296 = vld [vmem:[%s3 + $0x48] sm:$0xf]
  %v1297 = vld [vmem:[%s3 + $0x4c] sm:$0xf]
  %v1298 = vld [vmem:[%s3 + $0x50] sm:$0xf]
  %v1299 = vld [vmem:[%s3 + $0x54] sm:$0xf]
  %v1300 = vld [vmem:[%s3 + $0x58] sm:$0xf]
  %v1301 = vld [vmem:[%s3 + $0x5c] sm:$0xf]
  %v1302 = vld [vmem:[%s3 + $0x60] sm:$0xf]
  %v1303 = vld [vmem:[%s3 + $0x64] sm:$0xf]
  %v1304 = vld [vmem:[%s3 + $0x68] sm:$0xf]
  %v1305 = vld [vmem:[%s3 + $0x6c] sm:$0xf]
  %v1306 = vld [vmem:[%s3 + $0x70] sm:$0xf]
  %v1307 = vld [vmem:[%s3 + $0x74] sm:$0xf]
  %v1308 = vld [vmem:[%s3 + $0x78] sm:$0xf]
  %v1309 = vld [vmem:[%s3 + $0x7c] sm:$0xf]
  %v1310 = vld [vmem:[%s3 + $0x80] sm:$0xf]
  %v1311 = vld [vmem:[%s3 + $0x84] sm:$0xf]
  %v1312 = vld [vmem:[%s3 + $0x88] sm:$0xf]
  %v1313 = vld [vmem:[%s3 + $0x8c] sm:$0xf]
  %v1314 = vld [vmem:[%s3 + $0x90] sm:$0xf]
  %v1315 = vld [vmem:[%s3 + $0x94] sm:$0xf]
  %v1316 = vld [vmem:[%s3 + $0x98] sm:$0xf]
  %v1317 = vld [vmem:[%s3 + $0x9c] sm:$0xf]
  %v1318 = vld [vmem:[%s3 + $0xa0] sm:$0xf]
  %v1319 = vld [vmem:[%s3 + $0xa4] sm:$0xf]
  %v1320 = vld [vmem:[%s3 + $0xa8] sm:$0xf]
  %v1321 = vld [vmem:[%s3 + $0xac] sm:$0xf]
  %v1322 = vld [vmem:[%s3 + $0xb0] sm:$0xf]
  %v1323 = vld [vmem:[%s3 + $0xb4] sm:$0xf]
  %v1324 = vld [vmem:[%s3 + $0xb8] sm:$0xf]
  %v1325 = vld [vmem:[%s3 + $0xbc] sm:$0xf]
  %v1326 = vld [vmem:[%s3 + $0xc0] sm:$0xf]
  %v1327 = vld [vmem:[%s3 + $0xc4] sm:$0xf]
  %v1328 = vld [vmem:[%s3 + $0xc8] sm:$0xf]
  %v1329 = vld [vmem:[%s3 + $0xcc] sm:$0xf]
  %v1330 = vld [vmem:[%s3 + $0xd0] sm:$0xf]
  %v1331 = vld [vmem:[%s3 + $0xd4] sm:$0xf]
  %v1332 = vld [vmem:[%s3 + $0xd8] sm:$0xf]
  %v1333 = vld [vmem:[%s3 + $0xdc] sm:$0xf]
  %v1334 = vld [vmem:[%s3 + $0xe0] sm:$0xf]
  %v1335 = vld [vmem:[%s3 + $0xe4] sm:$0xf]
  %v1336 = vld [vmem:[%s3 + $0xe8] sm:$0xf]
  %v1337 = vld [vmem:[%s3 + $0xec] sm:$0xf]
  %v1338 = vld [vmem:[%s3 + $0xf0] sm:$0xf]
  %v1339 = vld [vmem:[%s3 + $0xf4] sm:$0xf]
  %v1340 = vld [vmem:[%s3 + $0xf8] sm:$0xf]
  %v1341 = vld [vmem:[%s3 + $0xfc] sm:$0xf]
  %v1342 = vld [vmem:[%s4] sm:$0x1]
  %v1344 = vlaneseq
  %v1345 = vshrl.u32 %v1344, 7
  %v1346 = vsub.s32 0, %v1345
  %v1347 = vrot.slane %v1342, %v1346
  %v1413 = vunpack.c.l.b16 %v1278
  %v1414 = vunpack.c.l.b16 %v1279
  %v1415 = vunpack.c.l.b16 %v1280
  %v1416 = vunpack.c.l.b16 %v1281
  %v1417 = vunpack.c.l.b16 %v1282
  %v1418 = vunpack.c.l.b16 %v1283
  %v1419 = vunpack.c.l.b16 %v1284
  %v1420 = vunpack.c.l.b16 %v1285
  %v1421 = vunpack.c.l.b16 %v1286
  %v1422 = vunpack.c.l.b16 %v1287
  %v1423 = vunpack.c.l.b16 %v1288
  %v1424 = vunpack.c.l.b16 %v1289
  %v1425 = vunpack.c.l.b16 %v1290
  %v1426 = vunpack.c.l.b16 %v1291
  %v1427 = vunpack.c.l.b16 %v1292
  %v1428 = vunpack.c.l.b16 %v1293
  %v1429 = vunpack.c.l.b16 %v1294
  %v1430 = vunpack.c.l.b16 %v1295
  %v1431 = vunpack.c.l.b16 %v1296
  %v1432 = vunpack.c.l.b16 %v1297
  %v1433 = vunpack.c.l.b16 %v1298
  %v1434 = vunpack.c.l.b16 %v1299
  %v1435 = vunpack.c.l.b16 %v1300
  %v1436 = vunpack.c.l.b16 %v1301
  %v1437 = vunpack.c.l.b16 %v1302
  %v1438 = vunpack.c.l.b16 %v1303
  %v1439 = vunpack.c.l.b16 %v1304
  %v1440 = vunpack.c.l.b16 %v1305
  %v1441 = vunpack.c.l.b16 %v1306
  %v1442 = vunpack.c.l.b16 %v1307
  %v1443 = vunpack.c.l.b16 %v1308
  %v1444 = vunpack.c.l.b16 %v1309
  %v1445 = vunpack.c.l.b16 %v1310
  %v1446 = vunpack.c.l.b16 %v1311
  %v1447 = vunpack.c.l.b16 %v1312
  %v1448 = vunpack.c.l.b16 %v1313
  %v1449 = vunpack.c.l.b16 %v1314
  %v1450 = vunpack.c.l.b16 %v1315
  %v1451 = vunpack.c.l.b16 %v1316
  %v1452 = vunpack.c.l.b16 %v1317
  %v1453 = vunpack.c.l.b16 %v1318
  %v1454 = vunpack.c.l.b16 %v1319
  %v1455 = vunpack.c.l.b16 %v1320
  %v1456 = vunpack.c.l.b16 %v1321
  %v1457 = vunpack.c.l.b16 %v1322
  %v1458 = vunpack.c.l.b16 %v1323
  %v1459 = vunpack.c.l.b16 %v1324
  %v1460 = vunpack.c.l.b16 %v1325
  %v1461 = vunpack.c.l.b16 %v1326
  %v1462 = vunpack.c.l.b16 %v1327
  %v1463 = vunpack.c.l.b16 %v1328
  %v1464 = vunpack.c.l.b16 %v1329
  %v1465 = vunpack.c.l.b16 %v1330
  %v1466 = vunpack.c.l.b16 %v1331
  %v1467 = vunpack.c.l.b16 %v1332
  %v1468 = vunpack.c.l.b16 %v1333
  %v1469 = vunpack.c.l.b16 %v1334
  %v1470 = vunpack.c.l.b16 %v1335
  %v1471 = vunpack.c.l.b16 %v1336
  %v1472 = vunpack.c.l.b16 %v1337
  %v1473 = vunpack.c.l.b16 %v1338
  %v1474 = vunpack.c.l.b16 %v1339
  %v1475 = vunpack.c.l.b16 %v1340
  %v1476 = vunpack.c.l.b16 %v1341
  %v1477 = vpack.c.b16 %v1414, %v1413
  %v1478 = vpack.c.b16 %v1416, %v1415
  %v1479 = vpack.c.b16 %v1418, %v1417
  %v1480 = vpack.c.b16 %v1420, %v1419
  %v1481 = vpack.c.b16 %v1422, %v1421
  %v1482 = vpack.c.b16 %v1424, %v1423
  %v1483 = vpack.c.b16 %v1426, %v1425
  %v1484 = vpack.c.b16 %v1428, %v1427
  %v1485 = vpack.c.b16 %v1430, %v1429
  %v1486 = vpack.c.b16 %v1432, %v1431
  %v1487 = vpack.c.b16 %v1434, %v1433
  %v1488 = vpack.c.b16 %v1436, %v1435
  %v1489 = vpack.c.b16 %v1438, %v1437
  %v1490 = vpack.c.b16 %v1440, %v1439
  %v1491 = vpack.c.b16 %v1442, %v1441
  %v1492 = vpack.c.b16 %v1444, %v1443
  %v1493 = vpack.c.b16 %v1446, %v1445
  %v1494 = vpack.c.b16 %v1448, %v1447
  %v1495 = vpack.c.b16 %v1450, %v1449
  %v1496 = vpack.c.b16 %v1452, %v1451
  %v1497 = vpack.c.b16 %v1454, %v1453
  %v1498 = vpack.c.b16 %v1456, %v1455
  %v1499 = vpack.c.b16 %v1458, %v1457
  %v1500 = vpack.c.b16 %v1460, %v1459
  %v1501 = vpack.c.b16 %v1462, %v1461
  %v1502 = vpack.c.b16 %v1464, %v1463
  %v1503 = vpack.c.b16 %v1466, %v1465
  %v1504 = vpack.c.b16 %v1468, %v1467
  %v1505 = vpack.c.b16 %v1470, %v1469
  %v1506 = vpack.c.b16 %v1472, %v1471
  %v1507 = vpack.c.b16 %v1474, %v1473
  %v1508 = vpack.c.b16 %v1476, %v1475
  %1541 = vmatprep.subr.bf16.mxu0 0
  %1542 = vmatpush1.bf16.msra.mxu0 %v1477
  %1543 = vmatprep.subr.bf16.mxu0 0
  %1544 = vmatpush1.bf16.msra.mxu0 %v1478
  %1545 = vmatprep.subr.bf16.mxu0 0
  %1546 = vmatpush1.bf16.msra.mxu0 %v1479
  %1547 = vmatprep.subr.bf16.mxu0 0
  %1548 = vmatpush1.bf16.msra.mxu0 %v1480
  %1549 = vmatprep.subr.bf16.mxu0 0
  %1550 = vmatpush1.bf16.msra.mxu0 %v1481
  %1551 = vmatprep.subr.bf16.mxu0 0
  %1552 = vmatpush1.bf16.msra.mxu0 %v1482
  %1553 = vmatprep.subr.bf16.mxu0 0
  %1554 = vmatpush1.bf16.msra.mxu0 %v1483
  %1555 = vmatprep.subr.bf16.mxu0 0
  %1556 = vmatpush1.bf16.msra.mxu0 %v1484
  %1557 = vmatprep.subr.bf16.mxu0 0
  %1558 = vmatpush1.bf16.msra.mxu0 %v1485
  %1559 = vmatprep.subr.bf16.mxu0 0
  %1560 = vmatpush1.bf16.msra.mxu0 %v1486
  %1561 = vmatprep.subr.bf16.mxu0 0
  %1562 = vmatpush1.bf16.msra.mxu0 %v1487
  %1563 = vmatprep.subr.bf16.mxu0 0
  %1564 = vmatpush1.bf16.msra.mxu0 %v1488
  %1565 = vmatprep.subr.bf16.mxu0 0
  %1566 = vmatpush1.bf16.msra.mxu0 %v1489
  %1567 = vmatprep.subr.bf16.mxu0 0
  %1568 = vmatpush1.bf16.msra.mxu0 %v1490
  %1569 = vmatprep.subr.bf16.mxu0 0
  %1570 = vmatpush1.bf16.msra.mxu0 %v1491
  %1571 = vmatprep.subr.bf16.mxu0 0
  %1572 = vmatpush1.bf16.msra.mxu0 %v1492
  %1573 = vmatprep.mubr.bf16.mxu0 %v1275
  %1574 = vmatmul.mubr.bf16.gmra.mrb[0].mxu0 %v1274
  %v1575 = vpop.f32.mrb[0].mxu0
  %v1576 = vadd.f32 %v1347, %v1575
  %v1577 = vpop.f32.mrb[0].mxu0
  %v1578 = vpop.f32.mrb[0].mxu0
  %v1579 = vpop.f32.mrb[0].mxu0
  %1580 = vdwg.mxu0
  %1581 = vmatprep.subr.bf16.mxu0 0
  %1582 = vmatpush1.bf16.msra.mxu0 %v1493
  %1583 = vmatprep.subr.bf16.mxu0 0
  %1584 = vmatpush1.bf16.msra.mxu0 %v1494
  %1585 = vmatprep.subr.bf16.mxu0 0
  %1586 = vmatpush1.bf16.msra.mxu0 %v1495
  %1587 = vmatprep.subr.bf16.mxu0 0
  %1588 = vmatpush1.bf16.msra.mxu0 %v1496
  %1589 = vmatprep.subr.bf16.mxu0 0
  %1590 = vmatpush1.bf16.msra.mxu0 %v1497
  %1591 = vmatprep.subr.bf16.mxu0 0
  %1592 = vmatpush1.bf16.msra.mxu0 %v1498
  %1593 = vmatprep.subr.bf16.mxu0 0
  %1594 = vmatpush1.bf16.msra.mxu0 %v1499
  %1595 = vmatprep.subr.bf16.mxu0 0
  %1596 = vmatpush1.bf16.msra.mxu0 %v1500
  %1597 = vmatprep.subr.bf16.mxu0 0
  %1598 = vmatpush1.bf16.msra.mxu0 %v1501
  %1599 = vmatprep.subr.bf16.mxu0 0
  %1600 = vmatpush1.bf16.msra.mxu0 %v1502
  %1601 = vmatprep.subr.bf16.mxu0 0
  %1602 = vmatpush1.bf16.msra.mxu0 %v1503
  %1603 = vmatprep.subr.bf16.mxu0 0
  %1604 = vmatpush1.bf16.msra.mxu0 %v1504
  %1605 = vmatprep.subr.bf16.mxu0 0
  %1606 = vmatpush1.bf16.msra.mxu0 %v1505
  %1607 = vmatprep.subr.bf16.mxu0 0
  %1608 = vmatpush1.bf16.msra.mxu0 %v1506
  %1609 = vmatprep.subr.bf16.mxu0 0
  %1610 = vmatpush1.bf16.msra.mxu0 %v1507
  %1611 = vmatprep.subr.bf16.mxu0 0
  %1612 = vmatpush1.bf16.msra.mxu0 %v1508
  %1613 = vmatprep.mubr.bf16.mxu0 %v1277
  %1614 = vmatmul.mubr.bf16.gmra.mrb[0].mxu0 %v1276
  %v1615 = vpop.f32.mrb[0].mxu0
  %v1616 = vadd.f32 %v1576, %v1615
  %v1617 = vpop.f32.mrb[0].mxu0
  %v1618 = vpop.f32.mrb[0].mxu0
  %v1619 = vpop.f32.mrb[0].mxu0
  %1620 = vdwg.mxu0
  %1621 = vst [vmem:[%s5] sm:$0xff] %v1616
  // Predicated region
  $region22: #{convnet_forward.7} parent=0 // pred_check
    _
  $region23: #{convnet_forward.7} parent=0 // pred_check_branch
    %1623 = sbr.rel (0) target = $region25
  $region24: #{convnet_forward.7} parent=0 // pred_region
    _
  $region25: #{convnet_forward.7} parent=0 // pred_fallthru
    _
  // Predicated region
  $region26: #{convnet_forward.7} parent=0 // pred_check
    _
  $region27: #{convnet_forward.7} parent=0 // pred_check_branch
    %1625 = sbr.rel (0) target = $region29
  $region28: #{convnet_forward.7} parent=0 // pred_region
    _
  $region29: #{convnet_forward.7} parent=0 // pred_fallthru
    _

</llo_original>
